<compile_context>
chip_gen: v7x
topology: tpu7x:2x2x1
jax: 0.10.0
libtpu: 0.0.40
codegen_flags: <defaults>
</compile_context>

<pallas_src>
import jax
import jax.numpy as jnp
from jax.experimental import pallas as pl
from jax.experimental.pallas import tpu as pltpu


def user_encoder_kernel(news_ref, w1_ref, b1_ref, w2_ref, out_ref):
    # news_ref: [TB, S*F] bf16 (lane-dense stream)
    # w1_ref:   [F, Apad] f32, b1_ref: [1, Apad] f32, w2_ref: [1, Apad] f32 (resident)
    # out_ref:  [TB, F] f32
    TB = news_ref.shape[0]
    F, Apad = w1_ref.shape
    S = news_ref.shape[1] // F

    w1 = w1_ref[...]
    b1 = b1_ref[...]
    w2 = w2_ref[...]

    lane_s = jax.lax.broadcasted_iota(jnp.int32, (1, S), 1)   # [1, S] column ids

    # ---- pass 1: additive-attention logits, one history position at a time ------
    # Each x_s is a static lane window of the flat tile: no lane-splitting reshape,
    # and only a [TB, Apad] f32 temp is live at a time (keeps VMEM small -> big tb).
    scores = jnp.zeros((TB, S), jnp.float32)
    for s in range(S):                                        # S is small and static
        x_s = news_ref[:, s * F:(s + 1) * F].astype(jnp.float32)        # [TB, F]
        e_s = jnp.tanh(
            jnp.dot(x_s, w1, preferred_element_type=jnp.float32,
                    precision=jax.lax.Precision.HIGHEST)                # MXU is slack
            + b1
        )                                                                # [TB, Apad]
        sc_s = jnp.sum(e_s * w2, axis=-1, keepdims=True)                 # [TB, 1]
        scores = scores + jnp.where(lane_s == s, sc_s, 0.0)              # place col s
    # (b2 omitted: softmax is shift-invariant, so it cannot change alpha)

    # ---- numerically-stable softmax over S; defer 1/l to the final scale ---------
    m = jnp.max(scores, axis=-1, keepdims=True)
    p = jnp.exp(scores - m)                                              # [TB, S]
    inv_l = pl.reciprocal(jnp.sum(p, axis=-1, keepdims=True), approx=True)  # EUP

    # ---- pass 2: weighted sum over history positions (VPU broadcast-FMA path) ----
    acc = jnp.zeros((TB, F), jnp.float32)
    for s in range(S):
        x_s = news_ref[:, s * F:(s + 1) * F].astype(jnp.float32)        # [TB, F]
        p_s = jnp.sum(jnp.where(lane_s == s, p, 0.0), axis=-1, keepdims=True)  # [TB,1]
        acc = acc + x_s * p_s
    out_ref[...] = (acc * inv_l).astype(out_ref.dtype)


def _round_up(x, m):
    return (x + m - 1) // m * m


def _vmem_capacity_bytes():
    # Generation-aware: v5e/v6e have 128 MiB VMEM, v7x has 64 MiB per TensorCore.
    try:
        return int(pltpu.get_tpu_info().vmem_capacity_bytes)
    except Exception:
        return 64 << 20        # conservative fallback (v7x per-TC physical)


def _vmem_limit_bytes():
    # Raise the scoped-VMEM limit above the 16/32 MiB defaults so big tiles compile,
    # while leaving ~25% physical headroom for compiler-managed temps.
    return int(min(_vmem_capacity_bytes() * 3 // 4, 96 << 20))


def _pick_tb(B, S, F, Apad):
    """Batch-tile size: as large as a conservative VMEM budget allows (amortizes the
    ~0.35us/grid-step cost), accounting for the real per-row footprint (double-
    buffered bf16 stream, f32 temps, lane padding). Keeps >=2 tiles when B permits
    (v7x megacore + double buffering) and never collapses toward tb=1 — awkward B is
    handled by padding the batch in the wrapper instead."""
    lanes = 128
    budget = min(_vmem_capacity_bytes() // 2, 32 << 20)
    per_row = (
        2 * _round_up(S * F, lanes) * 2          # bf16 news stream, 2 buffers
        + 2 * (_round_up(F, lanes) + Apad) * 4   # live x_s / e_s f32 temps
        + 2 * _round_up(S, lanes) * 4            # scores / p
        + 3 * _round_up(F, lanes) * 4            # acc + double-buffered f32 output
        + 256                                    # slop
    )
    tb = max(8, budget // per_row // 8 * 8)
    if B >= 16:
        tb = min(tb, max(8, B // 2 // 8 * 8))    # guarantee >= 2 (even-ish) grid tiles
    if tb >= B:
        return B                                 # single full-batch tile (legal block)
    return tb


def user_encoder(news, w1, b1, w2, b2=None, *, tb=None):
    """news: [B,S,F]; w1: [F,A] (Linear(F,A).weight.T); b1: reshapable to [1,A];
    w2: Linear(A,1).weight reshapable to [A]; b2 unused (softmax shift-invariant)."""
    B, S, F = news.shape
    A = w1.shape[1]
    f32 = jnp.float32

    # Attention dim zero-padded to exactly 128 lanes (exact: tanh(0)*0 contributes 0).
    Apad = max(128, ((A + 127) // 128) * 128)
    w1p = jnp.zeros((F, Apad), f32).at[:, :A].set(w1.astype(f32))
    b1p = jnp.zeros((1, Apad), f32).at[:, :A].set(jnp.reshape(b1, (1, A)).astype(f32))
    w2p = jnp.zeros((1, Apad), f32).at[:, :A].set(jnp.reshape(w2, (1, A)).astype(f32))

    if tb is None:
        tb = _pick_tb(B, S, F, Apad)

    # Lane-dense bf16 stream: halves HBM bytes and removes the F->128 lane padding tax.
    # TODO(synk): in production store `news` in HBM as bf16 so this cast is free.
    news_flat = news.reshape(B, S * F).astype(jnp.bfloat16)

    # Pad the batch so tb divides it exactly (padded zero rows give finite garbage
    # that is sliced off below) instead of shrinking tb.
    n_tiles = pl.cdiv(B, tb)
    Bp = n_tiles * tb
    if Bp != B:
        news_flat = jnp.pad(news_flat, ((0, Bp - B), (0, 0)))

    out = pl.pallas_call(
        user_encoder_kernel,
        out_shape=jax.ShapeDtypeStruct((Bp, F), f32),
        grid=(n_tiles,),
        in_specs=[
            pl.BlockSpec((tb, S * F), lambda i: (i, 0)),   # streamed, double-buffered
            pl.BlockSpec((F, Apad), lambda i: (0, 0)),     # VMEM-resident weights
            pl.BlockSpec((1, Apad), lambda i: (0, 0)),
            pl.BlockSpec((1, Apad), lambda i: (0, 0)),
        ],
        out_specs=pl.BlockSpec((tb, F), lambda i: (i, 0)),
        compiler_params=pltpu.CompilerParams(
            dimension_semantics=("parallel",),             # megacore sharding on v7x
            vmem_limit_bytes=_vmem_limit_bytes(),
        ),
    )(news_flat, w1p, b1p, w2p)

    if Bp != B:
        out = out[:B]
    return out.astype(news.dtype)


def user_encoder_ref(news, w1, b1, w2, b2):
    """Pure-JAX reference of the PyTorch forward."""
    e = jnp.tanh(jnp.einsum("bsf,fa->bsa", news, w1) + b1)       # [B,S,A]
    scores = jnp.sum(e * w2, axis=-1, keepdims=True) + b2        # [B,S,1]
    alpha = jax.nn.softmax(scores, axis=1)                       # [B,S,1]
    return jnp.sum(alpha * news, axis=1)                         # [B,F]


if __name__ == "__main__":
    # config.num_filters = 32, config.attention_dim = 16, batch = 2, seq = 8
    B, S, F, A = 2, 8, 32, 16

    key = jax.random.PRNGKey(0)
    k_news, k_w1, k_b1, k_w2, k_b2, k_news2 = jax.random.split(key, 6)

    news = jax.random.normal(k_news, (B, S, F), dtype=jnp.float32)
    w1 = jax.random.normal(k_w1, (F, A), dtype=jnp.float32) * 0.1    # Linear(F, A).weight.T
    b1 = jax.random.normal(k_b1, (1, A), dtype=jnp.float32) * 0.1    # Linear(F, A).bias
    w2 = jax.random.normal(k_w2, (1, 1, A), dtype=jnp.float32) * 0.1 # Linear(A, 1).weight
    b2 = jax.random.normal(k_b2, (1, 1, 1), dtype=jnp.float32) * 0.1 # Linear(A, 1).bias

    user_r = jax.block_until_ready(user_encoder(news, w1, b1, w2, b2))
    # Reference on the same bf16-rounded news (the kernel streams news as bf16);
    # remaining deltas are the approx reciprocal (~2e-4 rel) and f32 rounding.
    news_bf = news.astype(jnp.bfloat16).astype(jnp.float32)
    ref = user_encoder_ref(news_bf, w1, b1, w2, b2)
    assert user_r.shape == (B, F)
    assert jnp.allclose(user_r, ref, atol=5e-3, rtol=5e-3)

    # Exercise the multi-tile + batch-padding path (tb=8, B=20 -> Bp=24, grid=(3,)).
    B2 = 20
    news2 = jax.random.normal(k_news2, (B2, S, F), dtype=jnp.float32)
    out2 = jax.block_until_ready(user_encoder(news2, w1, b1, w2, b2, tb=8))
    ref2 = user_encoder_ref(news2.astype(jnp.bfloat16).astype(jnp.float32), w1, b1, w2, b2)
    assert out2.shape == (B2, F)
    assert jnp.allclose(out2, ref2, atol=5e-3, rtol=5e-3)

    print("KERNEL_OK")
</pallas_src>

<mosaic_0001>
module attributes {stable_mosaic.version = 11 : i64} {
  func.func @user_encoder_kernel(%arg0: i32, %arg1: memref<2x256xbf16, #tpu.memory_space<vmem>>, %arg2: memref<32x128xf32, #tpu.memory_space<vmem>>, %arg3: memref<1x128xf32, #tpu.memory_space<vmem>>, %arg4: memref<1x128xf32, #tpu.memory_space<vmem>>, %arg5: memref<2x32xf32, #tpu.memory_space<vmem>>) attributes {dimension_semantics = [#tpu.dimension_semantics<parallel>], iteration_bounds = array<i64: 1>, scalar_prefetch = 0 : i64, scratch_operands = 0 : i64, tpu.core_type = #tpu.core_type<tc>, window_params = [{transform_indices = @transform_0, window_bounds = array<i64: 2, 256>}, {pipeline_mode = #tpu.pipeline_mode<synchronous>, transform_indices = @transform_1, window_bounds = array<i64: 32, 128>}, {pipeline_mode = #tpu.pipeline_mode<synchronous>, transform_indices = @transform_2, window_bounds = array<i64: 1, 128>}, {pipeline_mode = #tpu.pipeline_mode<synchronous>, transform_indices = @transform_3, window_bounds = array<i64: 1, 128>}, {transform_indices = @transform_4, window_bounds = array<i64: 2, 32>}]} {
    %c0 = arith.constant 0 : index
    %c0_0 = arith.constant 0 : index
    %0 = vector.load %arg2[%c0, %c0_0] : memref<32x128xf32, #tpu.memory_space<vmem>>, vector<32x128xf32>
    %c0_1 = arith.constant 0 : index
    %c0_2 = arith.constant 0 : index
    %1 = vector.load %arg3[%c0_1, %c0_2] : memref<1x128xf32, #tpu.memory_space<vmem>>, vector<1x128xf32>
    %c0_3 = arith.constant 0 : index
    %c0_4 = arith.constant 0 : index
    %2 = vector.load %arg4[%c0_3, %c0_4] : memref<1x128xf32, #tpu.memory_space<vmem>>, vector<1x128xf32>
    %3 = tpu.iota {dimensions = array<i32: 1>} : vector<1x8xi32>
    %cst = arith.constant 0.000000e+00 : f32
    %4 = vector.broadcast %cst : f32 to vector<2x8xf32>
    %c0_5 = arith.constant 0 : index
    %c0_6 = arith.constant 0 : index
    %5 = vector.load %arg1[%c0_5, %c0_6] : memref<2x256xbf16, #tpu.memory_space<vmem>>, vector<2x32xbf16>
    %6 = arith.extf %5 : vector<2x32xbf16> to vector<2x32xf32>
    %cst_7 = arith.constant dense<0.000000e+00> : vector<2x128xf32>
    %7 = tpu.matmul %6, %0, %cst_7 {dimension_numbers = #tpu.dot_dimension_numbers<[1], [0], [0], [1], [0, 0, 1, 1], [], []>, precision = #tpu.contract_precision<fp32>} : vector<2x32xf32>, vector<32x128xf32>, vector<2x128xf32> -> vector<2x128xf32>
    %8 = vector.broadcast %1 : vector<1x128xf32> to vector<2x128xf32>
    %9 = arith.addf %7, %8 : vector<2x128xf32>
    %10 = math.tanh %9 : vector<2x128xf32>
    %11 = vector.broadcast %2 : vector<1x128xf32> to vector<2x128xf32>
    %12 = arith.mulf %10, %11 : vector<2x128xf32>
    %cst_8 = arith.constant dense<0.000000e+00> : vector<2xf32>
    %13 = vector.multi_reduction <add>, %12, %cst_8 [1] : vector<2x128xf32> to vector<2xf32>
    %14 = vector.shape_cast %13 : vector<2xf32> to vector<2x1xf32>
    %c0_i32 = arith.constant 0 : i32
    %15 = vector.broadcast %c0_i32 : i32 to vector<1x8xi32>
    %16 = arith.cmpi eq, %3, %15 : vector<1x8xi32>
    %cst_9 = arith.constant 0.000000e+00 : f32
    %17 = vector.shape_cast %16 : vector<1x8xi1> to vector<1x8xi1>
    %18 = vector.broadcast %17 : vector<1x8xi1> to vector<2x8xi1>
    %19 = vector.shape_cast %14 : vector<2x1xf32> to vector<2x1xf32>
    %20 = vector.broadcast %19 : vector<2x1xf32> to vector<2x8xf32>
    %21 = vector.broadcast %cst_9 : f32 to vector<2x8xf32>
    %22 = arith.select %18, %20, %21 : vector<2x8xi1>, vector<2x8xf32>
    %23 = arith.addf %4, %22 : vector<2x8xf32>
    %c0_10 = arith.constant 0 : index
    %c32 = arith.constant 32 : index
    %24 = vector.load %arg1[%c0_10, %c32] : memref<2x256xbf16, #tpu.memory_space<vmem>>, vector<2x32xbf16>
    %25 = arith.extf %24 : vector<2x32xbf16> to vector<2x32xf32>
    %cst_11 = arith.constant dense<0.000000e+00> : vector<2x128xf32>
    %26 = tpu.matmul %25, %0, %cst_11 {dimension_numbers = #tpu.dot_dimension_numbers<[1], [0], [0], [1], [0, 0, 1, 1], [], []>, precision = #tpu.contract_precision<fp32>} : vector<2x32xf32>, vector<32x128xf32>, vector<2x128xf32> -> vector<2x128xf32>
    %27 = vector.broadcast %1 : vector<1x128xf32> to vector<2x128xf32>
    %28 = arith.addf %26, %27 : vector<2x128xf32>
    %29 = math.tanh %28 : vector<2x128xf32>
    %30 = vector.broadcast %2 : vector<1x128xf32> to vector<2x128xf32>
    %31 = arith.mulf %29, %30 : vector<2x128xf32>
    %cst_12 = arith.constant dense<0.000000e+00> : vector<2xf32>
    %32 = vector.multi_reduction <add>, %31, %cst_12 [1] : vector<2x128xf32> to vector<2xf32>
    %33 = vector.shape_cast %32 : vector<2xf32> to vector<2x1xf32>
    %c1_i32 = arith.constant 1 : i32
    %34 = vector.broadcast %c1_i32 : i32 to vector<1x8xi32>
    %35 = arith.cmpi eq, %3, %34 : vector<1x8xi32>
    %cst_13 = arith.constant 0.000000e+00 : f32
    %36 = vector.shape_cast %35 : vector<1x8xi1> to vector<1x8xi1>
    %37 = vector.broadcast %36 : vector<1x8xi1> to vector<2x8xi1>
    %38 = vector.shape_cast %33 : vector<2x1xf32> to vector<2x1xf32>
    %39 = vector.broadcast %38 : vector<2x1xf32> to vector<2x8xf32>
    %40 = vector.broadcast %cst_13 : f32 to vector<2x8xf32>
    %41 = arith.select %37, %39, %40 : vector<2x8xi1>, vector<2x8xf32>
    %42 = arith.addf %23, %41 : vector<2x8xf32>
    %c0_14 = arith.constant 0 : index
    %c64 = arith.constant 64 : index
    %43 = vector.load %arg1[%c0_14, %c64] : memref<2x256xbf16, #tpu.memory_space<vmem>>, vector<2x32xbf16>
    %44 = arith.extf %43 : vector<2x32xbf16> to vector<2x32xf32>
    %cst_15 = arith.constant dense<0.000000e+00> : vector<2x128xf32>
    %45 = tpu.matmul %44, %0, %cst_15 {dimension_numbers = #tpu.dot_dimension_numbers<[1], [0], [0], [1], [0, 0, 1, 1], [], []>, precision = #tpu.contract_precision<fp32>} : vector<2x32xf32>, vector<32x128xf32>, vector<2x128xf32> -> vector<2x128xf32>
    %46 = vector.broadcast %1 : vector<1x128xf32> to vector<2x128xf32>
    %47 = arith.addf %45, %46 : vector<2x128xf32>
    %48 = math.tanh %47 : vector<2x128xf32>
    %49 = vector.broadcast %2 : vector<1x128xf32> to vector<2x128xf32>
    %50 = arith.mulf %48, %49 : vector<2x128xf32>
    %cst_16 = arith.constant dense<0.000000e+00> : vector<2xf32>
    %51 = vector.multi_reduction <add>, %50, %cst_16 [1] : vector<2x128xf32> to vector<2xf32>
    %52 = vector.shape_cast %51 : vector<2xf32> to vector<2x1xf32>
    %c2_i32 = arith.constant 2 : i32
    %53 = vector.broadcast %c2_i32 : i32 to vector<1x8xi32>
    %54 = arith.cmpi eq, %3, %53 : vector<1x8xi32>
    %cst_17 = arith.constant 0.000000e+00 : f32
    %55 = vector.shape_cast %54 : vector<1x8xi1> to vector<1x8xi1>
    %56 = vector.broadcast %55 : vector<1x8xi1> to vector<2x8xi1>
    %57 = vector.shape_cast %52 : vector<2x1xf32> to vector<2x1xf32>
    %58 = vector.broadcast %57 : vector<2x1xf32> to vector<2x8xf32>
    %59 = vector.broadcast %cst_17 : f32 to vector<2x8xf32>
    %60 = arith.select %56, %58, %59 : vector<2x8xi1>, vector<2x8xf32>
    %61 = arith.addf %42, %60 : vector<2x8xf32>
    %c0_18 = arith.constant 0 : index
    %c96 = arith.constant 96 : index
    %62 = vector.load %arg1[%c0_18, %c96] : memref<2x256xbf16, #tpu.memory_space<vmem>>, vector<2x32xbf16>
    %63 = arith.extf %62 : vector<2x32xbf16> to vector<2x32xf32>
    %cst_19 = arith.constant dense<0.000000e+00> : vector<2x128xf32>
    %64 = tpu.matmul %63, %0, %cst_19 {dimension_numbers = #tpu.dot_dimension_numbers<[1], [0], [0], [1], [0, 0, 1, 1], [], []>, precision = #tpu.contract_precision<fp32>} : vector<2x32xf32>, vector<32x128xf32>, vector<2x128xf32> -> vector<2x128xf32>
    %65 = vector.broadcast %1 : vector<1x128xf32> to vector<2x128xf32>
    %66 = arith.addf %64, %65 : vector<2x128xf32>
    %67 = math.tanh %66 : vector<2x128xf32>
    %68 = vector.broadcast %2 : vector<1x128xf32> to vector<2x128xf32>
    %69 = arith.mulf %67, %68 : vector<2x128xf32>
    %cst_20 = arith.constant dense<0.000000e+00> : vector<2xf32>
    %70 = vector.multi_reduction <add>, %69, %cst_20 [1] : vector<2x128xf32> to vector<2xf32>
    %71 = vector.shape_cast %70 : vector<2xf32> to vector<2x1xf32>
    %c3_i32 = arith.constant 3 : i32
    %72 = vector.broadcast %c3_i32 : i32 to vector<1x8xi32>
    %73 = arith.cmpi eq, %3, %72 : vector<1x8xi32>
    %cst_21 = arith.constant 0.000000e+00 : f32
    %74 = vector.shape_cast %73 : vector<1x8xi1> to vector<1x8xi1>
    %75 = vector.broadcast %74 : vector<1x8xi1> to vector<2x8xi1>
    %76 = vector.shape_cast %71 : vector<2x1xf32> to vector<2x1xf32>
    %77 = vector.broadcast %76 : vector<2x1xf32> to vector<2x8xf32>
    %78 = vector.broadcast %cst_21 : f32 to vector<2x8xf32>
    %79 = arith.select %75, %77, %78 : vector<2x8xi1>, vector<2x8xf32>
    %80 = arith.addf %61, %79 : vector<2x8xf32>
    %c0_22 = arith.constant 0 : index
    %c128 = arith.constant 128 : index
    %81 = vector.load %arg1[%c0_22, %c128] : memref<2x256xbf16, #tpu.memory_space<vmem>>, vector<2x32xbf16>
    %82 = arith.extf %81 : vector<2x32xbf16> to vector<2x32xf32>
    %cst_23 = arith.constant dense<0.000000e+00> : vector<2x128xf32>
    %83 = tpu.matmul %82, %0, %cst_23 {dimension_numbers = #tpu.dot_dimension_numbers<[1], [0], [0], [1], [0, 0, 1, 1], [], []>, precision = #tpu.contract_precision<fp32>} : vector<2x32xf32>, vector<32x128xf32>, vector<2x128xf32> -> vector<2x128xf32>
    %84 = vector.broadcast %1 : vector<1x128xf32> to vector<2x128xf32>
    %85 = arith.addf %83, %84 : vector<2x128xf32>
    %86 = math.tanh %85 : vector<2x128xf32>
    %87 = vector.broadcast %2 : vector<1x128xf32> to vector<2x128xf32>
    %88 = arith.mulf %86, %87 : vector<2x128xf32>
    %cst_24 = arith.constant dense<0.000000e+00> : vector<2xf32>
    %89 = vector.multi_reduction <add>, %88, %cst_24 [1] : vector<2x128xf32> to vector<2xf32>
    %90 = vector.shape_cast %89 : vector<2xf32> to vector<2x1xf32>
    %c4_i32 = arith.constant 4 : i32
    %91 = vector.broadcast %c4_i32 : i32 to vector<1x8xi32>
    %92 = arith.cmpi eq, %3, %91 : vector<1x8xi32>
    %cst_25 = arith.constant 0.000000e+00 : f32
    %93 = vector.shape_cast %92 : vector<1x8xi1> to vector<1x8xi1>
    %94 = vector.broadcast %93 : vector<1x8xi1> to vector<2x8xi1>
    %95 = vector.shape_cast %90 : vector<2x1xf32> to vector<2x1xf32>
    %96 = vector.broadcast %95 : vector<2x1xf32> to vector<2x8xf32>
    %97 = vector.broadcast %cst_25 : f32 to vector<2x8xf32>
    %98 = arith.select %94, %96, %97 : vector<2x8xi1>, vector<2x8xf32>
    %99 = arith.addf %80, %98 : vector<2x8xf32>
    %c0_26 = arith.constant 0 : index
    %c160 = arith.constant 160 : index
    %100 = vector.load %arg1[%c0_26, %c160] : memref<2x256xbf16, #tpu.memory_space<vmem>>, vector<2x32xbf16>
    %101 = arith.extf %100 : vector<2x32xbf16> to vector<2x32xf32>
    %cst_27 = arith.constant dense<0.000000e+00> : vector<2x128xf32>
    %102 = tpu.matmul %101, %0, %cst_27 {dimension_numbers = #tpu.dot_dimension_numbers<[1], [0], [0], [1], [0, 0, 1, 1], [], []>, precision = #tpu.contract_precision<fp32>} : vector<2x32xf32>, vector<32x128xf32>, vector<2x128xf32> -> vector<2x128xf32>
    %103 = vector.broadcast %1 : vector<1x128xf32> to vector<2x128xf32>
    %104 = arith.addf %102, %103 : vector<2x128xf32>
    %105 = math.tanh %104 : vector<2x128xf32>
    %106 = vector.broadcast %2 : vector<1x128xf32> to vector<2x128xf32>
    %107 = arith.mulf %105, %106 : vector<2x128xf32>
    %cst_28 = arith.constant dense<0.000000e+00> : vector<2xf32>
    %108 = vector.multi_reduction <add>, %107, %cst_28 [1] : vector<2x128xf32> to vector<2xf32>
    %109 = vector.shape_cast %108 : vector<2xf32> to vector<2x1xf32>
    %c5_i32 = arith.constant 5 : i32
    %110 = vector.broadcast %c5_i32 : i32 to vector<1x8xi32>
    %111 = arith.cmpi eq, %3, %110 : vector<1x8xi32>
    %cst_29 = arith.constant 0.000000e+00 : f32
    %112 = vector.shape_cast %111 : vector<1x8xi1> to vector<1x8xi1>
    %113 = vector.broadcast %112 : vector<1x8xi1> to vector<2x8xi1>
    %114 = vector.shape_cast %109 : vector<2x1xf32> to vector<2x1xf32>
    %115 = vector.broadcast %114 : vector<2x1xf32> to vector<2x8xf32>
    %116 = vector.broadcast %cst_29 : f32 to vector<2x8xf32>
    %117 = arith.select %113, %115, %116 : vector<2x8xi1>, vector<2x8xf32>
    %118 = arith.addf %99, %117 : vector<2x8xf32>
    %c0_30 = arith.constant 0 : index
    %c192 = arith.constant 192 : index
    %119 = vector.load %arg1[%c0_30, %c192] : memref<2x256xbf16, #tpu.memory_space<vmem>>, vector<2x32xbf16>
    %120 = arith.extf %119 : vector<2x32xbf16> to vector<2x32xf32>
    %cst_31 = arith.constant dense<0.000000e+00> : vector<2x128xf32>
    %121 = tpu.matmul %120, %0, %cst_31 {dimension_numbers = #tpu.dot_dimension_numbers<[1], [0], [0], [1], [0, 0, 1, 1], [], []>, precision = #tpu.contract_precision<fp32>} : vector<2x32xf32>, vector<32x128xf32>, vector<2x128xf32> -> vector<2x128xf32>
    %122 = vector.broadcast %1 : vector<1x128xf32> to vector<2x128xf32>
    %123 = arith.addf %121, %122 : vector<2x128xf32>
    %124 = math.tanh %123 : vector<2x128xf32>
    %125 = vector.broadcast %2 : vector<1x128xf32> to vector<2x128xf32>
    %126 = arith.mulf %124, %125 : vector<2x128xf32>
    %cst_32 = arith.constant dense<0.000000e+00> : vector<2xf32>
    %127 = vector.multi_reduction <add>, %126, %cst_32 [1] : vector<2x128xf32> to vector<2xf32>
    %128 = vector.shape_cast %127 : vector<2xf32> to vector<2x1xf32>
    %c6_i32 = arith.constant 6 : i32
    %129 = vector.broadcast %c6_i32 : i32 to vector<1x8xi32>
    %130 = arith.cmpi eq, %3, %129 : vector<1x8xi32>
    %cst_33 = arith.constant 0.000000e+00 : f32
    %131 = vector.shape_cast %130 : vector<1x8xi1> to vector<1x8xi1>
    %132 = vector.broadcast %131 : vector<1x8xi1> to vector<2x8xi1>
    %133 = vector.shape_cast %128 : vector<2x1xf32> to vector<2x1xf32>
    %134 = vector.broadcast %133 : vector<2x1xf32> to vector<2x8xf32>
    %135 = vector.broadcast %cst_33 : f32 to vector<2x8xf32>
    %136 = arith.select %132, %134, %135 : vector<2x8xi1>, vector<2x8xf32>
    %137 = arith.addf %118, %136 : vector<2x8xf32>
    %c0_34 = arith.constant 0 : index
    %c224 = arith.constant 224 : index
    %138 = vector.load %arg1[%c0_34, %c224] : memref<2x256xbf16, #tpu.memory_space<vmem>>, vector<2x32xbf16>
    %139 = arith.extf %138 : vector<2x32xbf16> to vector<2x32xf32>
    %cst_35 = arith.constant dense<0.000000e+00> : vector<2x128xf32>
    %140 = tpu.matmul %139, %0, %cst_35 {dimension_numbers = #tpu.dot_dimension_numbers<[1], [0], [0], [1], [0, 0, 1, 1], [], []>, precision = #tpu.contract_precision<fp32>} : vector<2x32xf32>, vector<32x128xf32>, vector<2x128xf32> -> vector<2x128xf32>
    %141 = vector.broadcast %1 : vector<1x128xf32> to vector<2x128xf32>
    %142 = arith.addf %140, %141 : vector<2x128xf32>
    %143 = math.tanh %142 : vector<2x128xf32>
    %144 = vector.broadcast %2 : vector<1x128xf32> to vector<2x128xf32>
    %145 = arith.mulf %143, %144 : vector<2x128xf32>
    %cst_36 = arith.constant dense<0.000000e+00> : vector<2xf32>
    %146 = vector.multi_reduction <add>, %145, %cst_36 [1] : vector<2x128xf32> to vector<2xf32>
    %147 = vector.shape_cast %146 : vector<2xf32> to vector<2x1xf32>
    %c7_i32 = arith.constant 7 : i32
    %148 = vector.broadcast %c7_i32 : i32 to vector<1x8xi32>
    %149 = arith.cmpi eq, %3, %148 : vector<1x8xi32>
    %cst_37 = arith.constant 0.000000e+00 : f32
    %150 = vector.shape_cast %149 : vector<1x8xi1> to vector<1x8xi1>
    %151 = vector.broadcast %150 : vector<1x8xi1> to vector<2x8xi1>
    %152 = vector.shape_cast %147 : vector<2x1xf32> to vector<2x1xf32>
    %153 = vector.broadcast %152 : vector<2x1xf32> to vector<2x8xf32>
    %154 = vector.broadcast %cst_37 : f32 to vector<2x8xf32>
    %155 = arith.select %151, %153, %154 : vector<2x8xi1>, vector<2x8xf32>
    %156 = arith.addf %137, %155 : vector<2x8xf32>
    %cst_38 = arith.constant dense<0xFF800000> : vector<2xf32>
    %157 = vector.multi_reduction <maximumf>, %156, %cst_38 [1] : vector<2x8xf32> to vector<2xf32>
    %158 = vector.shape_cast %157 : vector<2xf32> to vector<2x1xf32>
    %159 = vector.broadcast %158 : vector<2x1xf32> to vector<2x8xf32>
    %160 = arith.subf %156, %159 : vector<2x8xf32>
    %161 = math.exp %160 : vector<2x8xf32>
    %cst_39 = arith.constant dense<0.000000e+00> : vector<2xf32>
    %162 = vector.multi_reduction <add>, %161, %cst_39 [1] : vector<2x8xf32> to vector<2xf32>
    %163 = vector.shape_cast %162 : vector<2xf32> to vector<2x1xf32>
    %164 = tpu.reciprocal %163 {approx = true} : vector<2x1xf32> -> vector<2x1xf32>
    %cst_40 = arith.constant 0.000000e+00 : f32
    %165 = vector.broadcast %cst_40 : f32 to vector<2x32xf32>
    %c0_41 = arith.constant 0 : index
    %c0_42 = arith.constant 0 : index
    %166 = vector.load %arg1[%c0_41, %c0_42] : memref<2x256xbf16, #tpu.memory_space<vmem>>, vector<2x32xbf16>
    %167 = arith.extf %166 : vector<2x32xbf16> to vector<2x32xf32>
    %c0_i32_43 = arith.constant 0 : i32
    %168 = vector.broadcast %c0_i32_43 : i32 to vector<1x8xi32>
    %169 = arith.cmpi eq, %3, %168 : vector<1x8xi32>
    %cst_44 = arith.constant 0.000000e+00 : f32
    %170 = vector.shape_cast %169 : vector<1x8xi1> to vector<1x8xi1>
    %171 = vector.broadcast %170 : vector<1x8xi1> to vector<2x8xi1>
    %172 = vector.broadcast %cst_44 : f32 to vector<2x8xf32>
    %173 = arith.select %171, %161, %172 : vector<2x8xi1>, vector<2x8xf32>
    %cst_45 = arith.constant dense<0.000000e+00> : vector<2xf32>
    %174 = vector.multi_reduction <add>, %173, %cst_45 [1] : vector<2x8xf32> to vector<2xf32>
    %175 = vector.shape_cast %174 : vector<2xf32> to vector<2x1xf32>
    %176 = vector.broadcast %175 : vector<2x1xf32> to vector<2x32xf32>
    %177 = arith.mulf %167, %176 : vector<2x32xf32>
    %178 = arith.addf %165, %177 : vector<2x32xf32>
    %c0_46 = arith.constant 0 : index
    %c32_47 = arith.constant 32 : index
    %179 = vector.load %arg1[%c0_46, %c32_47] : memref<2x256xbf16, #tpu.memory_space<vmem>>, vector<2x32xbf16>
    %180 = arith.extf %179 : vector<2x32xbf16> to vector<2x32xf32>
    %c1_i32_48 = arith.constant 1 : i32
    %181 = vector.broadcast %c1_i32_48 : i32 to vector<1x8xi32>
    %182 = arith.cmpi eq, %3, %181 : vector<1x8xi32>
    %cst_49 = arith.constant 0.000000e+00 : f32
    %183 = vector.shape_cast %182 : vector<1x8xi1> to vector<1x8xi1>
    %184 = vector.broadcast %183 : vector<1x8xi1> to vector<2x8xi1>
    %185 = vector.broadcast %cst_49 : f32 to vector<2x8xf32>
    %186 = arith.select %184, %161, %185 : vector<2x8xi1>, vector<2x8xf32>
    %cst_50 = arith.constant dense<0.000000e+00> : vector<2xf32>
    %187 = vector.multi_reduction <add>, %186, %cst_50 [1] : vector<2x8xf32> to vector<2xf32>
    %188 = vector.shape_cast %187 : vector<2xf32> to vector<2x1xf32>
    %189 = vector.broadcast %188 : vector<2x1xf32> to vector<2x32xf32>
    %190 = arith.mulf %180, %189 : vector<2x32xf32>
    %191 = arith.addf %178, %190 : vector<2x32xf32>
    %c0_51 = arith.constant 0 : index
    %c64_52 = arith.constant 64 : index
    %192 = vector.load %arg1[%c0_51, %c64_52] : memref<2x256xbf16, #tpu.memory_space<vmem>>, vector<2x32xbf16>
    %193 = arith.extf %192 : vector<2x32xbf16> to vector<2x32xf32>
    %c2_i32_53 = arith.constant 2 : i32
    %194 = vector.broadcast %c2_i32_53 : i32 to vector<1x8xi32>
    %195 = arith.cmpi eq, %3, %194 : vector<1x8xi32>
    %cst_54 = arith.constant 0.000000e+00 : f32
    %196 = vector.shape_cast %195 : vector<1x8xi1> to vector<1x8xi1>
    %197 = vector.broadcast %196 : vector<1x8xi1> to vector<2x8xi1>
    %198 = vector.broadcast %cst_54 : f32 to vector<2x8xf32>
    %199 = arith.select %197, %161, %198 : vector<2x8xi1>, vector<2x8xf32>
    %cst_55 = arith.constant dense<0.000000e+00> : vector<2xf32>
    %200 = vector.multi_reduction <add>, %199, %cst_55 [1] : vector<2x8xf32> to vector<2xf32>
    %201 = vector.shape_cast %200 : vector<2xf32> to vector<2x1xf32>
    %202 = vector.broadcast %201 : vector<2x1xf32> to vector<2x32xf32>
    %203 = arith.mulf %193, %202 : vector<2x32xf32>
    %204 = arith.addf %191, %203 : vector<2x32xf32>
    %c0_56 = arith.constant 0 : index
    %c96_57 = arith.constant 96 : index
    %205 = vector.load %arg1[%c0_56, %c96_57] : memref<2x256xbf16, #tpu.memory_space<vmem>>, vector<2x32xbf16>
    %206 = arith.extf %205 : vector<2x32xbf16> to vector<2x32xf32>
    %c3_i32_58 = arith.constant 3 : i32
    %207 = vector.broadcast %c3_i32_58 : i32 to vector<1x8xi32>
    %208 = arith.cmpi eq, %3, %207 : vector<1x8xi32>
    %cst_59 = arith.constant 0.000000e+00 : f32
    %209 = vector.shape_cast %208 : vector<1x8xi1> to vector<1x8xi1>
    %210 = vector.broadcast %209 : vector<1x8xi1> to vector<2x8xi1>
    %211 = vector.broadcast %cst_59 : f32 to vector<2x8xf32>
    %212 = arith.select %210, %161, %211 : vector<2x8xi1>, vector<2x8xf32>
    %cst_60 = arith.constant dense<0.000000e+00> : vector<2xf32>
    %213 = vector.multi_reduction <add>, %212, %cst_60 [1] : vector<2x8xf32> to vector<2xf32>
    %214 = vector.shape_cast %213 : vector<2xf32> to vector<2x1xf32>
    %215 = vector.broadcast %214 : vector<2x1xf32> to vector<2x32xf32>
    %216 = arith.mulf %206, %215 : vector<2x32xf32>
    %217 = arith.addf %204, %216 : vector<2x32xf32>
    %c0_61 = arith.constant 0 : index
    %c128_62 = arith.constant 128 : index
    %218 = vector.load %arg1[%c0_61, %c128_62] : memref<2x256xbf16, #tpu.memory_space<vmem>>, vector<2x32xbf16>
    %219 = arith.extf %218 : vector<2x32xbf16> to vector<2x32xf32>
    %c4_i32_63 = arith.constant 4 : i32
    %220 = vector.broadcast %c4_i32_63 : i32 to vector<1x8xi32>
    %221 = arith.cmpi eq, %3, %220 : vector<1x8xi32>
    %cst_64 = arith.constant 0.000000e+00 : f32
    %222 = vector.shape_cast %221 : vector<1x8xi1> to vector<1x8xi1>
    %223 = vector.broadcast %222 : vector<1x8xi1> to vector<2x8xi1>
    %224 = vector.broadcast %cst_64 : f32 to vector<2x8xf32>
    %225 = arith.select %223, %161, %224 : vector<2x8xi1>, vector<2x8xf32>
    %cst_65 = arith.constant dense<0.000000e+00> : vector<2xf32>
    %226 = vector.multi_reduction <add>, %225, %cst_65 [1] : vector<2x8xf32> to vector<2xf32>
    %227 = vector.shape_cast %226 : vector<2xf32> to vector<2x1xf32>
    %228 = vector.broadcast %227 : vector<2x1xf32> to vector<2x32xf32>
    %229 = arith.mulf %219, %228 : vector<2x32xf32>
    %230 = arith.addf %217, %229 : vector<2x32xf32>
    %c0_66 = arith.constant 0 : index
    %c160_67 = arith.constant 160 : index
    %231 = vector.load %arg1[%c0_66, %c160_67] : memref<2x256xbf16, #tpu.memory_space<vmem>>, vector<2x32xbf16>
    %232 = arith.extf %231 : vector<2x32xbf16> to vector<2x32xf32>
    %c5_i32_68 = arith.constant 5 : i32
    %233 = vector.broadcast %c5_i32_68 : i32 to vector<1x8xi32>
    %234 = arith.cmpi eq, %3, %233 : vector<1x8xi32>
    %cst_69 = arith.constant 0.000000e+00 : f32
    %235 = vector.shape_cast %234 : vector<1x8xi1> to vector<1x8xi1>
    %236 = vector.broadcast %235 : vector<1x8xi1> to vector<2x8xi1>
    %237 = vector.broadcast %cst_69 : f32 to vector<2x8xf32>
    %238 = arith.select %236, %161, %237 : vector<2x8xi1>, vector<2x8xf32>
    %cst_70 = arith.constant dense<0.000000e+00> : vector<2xf32>
    %239 = vector.multi_reduction <add>, %238, %cst_70 [1] : vector<2x8xf32> to vector<2xf32>
    %240 = vector.shape_cast %239 : vector<2xf32> to vector<2x1xf32>
    %241 = vector.broadcast %240 : vector<2x1xf32> to vector<2x32xf32>
    %242 = arith.mulf %232, %241 : vector<2x32xf32>
    %243 = arith.addf %230, %242 : vector<2x32xf32>
    %c0_71 = arith.constant 0 : index
    %c192_72 = arith.constant 192 : index
    %244 = vector.load %arg1[%c0_71, %c192_72] : memref<2x256xbf16, #tpu.memory_space<vmem>>, vector<2x32xbf16>
    %245 = arith.extf %244 : vector<2x32xbf16> to vector<2x32xf32>
    %c6_i32_73 = arith.constant 6 : i32
    %246 = vector.broadcast %c6_i32_73 : i32 to vector<1x8xi32>
    %247 = arith.cmpi eq, %3, %246 : vector<1x8xi32>
    %cst_74 = arith.constant 0.000000e+00 : f32
    %248 = vector.shape_cast %247 : vector<1x8xi1> to vector<1x8xi1>
    %249 = vector.broadcast %248 : vector<1x8xi1> to vector<2x8xi1>
    %250 = vector.broadcast %cst_74 : f32 to vector<2x8xf32>
    %251 = arith.select %249, %161, %250 : vector<2x8xi1>, vector<2x8xf32>
    %cst_75 = arith.constant dense<0.000000e+00> : vector<2xf32>
    %252 = vector.multi_reduction <add>, %251, %cst_75 [1] : vector<2x8xf32> to vector<2xf32>
    %253 = vector.shape_cast %252 : vector<2xf32> to vector<2x1xf32>
    %254 = vector.broadcast %253 : vector<2x1xf32> to vector<2x32xf32>
    %255 = arith.mulf %245, %254 : vector<2x32xf32>
    %256 = arith.addf %243, %255 : vector<2x32xf32>
    %c0_76 = arith.constant 0 : index
    %c224_77 = arith.constant 224 : index
    %257 = vector.load %arg1[%c0_76, %c224_77] : memref<2x256xbf16, #tpu.memory_space<vmem>>, vector<2x32xbf16>
    %258 = arith.extf %257 : vector<2x32xbf16> to vector<2x32xf32>
    %c7_i32_78 = arith.constant 7 : i32
    %259 = vector.broadcast %c7_i32_78 : i32 to vector<1x8xi32>
    %260 = arith.cmpi eq, %3, %259 : vector<1x8xi32>
    %cst_79 = arith.constant 0.000000e+00 : f32
    %261 = vector.shape_cast %260 : vector<1x8xi1> to vector<1x8xi1>
    %262 = vector.broadcast %261 : vector<1x8xi1> to vector<2x8xi1>
    %263 = vector.broadcast %cst_79 : f32 to vector<2x8xf32>
    %264 = arith.select %262, %161, %263 : vector<2x8xi1>, vector<2x8xf32>
    %cst_80 = arith.constant dense<0.000000e+00> : vector<2xf32>
    %265 = vector.multi_reduction <add>, %264, %cst_80 [1] : vector<2x8xf32> to vector<2xf32>
    %266 = vector.shape_cast %265 : vector<2xf32> to vector<2x1xf32>
    %267 = vector.broadcast %266 : vector<2x1xf32> to vector<2x32xf32>
    %268 = arith.mulf %258, %267 : vector<2x32xf32>
    %269 = arith.addf %256, %268 : vector<2x32xf32>
    %270 = vector.broadcast %164 : vector<2x1xf32> to vector<2x32xf32>
    %271 = arith.mulf %269, %270 : vector<2x32xf32>
    %c0_81 = arith.constant 0 : index
    %c0_82 = arith.constant 0 : index
    %272 = vector.load %arg5[%c0_81, %c0_82] : memref<2x32xf32, #tpu.memory_space<vmem>>, vector<2x32xf32>
    tpu.vector_store %arg5[%c0_81, %c0_82], %271 {strides = array<i32>} : memref<2x32xf32, #tpu.memory_space<vmem>>, vector<2x32xf32>,
    return
  }
  func.func @transform_0(%arg0: i32) -> (i32, i32) {
    %c0_i32 = arith.constant 0 : i32
    %c0_i32_0 = arith.constant 0 : i32
    return %arg0, %c0_i32 : i32, i32
  }
  func.func @transform_1(%arg0: i32) -> (i32, i32) {
    %c0_i32 = arith.constant 0 : i32
    %c0_i32_0 = arith.constant 0 : i32
    %c0_i32_1 = arith.constant 0 : i32
    return %c0_i32, %c0_i32_0 : i32, i32
  }
  func.func @transform_2(%arg0: i32) -> (i32, i32) {
    %c0_i32 = arith.constant 0 : i32
    %c0_i32_0 = arith.constant 0 : i32
    %c0_i32_1 = arith.constant 0 : i32
    return %c0_i32, %c0_i32_0 : i32, i32
  }
  func.func @transform_3(%arg0: i32) -> (i32, i32) {
    %c0_i32 = arith.constant 0 : i32
    %c0_i32_0 = arith.constant 0 : i32
    %c0_i32_1 = arith.constant 0 : i32
    return %c0_i32, %c0_i32_0 : i32, i32
  }
  func.func @transform_4(%arg0: i32) -> (i32, i32) {
    %c0_i32 = arith.constant 0 : i32
    %c0_i32_0 = arith.constant 0 : i32
    return %arg0, %c0_i32 : i32, i32
  }
}

</mosaic_0001>

<llo_original>
// kernel: tpu_custom_call.1
$region0: #{tpu_custom_call.1}
  #allocation0 [shape = 'u32[]', space=smem, size = 0x4, offset = 0x4, fixed_abs, tag = 'smem constant byte address 0x4 - core index']
  #allocation1 [shape = 'u32[144,128]{1,0:T(1,128)}', space=vmem, size = 0x12000, scoped, tag = 'internal scratch']
  %s0 = inlined_call_operand.hbm [shape: bf16[2,256], index: 0, kind: input, shape index: {}]
  %s1 = inlined_call_operand.hbm [shape: f32[32,128], index: 1, kind: input, shape index: {}]
  %s2 = inlined_call_operand.vmem [shape: f32[1,128], index: 2, kind: input, shape index: {}]
  %s3 = inlined_call_operand.vmem [shape: f32[1,128], index: 3, kind: input, shape index: {}]
  %s4 = inlined_call_operand.hbm [shape: f32[2,32], index: 4, kind: output, shape index: {}]
  %s5 = sld [smem:[#allocation0]]
  $region34: #{tpu_custom_call.1} parent=0
    _
  %s7 = ssub.s32 1, %s5
  %s8 = scalar_select 0, %s7, %s5
  $region1: #{tpu_custom_call.1} parent=0
    #allocation2 [shape = 'u8[1024]{0}', space=vmem, size = 0x400, scoped, tag = 'input window, operand 0, single buffered']
    #allocation3 [shape = 's32[1]{0}', space=sflag, size = 0x4, scoped, tag = 'scoped memory for tpu_custom_call.1']
    #allocation4 [shape = 's32[1]{0}', space=sflag, size = 0x4, scoped, tag = 'scoped memory for tpu_custom_call.1']
    #allocation5 [shape = 'u8[16384]{0}', space=vmem, size = 0x4000, scoped, tag = 'input window, operand 1, single buffered']
    #allocation6 [shape = 's32[1]{0}', space=sflag, size = 0x4, scoped, tag = 'scoped memory for tpu_custom_call.1']
    #allocation7 [shape = 'u8[1024]{0}', space=vmem, size = 0x400, scoped, tag = 'output window, operand 0, single buffered']
    %9 = vsyncpa [#allocation3], 0
    %10 = vsyncpa [#allocation6], 0
    %11 = vsyncpa [#allocation4], 0
    // Predicated region
    $region2: #{tpu_custom_call.1} parent=1 // pred_check
      _
    $region3: #{tpu_custom_call.1} parent=1 // pred_check_branch
      %13 = sbr.rel (0) target = $region5
    $region4: #{tpu_custom_call.1} parent=1 // pred_region
      %s15 = ssub.s32 32, 32
      %16 = vsyncadd [#allocation3], %s15
      %s18 = sshll.u32 [#allocation2], 4
      %s19 = int_to_ptr.vmem [resolvable:$true] %s18
      %21 = dma.hbm_to_vmem [thread:$0]  %s0, 32, %s19, [#allocation3]
    $region5: #{tpu_custom_call.1} parent=1 // pred_fallthru
      _
    // Predicated region
    $region6: #{tpu_custom_call.1} parent=1 // pred_check
      _
    $region7: #{tpu_custom_call.1} parent=1 // pred_check_branch
      %23 = sbr.rel (0) target = $region9
    $region8: #{tpu_custom_call.1} parent=1 // pred_region
      %s25 = ssub.s32 512, 512
      %26 = vsyncadd [#allocation6], %s25
      %s27 = sshll.u32 [#allocation5], 4
      %s28 = int_to_ptr.vmem [resolvable:$true] %s27
      %33 = dma.hbm_to_vmem [thread:$0]  %s1, 512, %s28, [#allocation6], 128, 128, 8
    $region9: #{tpu_custom_call.1} parent=1 // pred_fallthru
      _
    // Predicated region
    $region10: #{tpu_custom_call.1} parent=1 // pred_check
      _
    $region11: #{tpu_custom_call.1} parent=1 // pred_check_branch
      %35 = sbr.rel (0) target = $region13
    $region12: #{tpu_custom_call.1} parent=1 // pred_region
      _
    $region13: #{tpu_custom_call.1} parent=1 // pred_fallthru
      _
    // Predicated region
    $region14: #{tpu_custom_call.1} parent=1 // pred_check
      _
    $region15: #{tpu_custom_call.1} parent=1 // pred_check_branch
      %37 = sbr.rel (0) target = $region17
    $region16: #{tpu_custom_call.1} parent=1 // pred_region
      _
    $region17: #{tpu_custom_call.1} parent=1 // pred_fallthru
      _
    // Predicated region
    $region18: #{tpu_custom_call.1} parent=1 // pred_check
      _
    $region19: #{tpu_custom_call.1} parent=1 // pred_check_branch
      %39 = sbr.rel (0) target = $region21
    $region20: #{tpu_custom_call.1} parent=1 // pred_region
      %40 = dma.done [#allocation3], 32
    $region21: #{tpu_custom_call.1} parent=1 // pred_fallthru
      _
    // Predicated region
    $region22: #{tpu_custom_call.1} parent=1 // pred_check
      _
    $region23: #{tpu_custom_call.1} parent=1 // pred_check_branch
      %42 = sbr.rel (0) target = $region25
    $region24: #{tpu_custom_call.1} parent=1 // pred_region
      %43 = dma.done [#allocation6], 512
    $region25: #{tpu_custom_call.1} parent=1 // pred_fallthru
      _
    %v44 = vld [vmem:[#allocation5] sm:$0xff]
    %v45 = vld [vmem:[#allocation5 + $0x8] sm:$0xff]
    %v46 = vld [vmem:[#allocation5 + $0x10] sm:$0xff]
    %v47 = vld [vmem:[#allocation5 + $0x18] sm:$0xff]
    %v48 = vld [vmem:[%s2] sm:$0x1]
    %v49 = vld [vmem:[%s3] sm:$0x1]
    %v50 = vlaneseq
    %v51 = vand.u32 %v50, 127
    %v52 = vld [vmem:[#allocation2] sm:$0x1]
    %v53 = vunpack.c.l.bf16 %v52
    %v55 = vlaneseq
    %v56 = vshrl.u32 %v55, 7
    %v57 = vsub.s32 0, %v56
    %v58 = vrot.slane %v48, %v57
    %vm60 = vcmask 261120
    %v62 = vsel %vm60, %v53, 0
    %64 = vmatprep.subr.mxu0 0.0
    %v65 = vand.u32 %v44, 4294901760
    %66 = vmatpush1.msra.mxu0 %v65
    %67 = vmatprep.subr.mxu0 0.0
    %v68 = vand.u32 %v45, 4294901760
    %69 = vmatpush1.msra.mxu0 %v68
    %70 = vmatprep.subr.mxu0 0.0
    %v71 = vand.u32 %v46, 4294901760
    %72 = vmatpush1.msra.mxu0 %v71
    %73 = vmatprep.subr.mxu0 0.0
    %v74 = vand.u32 %v47, 4294901760
    %75 = vmatpush1.msra.mxu0 %v74
    %76 = vmatprep.subr.mxu0 0.0
    %77 = vmatpush1.msra.mxu0 0.0
    %78 = vmatprep.subr.mxu0 0.0
    %79 = vmatpush1.msra.mxu0 0.0
    %80 = vmatprep.subr.mxu0 0.0
    %81 = vmatpush1.msra.mxu0 0.0
    %82 = vmatprep.subr.mxu0 0.0
    %83 = vmatpush1.msra.mxu0 0.0
    %84 = vmatprep.subr.mxu0 0.0
    %85 = vmatpush1.msra.mxu0 0.0
    %86 = vmatprep.subr.mxu0 0.0
    %87 = vmatpush1.msra.mxu0 0.0
    %88 = vmatprep.subr.mxu0 0.0
    %89 = vmatpush1.msra.mxu0 0.0
    %90 = vmatprep.subr.mxu0 0.0
    %91 = vmatpush1.msra.mxu0 0.0
    %92 = vmatprep.subr.mxu0 0.0
    %93 = vmatpush1.msra.mxu0 0.0
    %94 = vmatprep.subr.mxu0 0.0
    %95 = vmatpush1.msra.mxu0 0.0
    %96 = vmatprep.subr.mxu0 0.0
    %97 = vmatpush1.msra.mxu0 0.0
    %98 = vmatprep.subr.mxu0 0.0
    %99 = vmatpush1.msra.mxu0 0.0
    %100 = vmatprep.subr.mxu0 0.0
    %101 = vmatpush1.msra.mxu0 0.0
    %102 = vmatprep.subr.mxu0 0.0
    %103 = vmatpush1.msra.mxu0 0.0
    %104 = vmatprep.subr.mxu0 0.0
    %105 = vmatpush1.msra.mxu0 0.0
    %106 = vmatprep.subr.mxu0 0.0
    %107 = vmatpush1.msra.mxu0 0.0
    %108 = vmatprep.subr.mxu0 0.0
    %109 = vmatpush1.msra.mxu0 0.0
    %110 = vmatprep.subr.mxu0 0.0
    %111 = vmatpush1.msra.mxu0 0.0
    %112 = vmatprep.subr.mxu0 0.0
    %113 = vmatpush1.msra.mxu0 0.0
    %114 = vmatprep.subr.mxu0 0.0
    %115 = vmatpush1.msra.mxu0 0.0
    %116 = vmatprep.subr.mxu0 0.0
    %117 = vmatpush1.msra.mxu0 0.0
    %118 = vmatprep.subr.mxu0 0.0
    %119 = vmatpush1.msra.mxu0 0.0
    %120 = vmatprep.subr.mxu0 0.0
    %121 = vmatpush1.msra.mxu0 0.0
    %122 = vmatprep.subr.mxu0 0.0
    %123 = vmatpush1.msra.mxu0 0.0
    %124 = vmatprep.subr.mxu0 0.0
    %125 = vmatpush1.msra.mxu0 0.0
    %126 = vmatprep.subr.mxu0 0.0
    %127 = vmatpush1.msra.mxu0 0.0
    %128 = vmatprep.subr.mxu0 0.0
    %129 = vmatpush1.msra.mxu0 0.0
    %130 = vmatprep.subr.mxu0 0.0
    %131 = vmatpush1.msra.mxu0 0.0
    %132 = vmatprep.mubr.f32.mxu0 0.0
    %v133 = vand.u32 %v62, 4294901760
    %v134 = vsub.f32 %v62, %v133
    %v135 = vand.u32 %v134, 4294901760
    %v136 = vsub.f32 %v134, %v135
    %v137 = vand.u32 %v136, 4294901760
    %138 = vmatmul.mubr.f32.gmra.mrb[0].mxu0 %v137
    %v139 = vpop.f32.mrb[0].mxu0
    %v140 = vadd.f32 %v58, %v139
    %v141 = vpop.f32.mrb[0].mxu0
    %142 = vdwg.mxu0
    %143 = vmatprep.subr.mxu0 0.0
    %v144 = vand.u32 %v44, 4294901760
    %v145 = vsub.f32 %v44, %v144
    %v146 = vand.u32 %v145, 4294901760
    %v147 = vsub.f32 %v145, %v146
    %v148 = vand.u32 %v147, 4294901760
    %149 = vmatpush1.msra.mxu0 %v148
    %150 = vmatprep.subr.mxu0 0.0
    %v151 = vand.u32 %v45, 4294901760
    %v152 = vsub.f32 %v45, %v151
    %v153 = vand.u32 %v152, 4294901760
    %v154 = vsub.f32 %v152, %v153
    %v155 = vand.u32 %v154, 4294901760
    %156 = vmatpush1.msra.mxu0 %v155
    %157 = vmatprep.subr.mxu0 0.0
    %v158 = vand.u32 %v46, 4294901760
    %v159 = vsub.f32 %v46, %v158
    %v160 = vand.u32 %v159, 4294901760
    %v161 = vsub.f32 %v159, %v160
    %v162 = vand.u32 %v161, 4294901760
    %163 = vmatpush1.msra.mxu0 %v162
    %164 = vmatprep.subr.mxu0 0.0
    %v165 = vand.u32 %v47, 4294901760
    %v166 = vsub.f32 %v47, %v165
    %v167 = vand.u32 %v166, 4294901760
    %v168 = vsub.f32 %v166, %v167
    %v169 = vand.u32 %v168, 4294901760
    %170 = vmatpush1.msra.mxu0 %v169
    %171 = vmatprep.subr.mxu0 0.0
    %172 = vmatpush1.msra.mxu0 0.0
    %173 = vmatprep.subr.mxu0 0.0
    %174 = vmatpush1.msra.mxu0 0.0
    %175 = vmatprep.subr.mxu0 0.0
    %176 = vmatpush1.msra.mxu0 0.0
    %177 = vmatprep.subr.mxu0 0.0
    %178 = vmatpush1.msra.mxu0 0.0
    %179 = vmatprep.subr.mxu0 0.0
    %180 = vmatpush1.msra.mxu0 0.0
    %181 = vmatprep.subr.mxu0 0.0
    %182 = vmatpush1.msra.mxu0 0.0
    %183 = vmatprep.subr.mxu0 0.0
    %184 = vmatpush1.msra.mxu0 0.0
    %185 = vmatprep.subr.mxu0 0.0
    %186 = vmatpush1.msra.mxu0 0.0
    %187 = vmatprep.subr.mxu0 0.0
    %188 = vmatpush1.msra.mxu0 0.0
    %189 = vmatprep.subr.mxu0 0.0
    %190 = vmatpush1.msra.mxu0 0.0
    %191 = vmatprep.subr.mxu0 0.0
    %192 = vmatpush1.msra.mxu0 0.0
    %193 = vmatprep.subr.mxu0 0.0
    %194 = vmatpush1.msra.mxu0 0.0
    %195 = vmatprep.subr.mxu0 0.0
    %196 = vmatpush1.msra.mxu0 0.0
    %197 = vmatprep.subr.mxu0 0.0
    %198 = vmatpush1.msra.mxu0 0.0
    %199 = vmatprep.subr.mxu0 0.0
    %200 = vmatpush1.msra.mxu0 0.0
    %201 = vmatprep.subr.mxu0 0.0
    %202 = vmatpush1.msra.mxu0 0.0
    %203 = vmatprep.subr.mxu0 0.0
    %204 = vmatpush1.msra.mxu0 0.0
    %205 = vmatprep.subr.mxu0 0.0
    %206 = vmatpush1.msra.mxu0 0.0
    %207 = vmatprep.subr.mxu0 0.0
    %208 = vmatpush1.msra.mxu0 0.0
    %209 = vmatprep.subr.mxu0 0.0
    %210 = vmatpush1.msra.mxu0 0.0
    %211 = vmatprep.subr.mxu0 0.0
    %212 = vmatpush1.msra.mxu0 0.0
    %213 = vmatprep.subr.mxu0 0.0
    %214 = vmatpush1.msra.mxu0 0.0
    %215 = vmatprep.subr.mxu0 0.0
    %216 = vmatpush1.msra.mxu0 0.0
    %217 = vmatprep.subr.mxu0 0.0
    %218 = vmatpush1.msra.mxu0 0.0
    %219 = vmatprep.subr.mxu0 0.0
    %220 = vmatpush1.msra.mxu0 0.0
    %221 = vmatprep.subr.mxu0 0.0
    %222 = vmatpush1.msra.mxu0 0.0
    %223 = vmatprep.subr.mxu0 0.0
    %224 = vmatpush1.msra.mxu0 0.0
    %225 = vmatprep.subr.mxu0 0.0
    %226 = vmatpush1.msra.mxu0 0.0
    %227 = vmatprep.mubr.f32.mxu0 0.0
    %v228 = vand.u32 %v62, 4294901760
    %229 = vmatmul.mubr.f32.gmra.mrb[0].mxu0 %v228
    %v230 = vpop.f32.mrb[0].mxu0
    %v231 = vadd.f32 %v140, %v230
    %v232 = vpop.f32.mrb[0].mxu0
    %233 = vdwg.mxu0
    %234 = vmatprep.subr.mxu0 0.0
    %v235 = vand.u32 %v44, 4294901760
    %v236 = vsub.f32 %v44, %v235
    %237 = vmatpush1.msra.mxu0 %v236
    %238 = vmatprep.subr.mxu0 0.0
    %v239 = vand.u32 %v45, 4294901760
    %v240 = vsub.f32 %v45, %v239
    %241 = vmatpush1.msra.mxu0 %v240
    %242 = vmatprep.subr.mxu0 0.0
    %v243 = vand.u32 %v46, 4294901760
    %v244 = vsub.f32 %v46, %v243
    %245 = vmatpush1.msra.mxu0 %v244
    %246 = vmatprep.subr.mxu0 0.0
    %v247 = vand.u32 %v47, 4294901760
    %v248 = vsub.f32 %v47, %v247
    %249 = vmatpush1.msra.mxu0 %v248
    %250 = vmatprep.subr.mxu0 0.0
    %251 = vmatpush1.msra.mxu0 0.0
    %252 = vmatprep.subr.mxu0 0.0
    %253 = vmatpush1.msra.mxu0 0.0
    %254 = vmatprep.subr.mxu0 0.0
    %255 = vmatpush1.msra.mxu0 0.0
    %256 = vmatprep.subr.mxu0 0.0
    %257 = vmatpush1.msra.mxu0 0.0
    %258 = vmatprep.subr.mxu0 0.0
    %259 = vmatpush1.msra.mxu0 0.0
    %260 = vmatprep.subr.mxu0 0.0
    %261 = vmatpush1.msra.mxu0 0.0
    %262 = vmatprep.subr.mxu0 0.0
    %263 = vmatpush1.msra.mxu0 0.0
    %264 = vmatprep.subr.mxu0 0.0
    %265 = vmatpush1.msra.mxu0 0.0
    %266 = vmatprep.subr.mxu0 0.0
    %267 = vmatpush1.msra.mxu0 0.0
    %268 = vmatprep.subr.mxu0 0.0
    %269 = vmatpush1.msra.mxu0 0.0
    %270 = vmatprep.subr.mxu0 0.0
    %271 = vmatpush1.msra.mxu0 0.0
    %272 = vmatprep.subr.mxu0 0.0
    %273 = vmatpush1.msra.mxu0 0.0
    %274 = vmatprep.subr.mxu0 0.0
    %275 = vmatpush1.msra.mxu0 0.0
    %276 = vmatprep.subr.mxu0 0.0
    %277 = vmatpush1.msra.mxu0 0.0
    %278 = vmatprep.subr.mxu0 0.0
    %279 = vmatpush1.msra.mxu0 0.0
    %280 = vmatprep.subr.mxu0 0.0
    %281 = vmatpush1.msra.mxu0 0.0
    %282 = vmatprep.subr.mxu0 0.0
    %283 = vmatpush1.msra.mxu0 0.0
    %284 = vmatprep.subr.mxu0 0.0
    %285 = vmatpush1.msra.mxu0 0.0
    %286 = vmatprep.subr.mxu0 0.0
    %287 = vmatpush1.msra.mxu0 0.0
    %288 = vmatprep.subr.mxu0 0.0
    %289 = vmatpush1.msra.mxu0 0.0
    %290 = vmatprep.subr.mxu0 0.0
    %291 = vmatpush1.msra.mxu0 0.0
    %292 = vmatprep.subr.mxu0 0.0
    %293 = vmatpush1.msra.mxu0 0.0
    %294 = vmatprep.subr.mxu0 0.0
    %295 = vmatpush1.msra.mxu0 0.0
    %296 = vmatprep.subr.mxu0 0.0
    %297 = vmatpush1.msra.mxu0 0.0
    %298 = vmatprep.subr.mxu0 0.0
    %299 = vmatpush1.msra.mxu0 0.0
    %300 = vmatprep.subr.mxu0 0.0
    %301 = vmatpush1.msra.mxu0 0.0
    %302 = vmatprep.subr.mxu0 0.0
    %303 = vmatpush1.msra.mxu0 0.0
    %304 = vmatprep.subr.mxu0 0.0
    %305 = vmatpush1.msra.mxu0 0.0
    %306 = vmatprep.mubr.f32.mxu0 0.0
    %v307 = vand.u32 %v62, 4294901760
    %v308 = vsub.f32 %v62, %v307
    %309 = vmatmul.mubr.f32.gmra.mrb[0].mxu0 %v308
    %v310 = vpop.f32.mrb[0].mxu0
    %v311 = vadd.f32 %v231, %v310
    %v312 = vpop.f32.mrb[0].mxu0
    %313 = vdwg.mxu0
    %314 = vmatprep.subr.mxu0 0.0
    %v315 = vand.u32 %v44, 4294901760
    %316 = vmatpush1.msra.mxu0 %v315
    %317 = vmatprep.subr.mxu0 0.0
    %v318 = vand.u32 %v45, 4294901760
    %319 = vmatpush1.msra.mxu0 %v318
    %320 = vmatprep.subr.mxu0 0.0
    %v321 = vand.u32 %v46, 4294901760
    %322 = vmatpush1.msra.mxu0 %v321
    %323 = vmatprep.subr.mxu0 0.0
    %v324 = vand.u32 %v47, 4294901760
    %325 = vmatpush1.msra.mxu0 %v324
    %326 = vmatprep.subr.mxu0 0.0
    %327 = vmatpush1.msra.mxu0 0.0
    %328 = vmatprep.subr.mxu0 0.0
    %329 = vmatpush1.msra.mxu0 0.0
    %330 = vmatprep.subr.mxu0 0.0
    %331 = vmatpush1.msra.mxu0 0.0
    %332 = vmatprep.subr.mxu0 0.0
    %333 = vmatpush1.msra.mxu0 0.0
    %334 = vmatprep.subr.mxu0 0.0
    %335 = vmatpush1.msra.mxu0 0.0
    %336 = vmatprep.subr.mxu0 0.0
    %337 = vmatpush1.msra.mxu0 0.0
    %338 = vmatprep.subr.mxu0 0.0
    %339 = vmatpush1.msra.mxu0 0.0
    %340 = vmatprep.subr.mxu0 0.0
    %341 = vmatpush1.msra.mxu0 0.0
    %342 = vmatprep.subr.mxu0 0.0
    %343 = vmatpush1.msra.mxu0 0.0
    %344 = vmatprep.subr.mxu0 0.0
    %345 = vmatpush1.msra.mxu0 0.0
    %346 = vmatprep.subr.mxu0 0.0
    %347 = vmatpush1.msra.mxu0 0.0
    %348 = vmatprep.subr.mxu0 0.0
    %349 = vmatpush1.msra.mxu0 0.0
    %350 = vmatprep.subr.mxu0 0.0
    %351 = vmatpush1.msra.mxu0 0.0
    %352 = vmatprep.subr.mxu0 0.0
    %353 = vmatpush1.msra.mxu0 0.0
    %354 = vmatprep.subr.mxu0 0.0
    %355 = vmatpush1.msra.mxu0 0.0
    %356 = vmatprep.subr.mxu0 0.0
    %357 = vmatpush1.msra.mxu0 0.0
    %358 = vmatprep.subr.mxu0 0.0
    %359 = vmatpush1.msra.mxu0 0.0
    %360 = vmatprep.subr.mxu0 0.0
    %361 = vmatpush1.msra.mxu0 0.0
    %362 = vmatprep.subr.mxu0 0.0
    %363 = vmatpush1.msra.mxu0 0.0
    %364 = vmatprep.subr.mxu0 0.0
    %365 = vmatpush1.msra.mxu0 0.0
    %366 = vmatprep.subr.mxu0 0.0
    %367 = vmatpush1.msra.mxu0 0.0
    %368 = vmatprep.subr.mxu0 0.0
    %369 = vmatpush1.msra.mxu0 0.0
    %370 = vmatprep.subr.mxu0 0.0
    %371 = vmatpush1.msra.mxu0 0.0
    %372 = vmatprep.subr.mxu0 0.0
    %373 = vmatpush1.msra.mxu0 0.0
    %374 = vmatprep.subr.mxu0 0.0
    %375 = vmatpush1.msra.mxu0 0.0
    %376 = vmatprep.subr.mxu0 0.0
    %377 = vmatpush1.msra.mxu0 0.0
    %378 = vmatprep.subr.mxu0 0.0
    %379 = vmatpush1.msra.mxu0 0.0
    %380 = vmatprep.subr.mxu0 0.0
    %381 = vmatpush1.msra.mxu0 0.0
    %382 = vmatprep.mubr.f32.mxu0 0.0
    %v383 = vand.u32 %v62, 4294901760
    %v384 = vsub.f32 %v62, %v383
    %v385 = vand.u32 %v384, 4294901760
    %386 = vmatmul.mubr.f32.gmra.mrb[0].mxu0 %v385
    %v387 = vpop.f32.mrb[0].mxu0
    %v388 = vadd.f32 %v311, %v387
    %v389 = vpop.f32.mrb[0].mxu0
    %390 = vdwg.mxu0
    %391 = vmatprep.subr.mxu0 0.0
    %v392 = vand.u32 %v44, 4294901760
    %v393 = vsub.f32 %v44, %v392
    %v394 = vand.u32 %v393, 4294901760
    %395 = vmatpush1.msra.mxu0 %v394
    %396 = vmatprep.subr.mxu0 0.0
    %v397 = vand.u32 %v45, 4294901760
    %v398 = vsub.f32 %v45, %v397
    %v399 = vand.u32 %v398, 4294901760
    %400 = vmatpush1.msra.mxu0 %v399
    %401 = vmatprep.subr.mxu0 0.0
    %v402 = vand.u32 %v46, 4294901760
    %v403 = vsub.f32 %v46, %v402
    %v404 = vand.u32 %v403, 4294901760
    %405 = vmatpush1.msra.mxu0 %v404
    %406 = vmatprep.subr.mxu0 0.0
    %v407 = vand.u32 %v47, 4294901760
    %v408 = vsub.f32 %v47, %v407
    %v409 = vand.u32 %v408, 4294901760
    %410 = vmatpush1.msra.mxu0 %v409
    %411 = vmatprep.subr.mxu0 0.0
    %412 = vmatpush1.msra.mxu0 0.0
    %413 = vmatprep.subr.mxu0 0.0
    %414 = vmatpush1.msra.mxu0 0.0
    %415 = vmatprep.subr.mxu0 0.0
    %416 = vmatpush1.msra.mxu0 0.0
    %417 = vmatprep.subr.mxu0 0.0
    %418 = vmatpush1.msra.mxu0 0.0
    %419 = vmatprep.subr.mxu0 0.0
    %420 = vmatpush1.msra.mxu0 0.0
    %421 = vmatprep.subr.mxu0 0.0
    %422 = vmatpush1.msra.mxu0 0.0
    %423 = vmatprep.subr.mxu0 0.0
    %424 = vmatpush1.msra.mxu0 0.0
    %425 = vmatprep.subr.mxu0 0.0
    %426 = vmatpush1.msra.mxu0 0.0
    %427 = vmatprep.subr.mxu0 0.0
    %428 = vmatpush1.msra.mxu0 0.0
    %429 = vmatprep.subr.mxu0 0.0
    %430 = vmatpush1.msra.mxu0 0.0
    %431 = vmatprep.subr.mxu0 0.0
    %432 = vmatpush1.msra.mxu0 0.0
    %433 = vmatprep.subr.mxu0 0.0
    %434 = vmatpush1.msra.mxu0 0.0
    %435 = vmatprep.subr.mxu0 0.0
    %436 = vmatpush1.msra.mxu0 0.0
    %437 = vmatprep.subr.mxu0 0.0
    %438 = vmatpush1.msra.mxu0 0.0
    %439 = vmatprep.subr.mxu0 0.0
    %440 = vmatpush1.msra.mxu0 0.0
    %441 = vmatprep.subr.mxu0 0.0
    %442 = vmatpush1.msra.mxu0 0.0
    %443 = vmatprep.subr.mxu0 0.0
    %444 = vmatpush1.msra.mxu0 0.0
    %445 = vmatprep.subr.mxu0 0.0
    %446 = vmatpush1.msra.mxu0 0.0
    %447 = vmatprep.subr.mxu0 0.0
    %448 = vmatpush1.msra.mxu0 0.0
    %449 = vmatprep.subr.mxu0 0.0
    %450 = vmatpush1.msra.mxu0 0.0
    %451 = vmatprep.subr.mxu0 0.0
    %452 = vmatpush1.msra.mxu0 0.0
    %453 = vmatprep.subr.mxu0 0.0
    %454 = vmatpush1.msra.mxu0 0.0
    %455 = vmatprep.subr.mxu0 0.0
    %456 = vmatpush1.msra.mxu0 0.0
    %457 = vmatprep.subr.mxu0 0.0
    %458 = vmatpush1.msra.mxu0 0.0
    %459 = vmatprep.subr.mxu0 0.0
    %460 = vmatpush1.msra.mxu0 0.0
    %461 = vmatprep.subr.mxu0 0.0
    %462 = vmatpush1.msra.mxu0 0.0
    %463 = vmatprep.subr.mxu0 0.0
    %464 = vmatpush1.msra.mxu0 0.0
    %465 = vmatprep.subr.mxu0 0.0
    %466 = vmatpush1.msra.mxu0 0.0
    %467 = vmatprep.mubr.f32.mxu0 0.0
    %v468 = vand.u32 %v62, 4294901760
    %469 = vmatmul.mubr.f32.gmra.mrb[0].mxu0 %v468
    %v470 = vpop.f32.mrb[0].mxu0
    %v471 = vadd.f32 %v388, %v470
    %v472 = vpop.f32.mrb[0].mxu0
    %473 = vdwg.mxu0
    %474 = vmatprep.subr.mxu0 0.0
    %v475 = vand.u32 %v44, 4294901760
    %476 = vmatpush1.msra.mxu0 %v475
    %477 = vmatprep.subr.mxu0 0.0
    %v478 = vand.u32 %v45, 4294901760
    %479 = vmatpush1.msra.mxu0 %v478
    %480 = vmatprep.subr.mxu0 0.0
    %v481 = vand.u32 %v46, 4294901760
    %482 = vmatpush1.msra.mxu0 %v481
    %483 = vmatprep.subr.mxu0 0.0
    %v484 = vand.u32 %v47, 4294901760
    %485 = vmatpush1.msra.mxu0 %v484
    %486 = vmatprep.subr.mxu0 0.0
    %487 = vmatpush1.msra.mxu0 0.0
    %488 = vmatprep.subr.mxu0 0.0
    %489 = vmatpush1.msra.mxu0 0.0
    %490 = vmatprep.subr.mxu0 0.0
    %491 = vmatpush1.msra.mxu0 0.0
    %492 = vmatprep.subr.mxu0 0.0
    %493 = vmatpush1.msra.mxu0 0.0
    %494 = vmatprep.subr.mxu0 0.0
    %495 = vmatpush1.msra.mxu0 0.0
    %496 = vmatprep.subr.mxu0 0.0
    %497 = vmatpush1.msra.mxu0 0.0
    %498 = vmatprep.subr.mxu0 0.0
    %499 = vmatpush1.msra.mxu0 0.0
    %500 = vmatprep.subr.mxu0 0.0
    %501 = vmatpush1.msra.mxu0 0.0
    %502 = vmatprep.subr.mxu0 0.0
    %503 = vmatpush1.msra.mxu0 0.0
    %504 = vmatprep.subr.mxu0 0.0
    %505 = vmatpush1.msra.mxu0 0.0
    %506 = vmatprep.subr.mxu0 0.0
    %507 = vmatpush1.msra.mxu0 0.0
    %508 = vmatprep.subr.mxu0 0.0
    %509 = vmatpush1.msra.mxu0 0.0
    %510 = vmatprep.subr.mxu0 0.0
    %511 = vmatpush1.msra.mxu0 0.0
    %512 = vmatprep.subr.mxu0 0.0
    %513 = vmatpush1.msra.mxu0 0.0
    %514 = vmatprep.subr.mxu0 0.0
    %515 = vmatpush1.msra.mxu0 0.0
    %516 = vmatprep.subr.mxu0 0.0
    %517 = vmatpush1.msra.mxu0 0.0
    %518 = vmatprep.subr.mxu0 0.0
    %519 = vmatpush1.msra.mxu0 0.0
    %520 = vmatprep.subr.mxu0 0.0
    %521 = vmatpush1.msra.mxu0 0.0
    %522 = vmatprep.subr.mxu0 0.0
    %523 = vmatpush1.msra.mxu0 0.0
    %524 = vmatprep.subr.mxu0 0.0
    %525 = vmatpush1.msra.mxu0 0.0
    %526 = vmatprep.subr.mxu0 0.0
    %527 = vmatpush1.msra.mxu0 0.0
    %528 = vmatprep.subr.mxu0 0.0
    %529 = vmatpush1.msra.mxu0 0.0
    %530 = vmatprep.subr.mxu0 0.0
    %531 = vmatpush1.msra.mxu0 0.0
    %532 = vmatprep.subr.mxu0 0.0
    %533 = vmatpush1.msra.mxu0 0.0
    %534 = vmatprep.subr.mxu0 0.0
    %535 = vmatpush1.msra.mxu0 0.0
    %536 = vmatprep.subr.mxu0 0.0
    %537 = vmatpush1.msra.mxu0 0.0
    %538 = vmatprep.subr.mxu0 0.0
    %539 = vmatpush1.msra.mxu0 0.0
    %540 = vmatprep.subr.mxu0 0.0
    %541 = vmatpush1.msra.mxu0 0.0
    %542 = vmatprep.mubr.f32.mxu0 0.0
    %v543 = vand.u32 %v62, 4294901760
    %544 = vmatmul.mubr.f32.gmra.mrb[0].mxu0 %v543
    %v545 = vpop.f32.mrb[0].mxu0
    %v546 = vadd.f32 %v471, %v545
    %v547 = vpop.f32.mrb[0].mxu0
    %548 = vdwg.mxu0
    %v549 = vtanh.pop %v546
    %v551 = vlaneseq
    %v552 = vshrl.u32 %v551, 7
    %v553 = vsub.s32 0, %v552
    %v554 = vrot.slane %v49, %v553
    %v556 = vmul.f32 %v549, %v554
    %vm557 = vcmask 1041408
    %v558 = vsel %vm557, %v556, 0.0
    %559 = vadd.xlane.f32.xlu0 %v558
    %v560 = vpop.xlane.xlu0 %559
    %vm561 = vcmp.eq.s32.totalorder %v51, 0
    %v562 = vsel %vm561, 1, 0
    %vm563 = vcmp.eq.s32.totalorder %v562, 1
    %v564 = vsel %vm563, %v560, 0.0
    %v565 = vadd.f32 %v564, 0.0
    %v567 = vunpack.c.l.s4 1983009808
    %v568 = vunpack.c.0.s8 %v567
    %v569 = vlaneseq
    %v570 = vshrl.u32 %v569, 7
    %v571 = vsub.s32 %v568, %v570
    %v572 = vrot.slane %v53, %v571
    %573 = vrot.lane.b32.xlu0 %v572, 96
    %v574 = vpop.permute.xlu0 %573
    %v575 = vsel %vm60, %v574, 0
    %577 = vmatprep.subr.mxu0 0.0
    %v578 = vand.u32 %v44, 4294901760
    %579 = vmatpush1.msra.mxu0 %v578
    %580 = vmatprep.subr.mxu0 0.0
    %v581 = vand.u32 %v45, 4294901760
    %582 = vmatpush1.msra.mxu0 %v581
    %583 = vmatprep.subr.mxu0 0.0
    %v584 = vand.u32 %v46, 4294901760
    %585 = vmatpush1.msra.mxu0 %v584
    %586 = vmatprep.subr.mxu0 0.0
    %v587 = vand.u32 %v47, 4294901760
    %588 = vmatpush1.msra.mxu0 %v587
    %589 = vmatprep.subr.mxu0 0.0
    %590 = vmatpush1.msra.mxu0 0.0
    %591 = vmatprep.subr.mxu0 0.0
    %592 = vmatpush1.msra.mxu0 0.0
    %593 = vmatprep.subr.mxu0 0.0
    %594 = vmatpush1.msra.mxu0 0.0
    %595 = vmatprep.subr.mxu0 0.0
    %596 = vmatpush1.msra.mxu0 0.0
    %597 = vmatprep.subr.mxu0 0.0
    %598 = vmatpush1.msra.mxu0 0.0
    %599 = vmatprep.subr.mxu0 0.0
    %600 = vmatpush1.msra.mxu0 0.0
    %601 = vmatprep.subr.mxu0 0.0
    %602 = vmatpush1.msra.mxu0 0.0
    %603 = vmatprep.subr.mxu0 0.0
    %604 = vmatpush1.msra.mxu0 0.0
    %605 = vmatprep.subr.mxu0 0.0
    %606 = vmatpush1.msra.mxu0 0.0
    %607 = vmatprep.subr.mxu0 0.0
    %608 = vmatpush1.msra.mxu0 0.0
    %609 = vmatprep.subr.mxu0 0.0
    %610 = vmatpush1.msra.mxu0 0.0
    %611 = vmatprep.subr.mxu0 0.0
    %612 = vmatpush1.msra.mxu0 0.0
    %613 = vmatprep.subr.mxu0 0.0
    %614 = vmatpush1.msra.mxu0 0.0
    %615 = vmatprep.subr.mxu0 0.0
    %616 = vmatpush1.msra.mxu0 0.0
    %617 = vmatprep.subr.mxu0 0.0
    %618 = vmatpush1.msra.mxu0 0.0
    %619 = vmatprep.subr.mxu0 0.0
    %620 = vmatpush1.msra.mxu0 0.0
    %621 = vmatprep.subr.mxu0 0.0
    %622 = vmatpush1.msra.mxu0 0.0
    %623 = vmatprep.subr.mxu0 0.0
    %624 = vmatpush1.msra.mxu0 0.0
    %625 = vmatprep.subr.mxu0 0.0
    %626 = vmatpush1.msra.mxu0 0.0
    %627 = vmatprep.subr.mxu0 0.0
    %628 = vmatpush1.msra.mxu0 0.0
    %629 = vmatprep.subr.mxu0 0.0
    %630 = vmatpush1.msra.mxu0 0.0
    %631 = vmatprep.subr.mxu0 0.0
    %632 = vmatpush1.msra.mxu0 0.0
    %633 = vmatprep.subr.mxu0 0.0
    %634 = vmatpush1.msra.mxu0 0.0
    %635 = vmatprep.subr.mxu0 0.0
    %636 = vmatpush1.msra.mxu0 0.0
    %637 = vmatprep.subr.mxu0 0.0
    %638 = vmatpush1.msra.mxu0 0.0
    %639 = vmatprep.subr.mxu0 0.0
    %640 = vmatpush1.msra.mxu0 0.0
    %641 = vmatprep.subr.mxu0 0.0
    %642 = vmatpush1.msra.mxu0 0.0
    %643 = vmatprep.subr.mxu0 0.0
    %644 = vmatpush1.msra.mxu0 0.0
    %645 = vmatprep.mubr.f32.mxu0 0.0
    %v646 = vand.u32 %v575, 4294901760
    %v647 = vsub.f32 %v575, %v646
    %v648 = vand.u32 %v647, 4294901760
    %v649 = vsub.f32 %v647, %v648
    %v650 = vand.u32 %v649, 4294901760
    %651 = vmatmul.mubr.f32.gmra.mrb[0].mxu0 %v650
    %v652 = vpop.f32.mrb[0].mxu0
    %v653 = vadd.f32 %v58, %v652
    %v654 = vpop.f32.mrb[0].mxu0
    %655 = vdwg.mxu0
    %656 = vmatprep.subr.mxu0 0.0
    %v657 = vand.u32 %v44, 4294901760
    %v658 = vsub.f32 %v44, %v657
    %v659 = vand.u32 %v658, 4294901760
    %v660 = vsub.f32 %v658, %v659
    %v661 = vand.u32 %v660, 4294901760
    %662 = vmatpush1.msra.mxu0 %v661
    %663 = vmatprep.subr.mxu0 0.0
    %v664 = vand.u32 %v45, 4294901760
    %v665 = vsub.f32 %v45, %v664
    %v666 = vand.u32 %v665, 4294901760
    %v667 = vsub.f32 %v665, %v666
    %v668 = vand.u32 %v667, 4294901760
    %669 = vmatpush1.msra.mxu0 %v668
    %670 = vmatprep.subr.mxu0 0.0
    %v671 = vand.u32 %v46, 4294901760
    %v672 = vsub.f32 %v46, %v671
    %v673 = vand.u32 %v672, 4294901760
    %v674 = vsub.f32 %v672, %v673
    %v675 = vand.u32 %v674, 4294901760
    %676 = vmatpush1.msra.mxu0 %v675
    %677 = vmatprep.subr.mxu0 0.0
    %v678 = vand.u32 %v47, 4294901760
    %v679 = vsub.f32 %v47, %v678
    %v680 = vand.u32 %v679, 4294901760
    %v681 = vsub.f32 %v679, %v680
    %v682 = vand.u32 %v681, 4294901760
    %683 = vmatpush1.msra.mxu0 %v682
    %684 = vmatprep.subr.mxu0 0.0
    %685 = vmatpush1.msra.mxu0 0.0
    %686 = vmatprep.subr.mxu0 0.0
    %687 = vmatpush1.msra.mxu0 0.0
    %688 = vmatprep.subr.mxu0 0.0
    %689 = vmatpush1.msra.mxu0 0.0
    %690 = vmatprep.subr.mxu0 0.0
    %691 = vmatpush1.msra.mxu0 0.0
    %692 = vmatprep.subr.mxu0 0.0
    %693 = vmatpush1.msra.mxu0 0.0
    %694 = vmatprep.subr.mxu0 0.0
    %695 = vmatpush1.msra.mxu0 0.0
    %696 = vmatprep.subr.mxu0 0.0
    %697 = vmatpush1.msra.mxu0 0.0
    %698 = vmatprep.subr.mxu0 0.0
    %699 = vmatpush1.msra.mxu0 0.0
    %700 = vmatprep.subr.mxu0 0.0
    %701 = vmatpush1.msra.mxu0 0.0
    %702 = vmatprep.subr.mxu0 0.0
    %703 = vmatpush1.msra.mxu0 0.0
    %704 = vmatprep.subr.mxu0 0.0
    %705 = vmatpush1.msra.mxu0 0.0
    %706 = vmatprep.subr.mxu0 0.0
    %707 = vmatpush1.msra.mxu0 0.0
    %708 = vmatprep.subr.mxu0 0.0
    %709 = vmatpush1.msra.mxu0 0.0
    %710 = vmatprep.subr.mxu0 0.0
    %711 = vmatpush1.msra.mxu0 0.0
    %712 = vmatprep.subr.mxu0 0.0
    %713 = vmatpush1.msra.mxu0 0.0
    %714 = vmatprep.subr.mxu0 0.0
    %715 = vmatpush1.msra.mxu0 0.0
    %716 = vmatprep.subr.mxu0 0.0
    %717 = vmatpush1.msra.mxu0 0.0
    %718 = vmatprep.subr.mxu0 0.0
    %719 = vmatpush1.msra.mxu0 0.0
    %720 = vmatprep.subr.mxu0 0.0
    %721 = vmatpush1.msra.mxu0 0.0
    %722 = vmatprep.subr.mxu0 0.0
    %723 = vmatpush1.msra.mxu0 0.0
    %724 = vmatprep.subr.mxu0 0.0
    %725 = vmatpush1.msra.mxu0 0.0
    %726 = vmatprep.subr.mxu0 0.0
    %727 = vmatpush1.msra.mxu0 0.0
    %728 = vmatprep.subr.mxu0 0.0
    %729 = vmatpush1.msra.mxu0 0.0
    %730 = vmatprep.subr.mxu0 0.0
    %731 = vmatpush1.msra.mxu0 0.0
    %732 = vmatprep.subr.mxu0 0.0
    %733 = vmatpush1.msra.mxu0 0.0
    %734 = vmatprep.subr.mxu0 0.0
    %735 = vmatpush1.msra.mxu0 0.0
    %736 = vmatprep.subr.mxu0 0.0
    %737 = vmatpush1.msra.mxu0 0.0
    %738 = vmatprep.subr.mxu0 0.0
    %739 = vmatpush1.msra.mxu0 0.0
    %740 = vmatprep.mubr.f32.mxu0 0.0
    %v741 = vand.u32 %v575, 4294901760
    %742 = vmatmul.mubr.f32.gmra.mrb[0].mxu0 %v741
    %v743 = vpop.f32.mrb[0].mxu0
    %v744 = vadd.f32 %v653, %v743
    %v745 = vpop.f32.mrb[0].mxu0
    %746 = vdwg.mxu0
    %747 = vmatprep.subr.mxu0 0.0
    %v748 = vand.u32 %v44, 4294901760
    %v749 = vsub.f32 %v44, %v748
    %750 = vmatpush1.msra.mxu0 %v749
    %751 = vmatprep.subr.mxu0 0.0
    %v752 = vand.u32 %v45, 4294901760
    %v753 = vsub.f32 %v45, %v752
    %754 = vmatpush1.msra.mxu0 %v753
    %755 = vmatprep.subr.mxu0 0.0
    %v756 = vand.u32 %v46, 4294901760
    %v757 = vsub.f32 %v46, %v756
    %758 = vmatpush1.msra.mxu0 %v757
    %759 = vmatprep.subr.mxu0 0.0
    %v760 = vand.u32 %v47, 4294901760
    %v761 = vsub.f32 %v47, %v760
    %762 = vmatpush1.msra.mxu0 %v761
    %763 = vmatprep.subr.mxu0 0.0
    %764 = vmatpush1.msra.mxu0 0.0
    %765 = vmatprep.subr.mxu0 0.0
    %766 = vmatpush1.msra.mxu0 0.0
    %767 = vmatprep.subr.mxu0 0.0
    %768 = vmatpush1.msra.mxu0 0.0
    %769 = vmatprep.subr.mxu0 0.0
    %770 = vmatpush1.msra.mxu0 0.0
    %771 = vmatprep.subr.mxu0 0.0
    %772 = vmatpush1.msra.mxu0 0.0
    %773 = vmatprep.subr.mxu0 0.0
    %774 = vmatpush1.msra.mxu0 0.0
    %775 = vmatprep.subr.mxu0 0.0
    %776 = vmatpush1.msra.mxu0 0.0
    %777 = vmatprep.subr.mxu0 0.0
    %778 = vmatpush1.msra.mxu0 0.0
    %779 = vmatprep.subr.mxu0 0.0
    %780 = vmatpush1.msra.mxu0 0.0
    %781 = vmatprep.subr.mxu0 0.0
    %782 = vmatpush1.msra.mxu0 0.0
    %783 = vmatprep.subr.mxu0 0.0
    %784 = vmatpush1.msra.mxu0 0.0
    %785 = vmatprep.subr.mxu0 0.0
    %786 = vmatpush1.msra.mxu0 0.0
    %787 = vmatprep.subr.mxu0 0.0
    %788 = vmatpush1.msra.mxu0 0.0
    %789 = vmatprep.subr.mxu0 0.0
    %790 = vmatpush1.msra.mxu0 0.0
    %791 = vmatprep.subr.mxu0 0.0
    %792 = vmatpush1.msra.mxu0 0.0
    %793 = vmatprep.subr.mxu0 0.0
    %794 = vmatpush1.msra.mxu0 0.0
    %795 = vmatprep.subr.mxu0 0.0
    %796 = vmatpush1.msra.mxu0 0.0
    %797 = vmatprep.subr.mxu0 0.0
    %798 = vmatpush1.msra.mxu0 0.0
    %799 = vmatprep.subr.mxu0 0.0
    %800 = vmatpush1.msra.mxu0 0.0
    %801 = vmatprep.subr.mxu0 0.0
    %802 = vmatpush1.msra.mxu0 0.0
    %803 = vmatprep.subr.mxu0 0.0
    %804 = vmatpush1.msra.mxu0 0.0
    %805 = vmatprep.subr.mxu0 0.0
    %806 = vmatpush1.msra.mxu0 0.0
    %807 = vmatprep.subr.mxu0 0.0
    %808 = vmatpush1.msra.mxu0 0.0
    %809 = vmatprep.subr.mxu0 0.0
    %810 = vmatpush1.msra.mxu0 0.0
    %811 = vmatprep.subr.mxu0 0.0
    %812 = vmatpush1.msra.mxu0 0.0
    %813 = vmatprep.subr.mxu0 0.0
    %814 = vmatpush1.msra.mxu0 0.0
    %815 = vmatprep.subr.mxu0 0.0
    %816 = vmatpush1.msra.mxu0 0.0
    %817 = vmatprep.subr.mxu0 0.0
    %818 = vmatpush1.msra.mxu0 0.0
    %819 = vmatprep.mubr.f32.mxu0 0.0
    %v820 = vand.u32 %v575, 4294901760
    %v821 = vsub.f32 %v575, %v820
    %822 = vmatmul.mubr.f32.gmra.mrb[0].mxu0 %v821
    %v823 = vpop.f32.mrb[0].mxu0
    %v824 = vadd.f32 %v744, %v823
    %v825 = vpop.f32.mrb[0].mxu0
    %826 = vdwg.mxu0
    %827 = vmatprep.subr.mxu0 0.0
    %v828 = vand.u32 %v44, 4294901760
    %829 = vmatpush1.msra.mxu0 %v828
    %830 = vmatprep.subr.mxu0 0.0
    %v831 = vand.u32 %v45, 4294901760
    %832 = vmatpush1.msra.mxu0 %v831
    %833 = vmatprep.subr.mxu0 0.0
    %v834 = vand.u32 %v46, 4294901760
    %835 = vmatpush1.msra.mxu0 %v834
    %836 = vmatprep.subr.mxu0 0.0
    %v837 = vand.u32 %v47, 4294901760
    %838 = vmatpush1.msra.mxu0 %v837
    %839 = vmatprep.subr.mxu0 0.0
    %840 = vmatpush1.msra.mxu0 0.0
    %841 = vmatprep.subr.mxu0 0.0
    %842 = vmatpush1.msra.mxu0 0.0
    %843 = vmatprep.subr.mxu0 0.0
    %844 = vmatpush1.msra.mxu0 0.0
    %845 = vmatprep.subr.mxu0 0.0
    %846 = vmatpush1.msra.mxu0 0.0
    %847 = vmatprep.subr.mxu0 0.0
    %848 = vmatpush1.msra.mxu0 0.0
    %849 = vmatprep.subr.mxu0 0.0
    %850 = vmatpush1.msra.mxu0 0.0
    %851 = vmatprep.subr.mxu0 0.0
    %852 = vmatpush1.msra.mxu0 0.0
    %853 = vmatprep.subr.mxu0 0.0
    %854 = vmatpush1.msra.mxu0 0.0
    %855 = vmatprep.subr.mxu0 0.0
    %856 = vmatpush1.msra.mxu0 0.0
    %857 = vmatprep.subr.mxu0 0.0
    %858 = vmatpush1.msra.mxu0 0.0
    %859 = vmatprep.subr.mxu0 0.0
    %860 = vmatpush1.msra.mxu0 0.0
    %861 = vmatprep.subr.mxu0 0.0
    %862 = vmatpush1.msra.mxu0 0.0
    %863 = vmatprep.subr.mxu0 0.0
    %864 = vmatpush1.msra.mxu0 0.0
    %865 = vmatprep.subr.mxu0 0.0
    %866 = vmatpush1.msra.mxu0 0.0
    %867 = vmatprep.subr.mxu0 0.0
    %868 = vmatpush1.msra.mxu0 0.0
    %869 = vmatprep.subr.mxu0 0.0
    %870 = vmatpush1.msra.mxu0 0.0
    %871 = vmatprep.subr.mxu0 0.0
    %872 = vmatpush1.msra.mxu0 0.0
    %873 = vmatprep.subr.mxu0 0.0
    %874 = vmatpush1.msra.mxu0 0.0
    %875 = vmatprep.subr.mxu0 0.0
    %876 = vmatpush1.msra.mxu0 0.0
    %877 = vmatprep.subr.mxu0 0.0
    %878 = vmatpush1.msra.mxu0 0.0
    %879 = vmatprep.subr.mxu0 0.0
    %880 = vmatpush1.msra.mxu0 0.0
    %881 = vmatprep.subr.mxu0 0.0
    %882 = vmatpush1.msra.mxu0 0.0
    %883 = vmatprep.subr.mxu0 0.0
    %884 = vmatpush1.msra.mxu0 0.0
    %885 = vmatprep.subr.mxu0 0.0
    %886 = vmatpush1.msra.mxu0 0.0
    %887 = vmatprep.subr.mxu0 0.0
    %888 = vmatpush1.msra.mxu0 0.0
    %889 = vmatprep.subr.mxu0 0.0
    %890 = vmatpush1.msra.mxu0 0.0
    %891 = vmatprep.subr.mxu0 0.0
    %892 = vmatpush1.msra.mxu0 0.0
    %893 = vmatprep.subr.mxu0 0.0
    %894 = vmatpush1.msra.mxu0 0.0
    %895 = vmatprep.mubr.f32.mxu0 0.0
    %v896 = vand.u32 %v575, 4294901760
    %v897 = vsub.f32 %v575, %v896
    %v898 = vand.u32 %v897, 4294901760
    %899 = vmatmul.mubr.f32.gmra.mrb[0].mxu0 %v898
    %v900 = vpop.f32.mrb[0].mxu0
    %v901 = vadd.f32 %v824, %v900
    %v902 = vpop.f32.mrb[0].mxu0
    %903 = vdwg.mxu0
    %904 = vmatprep.subr.mxu0 0.0
    %v905 = vand.u32 %v44, 4294901760
    %v906 = vsub.f32 %v44, %v905
    %v907 = vand.u32 %v906, 4294901760
    %908 = vmatpush1.msra.mxu0 %v907
    %909 = vmatprep.subr.mxu0 0.0
    %v910 = vand.u32 %v45, 4294901760
    %v911 = vsub.f32 %v45, %v910
    %v912 = vand.u32 %v911, 4294901760
    %913 = vmatpush1.msra.mxu0 %v912
    %914 = vmatprep.subr.mxu0 0.0
    %v915 = vand.u32 %v46, 4294901760
    %v916 = vsub.f32 %v46, %v915
    %v917 = vand.u32 %v916, 4294901760
    %918 = vmatpush1.msra.mxu0 %v917
    %919 = vmatprep.subr.mxu0 0.0
    %v920 = vand.u32 %v47, 4294901760
    %v921 = vsub.f32 %v47, %v920
    %v922 = vand.u32 %v921, 4294901760
    %923 = vmatpush1.msra.mxu0 %v922
    %924 = vmatprep.subr.mxu0 0.0
    %925 = vmatpush1.msra.mxu0 0.0
    %926 = vmatprep.subr.mxu0 0.0
    %927 = vmatpush1.msra.mxu0 0.0
    %928 = vmatprep.subr.mxu0 0.0
    %929 = vmatpush1.msra.mxu0 0.0
    %930 = vmatprep.subr.mxu0 0.0
    %931 = vmatpush1.msra.mxu0 0.0
    %932 = vmatprep.subr.mxu0 0.0
    %933 = vmatpush1.msra.mxu0 0.0
    %934 = vmatprep.subr.mxu0 0.0
    %935 = vmatpush1.msra.mxu0 0.0
    %936 = vmatprep.subr.mxu0 0.0
    %937 = vmatpush1.msra.mxu0 0.0
    %938 = vmatprep.subr.mxu0 0.0
    %939 = vmatpush1.msra.mxu0 0.0
    %940 = vmatprep.subr.mxu0 0.0
    %941 = vmatpush1.msra.mxu0 0.0
    %942 = vmatprep.subr.mxu0 0.0
    %943 = vmatpush1.msra.mxu0 0.0
    %944 = vmatprep.subr.mxu0 0.0
    %945 = vmatpush1.msra.mxu0 0.0
    %946 = vmatprep.subr.mxu0 0.0
    %947 = vmatpush1.msra.mxu0 0.0
    %948 = vmatprep.subr.mxu0 0.0
    %949 = vmatpush1.msra.mxu0 0.0
    %950 = vmatprep.subr.mxu0 0.0
    %951 = vmatpush1.msra.mxu0 0.0
    %952 = vmatprep.subr.mxu0 0.0
    %953 = vmatpush1.msra.mxu0 0.0
    %954 = vmatprep.subr.mxu0 0.0
    %955 = vmatpush1.msra.mxu0 0.0
    %956 = vmatprep.subr.mxu0 0.0
    %957 = vmatpush1.msra.mxu0 0.0
    %958 = vmatprep.subr.mxu0 0.0
    %959 = vmatpush1.msra.mxu0 0.0
    %960 = vmatprep.subr.mxu0 0.0
    %961 = vmatpush1.msra.mxu0 0.0
    %962 = vmatprep.subr.mxu0 0.0
    %963 = vmatpush1.msra.mxu0 0.0
    %964 = vmatprep.subr.mxu0 0.0
    %965 = vmatpush1.msra.mxu0 0.0
    %966 = vmatprep.subr.mxu0 0.0
    %967 = vmatpush1.msra.mxu0 0.0
    %968 = vmatprep.subr.mxu0 0.0
    %969 = vmatpush1.msra.mxu0 0.0
    %970 = vmatprep.subr.mxu0 0.0
    %971 = vmatpush1.msra.mxu0 0.0
    %972 = vmatprep.subr.mxu0 0.0
    %973 = vmatpush1.msra.mxu0 0.0
    %974 = vmatprep.subr.mxu0 0.0
    %975 = vmatpush1.msra.mxu0 0.0
    %976 = vmatprep.subr.mxu0 0.0
    %977 = vmatpush1.msra.mxu0 0.0
    %978 = vmatprep.subr.mxu0 0.0
    %979 = vmatpush1.msra.mxu0 0.0
    %980 = vmatprep.mubr.f32.mxu0 0.0
    %v981 = vand.u32 %v575, 4294901760
    %982 = vmatmul.mubr.f32.gmra.mrb[0].mxu0 %v981
    %v983 = vpop.f32.mrb[0].mxu0
    %v984 = vadd.f32 %v901, %v983
    %v985 = vpop.f32.mrb[0].mxu0
    %986 = vdwg.mxu0
    %987 = vmatprep.subr.mxu0 0.0
    %v988 = vand.u32 %v44, 4294901760
    %989 = vmatpush1.msra.mxu0 %v988
    %990 = vmatprep.subr.mxu0 0.0
    %v991 = vand.u32 %v45, 4294901760
    %992 = vmatpush1.msra.mxu0 %v991
    %993 = vmatprep.subr.mxu0 0.0
    %v994 = vand.u32 %v46, 4294901760
    %995 = vmatpush1.msra.mxu0 %v994
    %996 = vmatprep.subr.mxu0 0.0
    %v997 = vand.u32 %v47, 4294901760
    %998 = vmatpush1.msra.mxu0 %v997
    %999 = vmatprep.subr.mxu0 0.0
    %1000 = vmatpush1.msra.mxu0 0.0
    %1001 = vmatprep.subr.mxu0 0.0
    %1002 = vmatpush1.msra.mxu0 0.0
    %1003 = vmatprep.subr.mxu0 0.0
    %1004 = vmatpush1.msra.mxu0 0.0
    %1005 = vmatprep.subr.mxu0 0.0
    %1006 = vmatpush1.msra.mxu0 0.0
    %1007 = vmatprep.subr.mxu0 0.0
    %1008 = vmatpush1.msra.mxu0 0.0
    %1009 = vmatprep.subr.mxu0 0.0
    %1010 = vmatpush1.msra.mxu0 0.0
    %1011 = vmatprep.subr.mxu0 0.0
    %1012 = vmatpush1.msra.mxu0 0.0
    %1013 = vmatprep.subr.mxu0 0.0
    %1014 = vmatpush1.msra.mxu0 0.0
    %1015 = vmatprep.subr.mxu0 0.0
    %1016 = vmatpush1.msra.mxu0 0.0
    %1017 = vmatprep.subr.mxu0 0.0
    %1018 = vmatpush1.msra.mxu0 0.0
    %1019 = vmatprep.subr.mxu0 0.0
    %1020 = vmatpush1.msra.mxu0 0.0
    %1021 = vmatprep.subr.mxu0 0.0
    %1022 = vmatpush1.msra.mxu0 0.0
    %1023 = vmatprep.subr.mxu0 0.0
    %1024 = vmatpush1.msra.mxu0 0.0
    %1025 = vmatprep.subr.mxu0 0.0
    %1026 = vmatpush1.msra.mxu0 0.0
    %1027 = vmatprep.subr.mxu0 0.0
    %1028 = vmatpush1.msra.mxu0 0.0
    %1029 = vmatprep.subr.mxu0 0.0
    %1030 = vmatpush1.msra.mxu0 0.0
    %1031 = vmatprep.subr.mxu0 0.0
    %1032 = vmatpush1.msra.mxu0 0.0
    %1033 = vmatprep.subr.mxu0 0.0
    %1034 = vmatpush1.msra.mxu0 0.0
    %1035 = vmatprep.subr.mxu0 0.0
    %1036 = vmatpush1.msra.mxu0 0.0
    %1037 = vmatprep.subr.mxu0 0.0
    %1038 = vmatpush1.msra.mxu0 0.0
    %1039 = vmatprep.subr.mxu0 0.0
    %1040 = vmatpush1.msra.mxu0 0.0
    %1041 = vmatprep.subr.mxu0 0.0
    %1042 = vmatpush1.msra.mxu0 0.0
    %1043 = vmatprep.subr.mxu0 0.0
    %1044 = vmatpush1.msra.mxu0 0.0
    %1045 = vmatprep.subr.mxu0 0.0
    %1046 = vmatpush1.msra.mxu0 0.0
    %1047 = vmatprep.subr.mxu0 0.0
    %1048 = vmatpush1.msra.mxu0 0.0
    %1049 = vmatprep.subr.mxu0 0.0
    %1050 = vmatpush1.msra.mxu0 0.0
    %1051 = vmatprep.subr.mxu0 0.0
    %1052 = vmatpush1.msra.mxu0 0.0
    %1053 = vmatprep.subr.mxu0 0.0
    %1054 = vmatpush1.msra.mxu0 0.0
    %1055 = vmatprep.mubr.f32.mxu0 0.0
    %v1056 = vand.u32 %v575, 4294901760
    %1057 = vmatmul.mubr.f32.gmra.mrb[0].mxu0 %v1056
    %v1058 = vpop.f32.mrb[0].mxu0
    %v1059 = vadd.f32 %v984, %v1058
    %v1060 = vpop.f32.mrb[0].mxu0
    %1061 = vdwg.mxu0
    %v1062 = vtanh.pop %v1059
    %v1063 = vmul.f32 %v1062, %v554
    %v1064 = vsel %vm557, %v1063, 0.0
    %1065 = vadd.xlane.f32.xlu0 %v1064
    %v1066 = vpop.xlane.xlu0 %1065
    %vm1067 = vcmp.eq.s32.totalorder %v51, 1
    %v1068 = vsel %vm1067, 1, 0
    %vm1069 = vcmp.eq.s32.totalorder %v1068, 1
    %v1070 = vsel %vm1069, %v1066, 0.0
    %v1071 = vadd.f32 %v565, %v1070
    %v1072 = vld [vmem:[#allocation2] sm:$0x1]
    %v1073 = vunpack.c.l.bf16 %v1072
    %v1076 = vunpack.c.l.s4 1983009808
    %v1077 = vunpack.c.0.s8 %v1076
    %v1078 = vlaneseq
    %v1079 = vshrl.u32 %v1078, 7
    %v1080 = vsub.s32 %v1077, %v1079
    %v1081 = vrot.slane %v1073, %v1080
    %1082 = vrot.lane.b32.xlu0 %v1081, 64
    %v1083 = vpop.permute.xlu0 %1082
    %v1084 = vsel %vm60, %v1083, 0
    %1086 = vmatprep.subr.mxu0 0.0
    %v1087 = vand.u32 %v44, 4294901760
    %1088 = vmatpush1.msra.mxu0 %v1087
    %1089 = vmatprep.subr.mxu0 0.0
    %v1090 = vand.u32 %v45, 4294901760
    %1091 = vmatpush1.msra.mxu0 %v1090
    %1092 = vmatprep.subr.mxu0 0.0
    %v1093 = vand.u32 %v46, 4294901760
    %1094 = vmatpush1.msra.mxu0 %v1093
    %1095 = vmatprep.subr.mxu0 0.0
    %v1096 = vand.u32 %v47, 4294901760
    %1097 = vmatpush1.msra.mxu0 %v1096
    %1098 = vmatprep.subr.mxu0 0.0
    %1099 = vmatpush1.msra.mxu0 0.0
    %1100 = vmatprep.subr.mxu0 0.0
    %1101 = vmatpush1.msra.mxu0 0.0
    %1102 = vmatprep.subr.mxu0 0.0
    %1103 = vmatpush1.msra.mxu0 0.0
    %1104 = vmatprep.subr.mxu0 0.0
    %1105 = vmatpush1.msra.mxu0 0.0
    %1106 = vmatprep.subr.mxu0 0.0
    %1107 = vmatpush1.msra.mxu0 0.0
    %1108 = vmatprep.subr.mxu0 0.0
    %1109 = vmatpush1.msra.mxu0 0.0
    %1110 = vmatprep.subr.mxu0 0.0
    %1111 = vmatpush1.msra.mxu0 0.0
    %1112 = vmatprep.subr.mxu0 0.0
    %1113 = vmatpush1.msra.mxu0 0.0
    %1114 = vmatprep.subr.mxu0 0.0
    %1115 = vmatpush1.msra.mxu0 0.0
    %1116 = vmatprep.subr.mxu0 0.0
    %1117 = vmatpush1.msra.mxu0 0.0
    %1118 = vmatprep.subr.mxu0 0.0
    %1119 = vmatpush1.msra.mxu0 0.0
    %1120 = vmatprep.subr.mxu0 0.0
    %1121 = vmatpush1.msra.mxu0 0.0
    %1122 = vmatprep.subr.mxu0 0.0
    %1123 = vmatpush1.msra.mxu0 0.0
    %1124 = vmatprep.subr.mxu0 0.0
    %1125 = vmatpush1.msra.mxu0 0.0
    %1126 = vmatprep.subr.mxu0 0.0
    %1127 = vmatpush1.msra.mxu0 0.0
    %1128 = vmatprep.subr.mxu0 0.0
    %1129 = vmatpush1.msra.mxu0 0.0
    %1130 = vmatprep.subr.mxu0 0.0
    %1131 = vmatpush1.msra.mxu0 0.0
    %1132 = vmatprep.subr.mxu0 0.0
    %1133 = vmatpush1.msra.mxu0 0.0
    %1134 = vmatprep.subr.mxu0 0.0
    %1135 = vmatpush1.msra.mxu0 0.0
    %1136 = vmatprep.subr.mxu0 0.0
    %1137 = vmatpush1.msra.mxu0 0.0
    %1138 = vmatprep.subr.mxu0 0.0
    %1139 = vmatpush1.msra.mxu0 0.0
    %1140 = vmatprep.subr.mxu0 0.0
    %1141 = vmatpush1.msra.mxu0 0.0
    %1142 = vmatprep.subr.mxu0 0.0
    %1143 = vmatpush1.msra.mxu0 0.0
    %1144 = vmatprep.subr.mxu0 0.0
    %1145 = vmatpush1.msra.mxu0 0.0
    %1146 = vmatprep.subr.mxu0 0.0
    %1147 = vmatpush1.msra.mxu0 0.0
    %1148 = vmatprep.subr.mxu0 0.0
    %1149 = vmatpush1.msra.mxu0 0.0
    %1150 = vmatprep.subr.mxu0 0.0
    %1151 = vmatpush1.msra.mxu0 0.0
    %1152 = vmatprep.subr.mxu0 0.0
    %1153 = vmatpush1.msra.mxu0 0.0
    %1154 = vmatprep.mubr.f32.mxu0 0.0
    %v1155 = vand.u32 %v1084, 4294901760
    %v1156 = vsub.f32 %v1084, %v1155
    %v1157 = vand.u32 %v1156, 4294901760
    %v1158 = vsub.f32 %v1156, %v1157
    %v1159 = vand.u32 %v1158, 4294901760
    %1160 = vmatmul.mubr.f32.gmra.mrb[0].mxu0 %v1159
    %v1161 = vpop.f32.mrb[0].mxu0
    %v1162 = vadd.f32 %v58, %v1161
    %v1163 = vpop.f32.mrb[0].mxu0
    %1164 = vdwg.mxu0
    %1165 = vmatprep.subr.mxu0 0.0
    %v1166 = vand.u32 %v44, 4294901760
    %v1167 = vsub.f32 %v44, %v1166
    %v1168 = vand.u32 %v1167, 4294901760
    %v1169 = vsub.f32 %v1167, %v1168
    %v1170 = vand.u32 %v1169, 4294901760
    %1171 = vmatpush1.msra.mxu0 %v1170
    %1172 = vmatprep.subr.mxu0 0.0
    %v1173 = vand.u32 %v45, 4294901760
    %v1174 = vsub.f32 %v45, %v1173
    %v1175 = vand.u32 %v1174, 4294901760
    %v1176 = vsub.f32 %v1174, %v1175
    %v1177 = vand.u32 %v1176, 4294901760
    %1178 = vmatpush1.msra.mxu0 %v1177
    %1179 = vmatprep.subr.mxu0 0.0
    %v1180 = vand.u32 %v46, 4294901760
    %v1181 = vsub.f32 %v46, %v1180
    %v1182 = vand.u32 %v1181, 4294901760
    %v1183 = vsub.f32 %v1181, %v1182
    %v1184 = vand.u32 %v1183, 4294901760
    %1185 = vmatpush1.msra.mxu0 %v1184
    %1186 = vmatprep.subr.mxu0 0.0
    %v1187 = vand.u32 %v47, 4294901760
    %v1188 = vsub.f32 %v47, %v1187
    %v1189 = vand.u32 %v1188, 4294901760
    %v1190 = vsub.f32 %v1188, %v1189
    %v1191 = vand.u32 %v1190, 4294901760
    %1192 = vmatpush1.msra.mxu0 %v1191
    %1193 = vmatprep.subr.mxu0 0.0
    %1194 = vmatpush1.msra.mxu0 0.0
    %1195 = vmatprep.subr.mxu0 0.0
    %1196 = vmatpush1.msra.mxu0 0.0
    %1197 = vmatprep.subr.mxu0 0.0
    %1198 = vmatpush1.msra.mxu0 0.0
    %1199 = vmatprep.subr.mxu0 0.0
    %1200 = vmatpush1.msra.mxu0 0.0
    %1201 = vmatprep.subr.mxu0 0.0
    %1202 = vmatpush1.msra.mxu0 0.0
    %1203 = vmatprep.subr.mxu0 0.0
    %1204 = vmatpush1.msra.mxu0 0.0
    %1205 = vmatprep.subr.mxu0 0.0
    %1206 = vmatpush1.msra.mxu0 0.0
    %1207 = vmatprep.subr.mxu0 0.0
    %1208 = vmatpush1.msra.mxu0 0.0
    %1209 = vmatprep.subr.mxu0 0.0
    %1210 = vmatpush1.msra.mxu0 0.0
    %1211 = vmatprep.subr.mxu0 0.0
    %1212 = vmatpush1.msra.mxu0 0.0
    %1213 = vmatprep.subr.mxu0 0.0
    %1214 = vmatpush1.msra.mxu0 0.0
    %1215 = vmatprep.subr.mxu0 0.0
    %1216 = vmatpush1.msra.mxu0 0.0
    %1217 = vmatprep.subr.mxu0 0.0
    %1218 = vmatpush1.msra.mxu0 0.0
    %1219 = vmatprep.subr.mxu0 0.0
    %1220 = vmatpush1.msra.mxu0 0.0
    %1221 = vmatprep.subr.mxu0 0.0
    %1222 = vmatpush1.msra.mxu0 0.0
    %1223 = vmatprep.subr.mxu0 0.0
    %1224 = vmatpush1.msra.mxu0 0.0
    %1225 = vmatprep.subr.mxu0 0.0
    %1226 = vmatpush1.msra.mxu0 0.0
    %1227 = vmatprep.subr.mxu0 0.0
    %1228 = vmatpush1.msra.mxu0 0.0
    %1229 = vmatprep.subr.mxu0 0.0
    %1230 = vmatpush1.msra.mxu0 0.0
    %1231 = vmatprep.subr.mxu0 0.0
    %1232 = vmatpush1.msra.mxu0 0.0
    %1233 = vmatprep.subr.mxu0 0.0
    %1234 = vmatpush1.msra.mxu0 0.0
    %1235 = vmatprep.subr.mxu0 0.0
    %1236 = vmatpush1.msra.mxu0 0.0
    %1237 = vmatprep.subr.mxu0 0.0
    %1238 = vmatpush1.msra.mxu0 0.0
    %1239 = vmatprep.subr.mxu0 0.0
    %1240 = vmatpush1.msra.mxu0 0.0
    %1241 = vmatprep.subr.mxu0 0.0
    %1242 = vmatpush1.msra.mxu0 0.0
    %1243 = vmatprep.subr.mxu0 0.0
    %1244 = vmatpush1.msra.mxu0 0.0
    %1245 = vmatprep.subr.mxu0 0.0
    %1246 = vmatpush1.msra.mxu0 0.0
    %1247 = vmatprep.subr.mxu0 0.0
    %1248 = vmatpush1.msra.mxu0 0.0
    %1249 = vmatprep.mubr.f32.mxu0 0.0
    %v1250 = vand.u32 %v1084, 4294901760
    %1251 = vmatmul.mubr.f32.gmra.mrb[0].mxu0 %v1250
    %v1252 = vpop.f32.mrb[0].mxu0
    %v1253 = vadd.f32 %v1162, %v1252
    %v1254 = vpop.f32.mrb[0].mxu0
    %1255 = vdwg.mxu0
    %1256 = vmatprep.subr.mxu0 0.0
    %v1257 = vand.u32 %v44, 4294901760
    %v1258 = vsub.f32 %v44, %v1257
    %1259 = vmatpush1.msra.mxu0 %v1258
    %1260 = vmatprep.subr.mxu0 0.0
    %v1261 = vand.u32 %v45, 4294901760
    %v1262 = vsub.f32 %v45, %v1261
    %1263 = vmatpush1.msra.mxu0 %v1262
    %1264 = vmatprep.subr.mxu0 0.0
    %v1265 = vand.u32 %v46, 4294901760
    %v1266 = vsub.f32 %v46, %v1265
    %1267 = vmatpush1.msra.mxu0 %v1266
    %1268 = vmatprep.subr.mxu0 0.0
    %v1269 = vand.u32 %v47, 4294901760
    %v1270 = vsub.f32 %v47, %v1269
    %1271 = vmatpush1.msra.mxu0 %v1270
    %1272 = vmatprep.subr.mxu0 0.0
    %1273 = vmatpush1.msra.mxu0 0.0
    %1274 = vmatprep.subr.mxu0 0.0
    %1275 = vmatpush1.msra.mxu0 0.0
    %1276 = vmatprep.subr.mxu0 0.0
    %1277 = vmatpush1.msra.mxu0 0.0
    %1278 = vmatprep.subr.mxu0 0.0
    %1279 = vmatpush1.msra.mxu0 0.0
    %1280 = vmatprep.subr.mxu0 0.0
    %1281 = vmatpush1.msra.mxu0 0.0
    %1282 = vmatprep.subr.mxu0 0.0
    %1283 = vmatpush1.msra.mxu0 0.0
    %1284 = vmatprep.subr.mxu0 0.0
    %1285 = vmatpush1.msra.mxu0 0.0
    %1286 = vmatprep.subr.mxu0 0.0
    %1287 = vmatpush1.msra.mxu0 0.0
    %1288 = vmatprep.subr.mxu0 0.0
    %1289 = vmatpush1.msra.mxu0 0.0
    %1290 = vmatprep.subr.mxu0 0.0
    %1291 = vmatpush1.msra.mxu0 0.0
    %1292 = vmatprep.subr.mxu0 0.0
    %1293 = vmatpush1.msra.mxu0 0.0
    %1294 = vmatprep.subr.mxu0 0.0
    %1295 = vmatpush1.msra.mxu0 0.0
    %1296 = vmatprep.subr.mxu0 0.0
    %1297 = vmatpush1.msra.mxu0 0.0
    %1298 = vmatprep.subr.mxu0 0.0
    %1299 = vmatpush1.msra.mxu0 0.0
    %1300 = vmatprep.subr.mxu0 0.0
    %1301 = vmatpush1.msra.mxu0 0.0
    %1302 = vmatprep.subr.mxu0 0.0
    %1303 = vmatpush1.msra.mxu0 0.0
    %1304 = vmatprep.subr.mxu0 0.0
    %1305 = vmatpush1.msra.mxu0 0.0
    %1306 = vmatprep.subr.mxu0 0.0
    %1307 = vmatpush1.msra.mxu0 0.0
    %1308 = vmatprep.subr.mxu0 0.0
    %1309 = vmatpush1.msra.mxu0 0.0
    %1310 = vmatprep.subr.mxu0 0.0
    %1311 = vmatpush1.msra.mxu0 0.0
    %1312 = vmatprep.subr.mxu0 0.0
    %1313 = vmatpush1.msra.mxu0 0.0
    %1314 = vmatprep.subr.mxu0 0.0
    %1315 = vmatpush1.msra.mxu0 0.0
    %1316 = vmatprep.subr.mxu0 0.0
    %1317 = vmatpush1.msra.mxu0 0.0
    %1318 = vmatprep.subr.mxu0 0.0
    %1319 = vmatpush1.msra.mxu0 0.0
    %1320 = vmatprep.subr.mxu0 0.0
    %1321 = vmatpush1.msra.mxu0 0.0
    %1322 = vmatprep.subr.mxu0 0.0
    %1323 = vmatpush1.msra.mxu0 0.0
    %1324 = vmatprep.subr.mxu0 0.0
    %1325 = vmatpush1.msra.mxu0 0.0
    %1326 = vmatprep.subr.mxu0 0.0
    %1327 = vmatpush1.msra.mxu0 0.0
    %1328 = vmatprep.mubr.f32.mxu0 0.0
    %v1329 = vand.u32 %v1084, 4294901760
    %v1330 = vsub.f32 %v1084, %v1329
    %1331 = vmatmul.mubr.f32.gmra.mrb[0].mxu0 %v1330
    %v1332 = vpop.f32.mrb[0].mxu0
    %v1333 = vadd.f32 %v1253, %v1332
    %v1334 = vpop.f32.mrb[0].mxu0
    %1335 = vdwg.mxu0
    %1336 = vmatprep.subr.mxu0 0.0
    %v1337 = vand.u32 %v44, 4294901760
    %1338 = vmatpush1.msra.mxu0 %v1337
    %1339 = vmatprep.subr.mxu0 0.0
    %v1340 = vand.u32 %v45, 4294901760
    %1341 = vmatpush1.msra.mxu0 %v1340
    %1342 = vmatprep.subr.mxu0 0.0
    %v1343 = vand.u32 %v46, 4294901760
    %1344 = vmatpush1.msra.mxu0 %v1343
    %1345 = vmatprep.subr.mxu0 0.0
    %v1346 = vand.u32 %v47, 4294901760
    %1347 = vmatpush1.msra.mxu0 %v1346
    %1348 = vmatprep.subr.mxu0 0.0
    %1349 = vmatpush1.msra.mxu0 0.0
    %1350 = vmatprep.subr.mxu0 0.0
    %1351 = vmatpush1.msra.mxu0 0.0
    %1352 = vmatprep.subr.mxu0 0.0
    %1353 = vmatpush1.msra.mxu0 0.0
    %1354 = vmatprep.subr.mxu0 0.0
    %1355 = vmatpush1.msra.mxu0 0.0
    %1356 = vmatprep.subr.mxu0 0.0
    %1357 = vmatpush1.msra.mxu0 0.0
    %1358 = vmatprep.subr.mxu0 0.0
    %1359 = vmatpush1.msra.mxu0 0.0
    %1360 = vmatprep.subr.mxu0 0.0
    %1361 = vmatpush1.msra.mxu0 0.0
    %1362 = vmatprep.subr.mxu0 0.0
    %1363 = vmatpush1.msra.mxu0 0.0
    %1364 = vmatprep.subr.mxu0 0.0
    %1365 = vmatpush1.msra.mxu0 0.0
    %1366 = vmatprep.subr.mxu0 0.0
    %1367 = vmatpush1.msra.mxu0 0.0
    %1368 = vmatprep.subr.mxu0 0.0
    %1369 = vmatpush1.msra.mxu0 0.0
    %1370 = vmatprep.subr.mxu0 0.0
    %1371 = vmatpush1.msra.mxu0 0.0
    %1372 = vmatprep.subr.mxu0 0.0
    %1373 = vmatpush1.msra.mxu0 0.0
    %1374 = vmatprep.subr.mxu0 0.0
    %1375 = vmatpush1.msra.mxu0 0.0
    %1376 = vmatprep.subr.mxu0 0.0
    %1377 = vmatpush1.msra.mxu0 0.0
    %1378 = vmatprep.subr.mxu0 0.0
    %1379 = vmatpush1.msra.mxu0 0.0
    %1380 = vmatprep.subr.mxu0 0.0
    %1381 = vmatpush1.msra.mxu0 0.0
    %1382 = vmatprep.subr.mxu0 0.0
    %1383 = vmatpush1.msra.mxu0 0.0
    %1384 = vmatprep.subr.mxu0 0.0
    %1385 = vmatpush1.msra.mxu0 0.0
    %1386 = vmatprep.subr.mxu0 0.0
    %1387 = vmatpush1.msra.mxu0 0.0
    %1388 = vmatprep.subr.mxu0 0.0
    %1389 = vmatpush1.msra.mxu0 0.0
    %1390 = vmatprep.subr.mxu0 0.0
    %1391 = vmatpush1.msra.mxu0 0.0
    %1392 = vmatprep.subr.mxu0 0.0
    %1393 = vmatpush1.msra.mxu0 0.0
    %1394 = vmatprep.subr.mxu0 0.0
    %1395 = vmatpush1.msra.mxu0 0.0
    %1396 = vmatprep.subr.mxu0 0.0
    %1397 = vmatpush1.msra.mxu0 0.0
    %1398 = vmatprep.subr.mxu0 0.0
    %1399 = vmatpush1.msra.mxu0 0.0
    %1400 = vmatprep.subr.mxu0 0.0
    %1401 = vmatpush1.msra.mxu0 0.0
    %1402 = vmatprep.subr.mxu0 0.0
    %1403 = vmatpush1.msra.mxu0 0.0
    %1404 = vmatprep.mubr.f32.mxu0 0.0
    %v1405 = vand.u32 %v1084, 4294901760
    %v1406 = vsub.f32 %v1084, %v1405
    %v1407 = vand.u32 %v1406, 4294901760
    %1408 = vmatmul.mubr.f32.gmra.mrb[0].mxu0 %v1407
    %v1409 = vpop.f32.mrb[0].mxu0
    %v1410 = vadd.f32 %v1333, %v1409
    %v1411 = vpop.f32.mrb[0].mxu0
    %1412 = vdwg.mxu0
    %1413 = vmatprep.subr.mxu0 0.0
    %v1414 = vand.u32 %v44, 4294901760
    %v1415 = vsub.f32 %v44, %v1414
    %v1416 = vand.u32 %v1415, 4294901760
    %1417 = vmatpush1.msra.mxu0 %v1416
    %1418 = vmatprep.subr.mxu0 0.0
    %v1419 = vand.u32 %v45, 4294901760
    %v1420 = vsub.f32 %v45, %v1419
    %v1421 = vand.u32 %v1420, 4294901760
    %1422 = vmatpush1.msra.mxu0 %v1421
    %1423 = vmatprep.subr.mxu0 0.0
    %v1424 = vand.u32 %v46, 4294901760
    %v1425 = vsub.f32 %v46, %v1424
    %v1426 = vand.u32 %v1425, 4294901760
    %1427 = vmatpush1.msra.mxu0 %v1426
    %1428 = vmatprep.subr.mxu0 0.0
    %v1429 = vand.u32 %v47, 4294901760
    %v1430 = vsub.f32 %v47, %v1429
    %v1431 = vand.u32 %v1430, 4294901760
    %1432 = vmatpush1.msra.mxu0 %v1431
    %1433 = vmatprep.subr.mxu0 0.0
    %1434 = vmatpush1.msra.mxu0 0.0
    %1435 = vmatprep.subr.mxu0 0.0
    %1436 = vmatpush1.msra.mxu0 0.0
    %1437 = vmatprep.subr.mxu0 0.0
    %1438 = vmatpush1.msra.mxu0 0.0
    %1439 = vmatprep.subr.mxu0 0.0
    %1440 = vmatpush1.msra.mxu0 0.0
    %1441 = vmatprep.subr.mxu0 0.0
    %1442 = vmatpush1.msra.mxu0 0.0
    %1443 = vmatprep.subr.mxu0 0.0
    %1444 = vmatpush1.msra.mxu0 0.0
    %1445 = vmatprep.subr.mxu0 0.0
    %1446 = vmatpush1.msra.mxu0 0.0
    %1447 = vmatprep.subr.mxu0 0.0
    %1448 = vmatpush1.msra.mxu0 0.0
    %1449 = vmatprep.subr.mxu0 0.0
    %1450 = vmatpush1.msra.mxu0 0.0
    %1451 = vmatprep.subr.mxu0 0.0
    %1452 = vmatpush1.msra.mxu0 0.0
    %1453 = vmatprep.subr.mxu0 0.0
    %1454 = vmatpush1.msra.mxu0 0.0
    %1455 = vmatprep.subr.mxu0 0.0
    %1456 = vmatpush1.msra.mxu0 0.0
    %1457 = vmatprep.subr.mxu0 0.0
    %1458 = vmatpush1.msra.mxu0 0.0
    %1459 = vmatprep.subr.mxu0 0.0
    %1460 = vmatpush1.msra.mxu0 0.0
    %1461 = vmatprep.subr.mxu0 0.0
    %1462 = vmatpush1.msra.mxu0 0.0
    %1463 = vmatprep.subr.mxu0 0.0
    %1464 = vmatpush1.msra.mxu0 0.0
    %1465 = vmatprep.subr.mxu0 0.0
    %1466 = vmatpush1.msra.mxu0 0.0
    %1467 = vmatprep.subr.mxu0 0.0
    %1468 = vmatpush1.msra.mxu0 0.0
    %1469 = vmatprep.subr.mxu0 0.0
    %1470 = vmatpush1.msra.mxu0 0.0
    %1471 = vmatprep.subr.mxu0 0.0
    %1472 = vmatpush1.msra.mxu0 0.0
    %1473 = vmatprep.subr.mxu0 0.0
    %1474 = vmatpush1.msra.mxu0 0.0
    %1475 = vmatprep.subr.mxu0 0.0
    %1476 = vmatpush1.msra.mxu0 0.0
    %1477 = vmatprep.subr.mxu0 0.0
    %1478 = vmatpush1.msra.mxu0 0.0
    %1479 = vmatprep.subr.mxu0 0.0
    %1480 = vmatpush1.msra.mxu0 0.0
    %1481 = vmatprep.subr.mxu0 0.0
    %1482 = vmatpush1.msra.mxu0 0.0
    %1483 = vmatprep.subr.mxu0 0.0
    %1484 = vmatpush1.msra.mxu0 0.0
    %1485 = vmatprep.subr.mxu0 0.0
    %1486 = vmatpush1.msra.mxu0 0.0
    %1487 = vmatprep.subr.mxu0 0.0
    %1488 = vmatpush1.msra.mxu0 0.0
    %1489 = vmatprep.mubr.f32.mxu0 0.0
    %v1490 = vand.u32 %v1084, 4294901760
    %1491 = vmatmul.mubr.f32.gmra.mrb[0].mxu0 %v1490
    %v1492 = vpop.f32.mrb[0].mxu0
    %v1493 = vadd.f32 %v1410, %v1492
    %v1494 = vpop.f32.mrb[0].mxu0
    %1495 = vdwg.mxu0
    %1496 = vmatprep.subr.mxu0 0.0
    %v1497 = vand.u32 %v44, 4294901760
    %1498 = vmatpush1.msra.mxu0 %v1497
    %1499 = vmatprep.subr.mxu0 0.0
    %v1500 = vand.u32 %v45, 4294901760
    %1501 = vmatpush1.msra.mxu0 %v1500
    %1502 = vmatprep.subr.mxu0 0.0
    %v1503 = vand.u32 %v46, 4294901760
    %1504 = vmatpush1.msra.mxu0 %v1503
    %1505 = vmatprep.subr.mxu0 0.0
    %v1506 = vand.u32 %v47, 4294901760
    %1507 = vmatpush1.msra.mxu0 %v1506
    %1508 = vmatprep.subr.mxu0 0.0
    %1509 = vmatpush1.msra.mxu0 0.0
    %1510 = vmatprep.subr.mxu0 0.0
    %1511 = vmatpush1.msra.mxu0 0.0
    %1512 = vmatprep.subr.mxu0 0.0
    %1513 = vmatpush1.msra.mxu0 0.0
    %1514 = vmatprep.subr.mxu0 0.0
    %1515 = vmatpush1.msra.mxu0 0.0
    %1516 = vmatprep.subr.mxu0 0.0
    %1517 = vmatpush1.msra.mxu0 0.0
    %1518 = vmatprep.subr.mxu0 0.0
    %1519 = vmatpush1.msra.mxu0 0.0
    %1520 = vmatprep.subr.mxu0 0.0
    %1521 = vmatpush1.msra.mxu0 0.0
    %1522 = vmatprep.subr.mxu0 0.0
    %1523 = vmatpush1.msra.mxu0 0.0
    %1524 = vmatprep.subr.mxu0 0.0
    %1525 = vmatpush1.msra.mxu0 0.0
    %1526 = vmatprep.subr.mxu0 0.0
    %1527 = vmatpush1.msra.mxu0 0.0
    %1528 = vmatprep.subr.mxu0 0.0
    %1529 = vmatpush1.msra.mxu0 0.0
    %1530 = vmatprep.subr.mxu0 0.0
    %1531 = vmatpush1.msra.mxu0 0.0
    %1532 = vmatprep.subr.mxu0 0.0
    %1533 = vmatpush1.msra.mxu0 0.0
    %1534 = vmatprep.subr.mxu0 0.0
    %1535 = vmatpush1.msra.mxu0 0.0
    %1536 = vmatprep.subr.mxu0 0.0
    %1537 = vmatpush1.msra.mxu0 0.0
    %1538 = vmatprep.subr.mxu0 0.0
    %1539 = vmatpush1.msra.mxu0 0.0
    %1540 = vmatprep.subr.mxu0 0.0
    %1541 = vmatpush1.msra.mxu0 0.0
    %1542 = vmatprep.subr.mxu0 0.0
    %1543 = vmatpush1.msra.mxu0 0.0
    %1544 = vmatprep.subr.mxu0 0.0
    %1545 = vmatpush1.msra.mxu0 0.0
    %1546 = vmatprep.subr.mxu0 0.0
    %1547 = vmatpush1.msra.mxu0 0.0
    %1548 = vmatprep.subr.mxu0 0.0
    %1549 = vmatpush1.msra.mxu0 0.0
    %1550 = vmatprep.subr.mxu0 0.0
    %1551 = vmatpush1.msra.mxu0 0.0
    %1552 = vmatprep.subr.mxu0 0.0
    %1553 = vmatpush1.msra.mxu0 0.0
    %1554 = vmatprep.subr.mxu0 0.0
    %1555 = vmatpush1.msra.mxu0 0.0
    %1556 = vmatprep.subr.mxu0 0.0
    %1557 = vmatpush1.msra.mxu0 0.0
    %1558 = vmatprep.subr.mxu0 0.0
    %1559 = vmatpush1.msra.mxu0 0.0
    %1560 = vmatprep.subr.mxu0 0.0
    %1561 = vmatpush1.msra.mxu0 0.0
    %1562 = vmatprep.subr.mxu0 0.0
    %1563 = vmatpush1.msra.mxu0 0.0
    %1564 = vmatprep.mubr.f32.mxu0 0.0
    %v1565 = vand.u32 %v1084, 4294901760
    %1566 = vmatmul.mubr.f32.gmra.mrb[0].mxu0 %v1565
    %v1567 = vpop.f32.mrb[0].mxu0
    %v1568 = vadd.f32 %v1493, %v1567
    %v1569 = vpop.f32.mrb[0].mxu0
    %1570 = vdwg.mxu0
    %v1571 = vtanh.pop %v1568
    %v1572 = vmul.f32 %v1571, %v554
    %v1573 = vsel %vm557, %v1572, 0.0
    %1574 = vadd.xlane.f32.xlu0 %v1573
    %v1575 = vpop.xlane.xlu0 %1574
    %vm1576 = vcmp.eq.s32.totalorder %v51, 2
    %v1577 = vsel %vm1576, 1, 0
    %vm1578 = vcmp.eq.s32.totalorder %v1577, 1
    %v1579 = vsel %vm1578, %v1575, 0.0
    %v1580 = vadd.f32 %v1071, %v1579
    %v1581 = vld [vmem:[#allocation2] sm:$0x1]
    %v1582 = vunpack.c.l.bf16 %v1581
    %v1585 = vunpack.c.l.s4 1983009808
    %v1586 = vunpack.c.0.s8 %v1585
    %v1587 = vlaneseq
    %v1588 = vshrl.u32 %v1587, 7
    %v1589 = vsub.s32 %v1586, %v1588
    %v1590 = vrot.slane %v1582, %v1589
    %1591 = vrot.lane.b32.xlu0 %v1590, 32
    %v1592 = vpop.permute.xlu0 %1591
    %v1593 = vsel %vm60, %v1592, 0
    %1595 = vmatprep.subr.mxu0 0.0
    %v1596 = vand.u32 %v44, 4294901760
    %1597 = vmatpush1.msra.mxu0 %v1596
    %1598 = vmatprep.subr.mxu0 0.0
    %v1599 = vand.u32 %v45, 4294901760
    %1600 = vmatpush1.msra.mxu0 %v1599
    %1601 = vmatprep.subr.mxu0 0.0
    %v1602 = vand.u32 %v46, 4294901760
    %1603 = vmatpush1.msra.mxu0 %v1602
    %1604 = vmatprep.subr.mxu0 0.0
    %v1605 = vand.u32 %v47, 4294901760
    %1606 = vmatpush1.msra.mxu0 %v1605
    %1607 = vmatprep.subr.mxu0 0.0
    %1608 = vmatpush1.msra.mxu0 0.0
    %1609 = vmatprep.subr.mxu0 0.0
    %1610 = vmatpush1.msra.mxu0 0.0
    %1611 = vmatprep.subr.mxu0 0.0
    %1612 = vmatpush1.msra.mxu0 0.0
    %1613 = vmatprep.subr.mxu0 0.0
    %1614 = vmatpush1.msra.mxu0 0.0
    %1615 = vmatprep.subr.mxu0 0.0
    %1616 = vmatpush1.msra.mxu0 0.0
    %1617 = vmatprep.subr.mxu0 0.0
    %1618 = vmatpush1.msra.mxu0 0.0
    %1619 = vmatprep.subr.mxu0 0.0
    %1620 = vmatpush1.msra.mxu0 0.0
    %1621 = vmatprep.subr.mxu0 0.0
    %1622 = vmatpush1.msra.mxu0 0.0
    %1623 = vmatprep.subr.mxu0 0.0
    %1624 = vmatpush1.msra.mxu0 0.0
    %1625 = vmatprep.subr.mxu0 0.0
    %1626 = vmatpush1.msra.mxu0 0.0
    %1627 = vmatprep.subr.mxu0 0.0
    %1628 = vmatpush1.msra.mxu0 0.0
    %1629 = vmatprep.subr.mxu0 0.0
    %1630 = vmatpush1.msra.mxu0 0.0
    %1631 = vmatprep.subr.mxu0 0.0
    %1632 = vmatpush1.msra.mxu0 0.0
    %1633 = vmatprep.subr.mxu0 0.0
    %1634 = vmatpush1.msra.mxu0 0.0
    %1635 = vmatprep.subr.mxu0 0.0
    %1636 = vmatpush1.msra.mxu0 0.0
    %1637 = vmatprep.subr.mxu0 0.0
    %1638 = vmatpush1.msra.mxu0 0.0
    %1639 = vmatprep.subr.mxu0 0.0
    %1640 = vmatpush1.msra.mxu0 0.0
    %1641 = vmatprep.subr.mxu0 0.0
    %1642 = vmatpush1.msra.mxu0 0.0
    %1643 = vmatprep.subr.mxu0 0.0
    %1644 = vmatpush1.msra.mxu0 0.0
    %1645 = vmatprep.subr.mxu0 0.0
    %1646 = vmatpush1.msra.mxu0 0.0
    %1647 = vmatprep.subr.mxu0 0.0
    %1648 = vmatpush1.msra.mxu0 0.0
    %1649 = vmatprep.subr.mxu0 0.0
    %1650 = vmatpush1.msra.mxu0 0.0
    %1651 = vmatprep.subr.mxu0 0.0
    %1652 = vmatpush1.msra.mxu0 0.0
    %1653 = vmatprep.subr.mxu0 0.0
    %1654 = vmatpush1.msra.mxu0 0.0
    %1655 = vmatprep.subr.mxu0 0.0
    %1656 = vmatpush1.msra.mxu0 0.0
    %1657 = vmatprep.subr.mxu0 0.0
    %1658 = vmatpush1.msra.mxu0 0.0
    %1659 = vmatprep.subr.mxu0 0.0
    %1660 = vmatpush1.msra.mxu0 0.0
    %1661 = vmatprep.subr.mxu0 0.0
    %1662 = vmatpush1.msra.mxu0 0.0
    %1663 = vmatprep.mubr.f32.mxu0 0.0
    %v1664 = vand.u32 %v1593, 4294901760
    %v1665 = vsub.f32 %v1593, %v1664
    %v1666 = vand.u32 %v1665, 4294901760
    %v1667 = vsub.f32 %v1665, %v1666
    %v1668 = vand.u32 %v1667, 4294901760
    %1669 = vmatmul.mubr.f32.gmra.mrb[0].mxu0 %v1668
    %v1670 = vpop.f32.mrb[0].mxu0
    %v1671 = vadd.f32 %v58, %v1670
    %v1672 = vpop.f32.mrb[0].mxu0
    %1673 = vdwg.mxu0
    %1674 = vmatprep.subr.mxu0 0.0
    %v1675 = vand.u32 %v44, 4294901760
    %v1676 = vsub.f32 %v44, %v1675
    %v1677 = vand.u32 %v1676, 4294901760
    %v1678 = vsub.f32 %v1676, %v1677
    %v1679 = vand.u32 %v1678, 4294901760
    %1680 = vmatpush1.msra.mxu0 %v1679
    %1681 = vmatprep.subr.mxu0 0.0
    %v1682 = vand.u32 %v45, 4294901760
    %v1683 = vsub.f32 %v45, %v1682
    %v1684 = vand.u32 %v1683, 4294901760
    %v1685 = vsub.f32 %v1683, %v1684
    %v1686 = vand.u32 %v1685, 4294901760
    %1687 = vmatpush1.msra.mxu0 %v1686
    %1688 = vmatprep.subr.mxu0 0.0
    %v1689 = vand.u32 %v46, 4294901760
    %v1690 = vsub.f32 %v46, %v1689
    %v1691 = vand.u32 %v1690, 4294901760
    %v1692 = vsub.f32 %v1690, %v1691
    %v1693 = vand.u32 %v1692, 4294901760
    %1694 = vmatpush1.msra.mxu0 %v1693
    %1695 = vmatprep.subr.mxu0 0.0
    %v1696 = vand.u32 %v47, 4294901760
    %v1697 = vsub.f32 %v47, %v1696
    %v1698 = vand.u32 %v1697, 4294901760
    %v1699 = vsub.f32 %v1697, %v1698
    %v1700 = vand.u32 %v1699, 4294901760
    %1701 = vmatpush1.msra.mxu0 %v1700
    %1702 = vmatprep.subr.mxu0 0.0
    %1703 = vmatpush1.msra.mxu0 0.0
    %1704 = vmatprep.subr.mxu0 0.0
    %1705 = vmatpush1.msra.mxu0 0.0
    %1706 = vmatprep.subr.mxu0 0.0
    %1707 = vmatpush1.msra.mxu0 0.0
    %1708 = vmatprep.subr.mxu0 0.0
    %1709 = vmatpush1.msra.mxu0 0.0
    %1710 = vmatprep.subr.mxu0 0.0
    %1711 = vmatpush1.msra.mxu0 0.0
    %1712 = vmatprep.subr.mxu0 0.0
    %1713 = vmatpush1.msra.mxu0 0.0
    %1714 = vmatprep.subr.mxu0 0.0
    %1715 = vmatpush1.msra.mxu0 0.0
    %1716 = vmatprep.subr.mxu0 0.0
    %1717 = vmatpush1.msra.mxu0 0.0
    %1718 = vmatprep.subr.mxu0 0.0
    %1719 = vmatpush1.msra.mxu0 0.0
    %1720 = vmatprep.subr.mxu0 0.0
    %1721 = vmatpush1.msra.mxu0 0.0
    %1722 = vmatprep.subr.mxu0 0.0
    %1723 = vmatpush1.msra.mxu0 0.0
    %1724 = vmatprep.subr.mxu0 0.0
    %1725 = vmatpush1.msra.mxu0 0.0
    %1726 = vmatprep.subr.mxu0 0.0
    %1727 = vmatpush1.msra.mxu0 0.0
    %1728 = vmatprep.subr.mxu0 0.0
    %1729 = vmatpush1.msra.mxu0 0.0
    %1730 = vmatprep.subr.mxu0 0.0
    %1731 = vmatpush1.msra.mxu0 0.0
    %1732 = vmatprep.subr.mxu0 0.0
    %1733 = vmatpush1.msra.mxu0 0.0
    %1734 = vmatprep.subr.mxu0 0.0
    %1735 = vmatpush1.msra.mxu0 0.0
    %1736 = vmatprep.subr.mxu0 0.0
    %1737 = vmatpush1.msra.mxu0 0.0
    %1738 = vmatprep.subr.mxu0 0.0
    %1739 = vmatpush1.msra.mxu0 0.0
    %1740 = vmatprep.subr.mxu0 0.0
    %1741 = vmatpush1.msra.mxu0 0.0
    %1742 = vmatprep.subr.mxu0 0.0
    %1743 = vmatpush1.msra.mxu0 0.0
    %1744 = vmatprep.subr.mxu0 0.0
    %1745 = vmatpush1.msra.mxu0 0.0
    %1746 = vmatprep.subr.mxu0 0.0
    %1747 = vmatpush1.msra.mxu0 0.0
    %1748 = vmatprep.subr.mxu0 0.0
    %1749 = vmatpush1.msra.mxu0 0.0
    %1750 = vmatprep.subr.mxu0 0.0
    %1751 = vmatpush1.msra.mxu0 0.0
    %1752 = vmatprep.subr.mxu0 0.0
    %1753 = vmatpush1.msra.mxu0 0.0
    %1754 = vmatprep.subr.mxu0 0.0
    %1755 = vmatpush1.msra.mxu0 0.0
    %1756 = vmatprep.subr.mxu0 0.0
    %1757 = vmatpush1.msra.mxu0 0.0
    %1758 = vmatprep.mubr.f32.mxu0 0.0
    %v1759 = vand.u32 %v1593, 4294901760
    %1760 = vmatmul.mubr.f32.gmra.mrb[0].mxu0 %v1759
    %v1761 = vpop.f32.mrb[0].mxu0
    %v1762 = vadd.f32 %v1671, %v1761
    %v1763 = vpop.f32.mrb[0].mxu0
    %1764 = vdwg.mxu0
    %1765 = vmatprep.subr.mxu0 0.0
    %v1766 = vand.u32 %v44, 4294901760
    %v1767 = vsub.f32 %v44, %v1766
    %1768 = vmatpush1.msra.mxu0 %v1767
    %1769 = vmatprep.subr.mxu0 0.0
    %v1770 = vand.u32 %v45, 4294901760
    %v1771 = vsub.f32 %v45, %v1770
    %1772 = vmatpush1.msra.mxu0 %v1771
    %1773 = vmatprep.subr.mxu0 0.0
    %v1774 = vand.u32 %v46, 4294901760
    %v1775 = vsub.f32 %v46, %v1774
    %1776 = vmatpush1.msra.mxu0 %v1775
    %1777 = vmatprep.subr.mxu0 0.0
    %v1778 = vand.u32 %v47, 4294901760
    %v1779 = vsub.f32 %v47, %v1778
    %1780 = vmatpush1.msra.mxu0 %v1779
    %1781 = vmatprep.subr.mxu0 0.0
    %1782 = vmatpush1.msra.mxu0 0.0
    %1783 = vmatprep.subr.mxu0 0.0
    %1784 = vmatpush1.msra.mxu0 0.0
    %1785 = vmatprep.subr.mxu0 0.0
    %1786 = vmatpush1.msra.mxu0 0.0
    %1787 = vmatprep.subr.mxu0 0.0
    %1788 = vmatpush1.msra.mxu0 0.0
    %1789 = vmatprep.subr.mxu0 0.0
    %1790 = vmatpush1.msra.mxu0 0.0
    %1791 = vmatprep.subr.mxu0 0.0
    %1792 = vmatpush1.msra.mxu0 0.0
    %1793 = vmatprep.subr.mxu0 0.0
    %1794 = vmatpush1.msra.mxu0 0.0
    %1795 = vmatprep.subr.mxu0 0.0
    %1796 = vmatpush1.msra.mxu0 0.0
    %1797 = vmatprep.subr.mxu0 0.0
    %1798 = vmatpush1.msra.mxu0 0.0
    %1799 = vmatprep.subr.mxu0 0.0
    %1800 = vmatpush1.msra.mxu0 0.0
    %1801 = vmatprep.subr.mxu0 0.0
    %1802 = vmatpush1.msra.mxu0 0.0
    %1803 = vmatprep.subr.mxu0 0.0
    %1804 = vmatpush1.msra.mxu0 0.0
    %1805 = vmatprep.subr.mxu0 0.0
    %1806 = vmatpush1.msra.mxu0 0.0
    %1807 = vmatprep.subr.mxu0 0.0
    %1808 = vmatpush1.msra.mxu0 0.0
    %1809 = vmatprep.subr.mxu0 0.0
    %1810 = vmatpush1.msra.mxu0 0.0
    %1811 = vmatprep.subr.mxu0 0.0
    %1812 = vmatpush1.msra.mxu0 0.0
    %1813 = vmatprep.subr.mxu0 0.0
    %1814 = vmatpush1.msra.mxu0 0.0
    %1815 = vmatprep.subr.mxu0 0.0
    %1816 = vmatpush1.msra.mxu0 0.0
    %1817 = vmatprep.subr.mxu0 0.0
    %1818 = vmatpush1.msra.mxu0 0.0
    %1819 = vmatprep.subr.mxu0 0.0
    %1820 = vmatpush1.msra.mxu0 0.0
    %1821 = vmatprep.subr.mxu0 0.0
    %1822 = vmatpush1.msra.mxu0 0.0
    %1823 = vmatprep.subr.mxu0 0.0
    %1824 = vmatpush1.msra.mxu0 0.0
    %1825 = vmatprep.subr.mxu0 0.0
    %1826 = vmatpush1.msra.mxu0 0.0
    %1827 = vmatprep.subr.mxu0 0.0
    %1828 = vmatpush1.msra.mxu0 0.0
    %1829 = vmatprep.subr.mxu0 0.0
    %1830 = vmatpush1.msra.mxu0 0.0
    %1831 = vmatprep.subr.mxu0 0.0
    %1832 = vmatpush1.msra.mxu0 0.0
    %1833 = vmatprep.subr.mxu0 0.0
    %1834 = vmatpush1.msra.mxu0 0.0
    %1835 = vmatprep.subr.mxu0 0.0
    %1836 = vmatpush1.msra.mxu0 0.0
    %1837 = vmatprep.mubr.f32.mxu0 0.0
    %v1838 = vand.u32 %v1593, 4294901760
    %v1839 = vsub.f32 %v1593, %v1838
    %1840 = vmatmul.mubr.f32.gmra.mrb[0].mxu0 %v1839
    %v1841 = vpop.f32.mrb[0].mxu0
    %v1842 = vadd.f32 %v1762, %v1841
    %v1843 = vpop.f32.mrb[0].mxu0
    %1844 = vdwg.mxu0
    %1845 = vmatprep.subr.mxu0 0.0
    %v1846 = vand.u32 %v44, 4294901760
    %1847 = vmatpush1.msra.mxu0 %v1846
    %1848 = vmatprep.subr.mxu0 0.0
    %v1849 = vand.u32 %v45, 4294901760
    %1850 = vmatpush1.msra.mxu0 %v1849
    %1851 = vmatprep.subr.mxu0 0.0
    %v1852 = vand.u32 %v46, 4294901760
    %1853 = vmatpush1.msra.mxu0 %v1852
    %1854 = vmatprep.subr.mxu0 0.0
    %v1855 = vand.u32 %v47, 4294901760
    %1856 = vmatpush1.msra.mxu0 %v1855
    %1857 = vmatprep.subr.mxu0 0.0
    %1858 = vmatpush1.msra.mxu0 0.0
    %1859 = vmatprep.subr.mxu0 0.0
    %1860 = vmatpush1.msra.mxu0 0.0
    %1861 = vmatprep.subr.mxu0 0.0
    %1862 = vmatpush1.msra.mxu0 0.0
    %1863 = vmatprep.subr.mxu0 0.0
    %1864 = vmatpush1.msra.mxu0 0.0
    %1865 = vmatprep.subr.mxu0 0.0
    %1866 = vmatpush1.msra.mxu0 0.0
    %1867 = vmatprep.subr.mxu0 0.0
    %1868 = vmatpush1.msra.mxu0 0.0
    %1869 = vmatprep.subr.mxu0 0.0
    %1870 = vmatpush1.msra.mxu0 0.0
    %1871 = vmatprep.subr.mxu0 0.0
    %1872 = vmatpush1.msra.mxu0 0.0
    %1873 = vmatprep.subr.mxu0 0.0
    %1874 = vmatpush1.msra.mxu0 0.0
    %1875 = vmatprep.subr.mxu0 0.0
    %1876 = vmatpush1.msra.mxu0 0.0
    %1877 = vmatprep.subr.mxu0 0.0
    %1878 = vmatpush1.msra.mxu0 0.0
    %1879 = vmatprep.subr.mxu0 0.0
    %1880 = vmatpush1.msra.mxu0 0.0
    %1881 = vmatprep.subr.mxu0 0.0
    %1882 = vmatpush1.msra.mxu0 0.0
    %1883 = vmatprep.subr.mxu0 0.0
    %1884 = vmatpush1.msra.mxu0 0.0
    %1885 = vmatprep.subr.mxu0 0.0
    %1886 = vmatpush1.msra.mxu0 0.0
    %1887 = vmatprep.subr.mxu0 0.0
    %1888 = vmatpush1.msra.mxu0 0.0
    %1889 = vmatprep.subr.mxu0 0.0
    %1890 = vmatpush1.msra.mxu0 0.0
    %1891 = vmatprep.subr.mxu0 0.0
    %1892 = vmatpush1.msra.mxu0 0.0
    %1893 = vmatprep.subr.mxu0 0.0
    %1894 = vmatpush1.msra.mxu0 0.0
    %1895 = vmatprep.subr.mxu0 0.0
    %1896 = vmatpush1.msra.mxu0 0.0
    %1897 = vmatprep.subr.mxu0 0.0
    %1898 = vmatpush1.msra.mxu0 0.0
    %1899 = vmatprep.subr.mxu0 0.0
    %1900 = vmatpush1.msra.mxu0 0.0
    %1901 = vmatprep.subr.mxu0 0.0
    %1902 = vmatpush1.msra.mxu0 0.0
    %1903 = vmatprep.subr.mxu0 0.0
    %1904 = vmatpush1.msra.mxu0 0.0
    %1905 = vmatprep.subr.mxu0 0.0
    %1906 = vmatpush1.msra.mxu0 0.0
    %1907 = vmatprep.subr.mxu0 0.0
    %1908 = vmatpush1.msra.mxu0 0.0
    %1909 = vmatprep.subr.mxu0 0.0
    %1910 = vmatpush1.msra.mxu0 0.0
    %1911 = vmatprep.subr.mxu0 0.0
    %1912 = vmatpush1.msra.mxu0 0.0
    %1913 = vmatprep.mubr.f32.mxu0 0.0
    %v1914 = vand.u32 %v1593, 4294901760
    %v1915 = vsub.f32 %v1593, %v1914
    %v1916 = vand.u32 %v1915, 4294901760
    %1917 = vmatmul.mubr.f32.gmra.mrb[0].mxu0 %v1916
    %v1918 = vpop.f32.mrb[0].mxu0
    %v1919 = vadd.f32 %v1842, %v1918
    %v1920 = vpop.f32.mrb[0].mxu0
    %1921 = vdwg.mxu0
    %1922 = vmatprep.subr.mxu0 0.0
    %v1923 = vand.u32 %v44, 4294901760
    %v1924 = vsub.f32 %v44, %v1923
    %v1925 = vand.u32 %v1924, 4294901760
    %1926 = vmatpush1.msra.mxu0 %v1925
    %1927 = vmatprep.subr.mxu0 0.0
    %v1928 = vand.u32 %v45, 4294901760
    %v1929 = vsub.f32 %v45, %v1928
    %v1930 = vand.u32 %v1929, 4294901760
    %1931 = vmatpush1.msra.mxu0 %v1930
    %1932 = vmatprep.subr.mxu0 0.0
    %v1933 = vand.u32 %v46, 4294901760
    %v1934 = vsub.f32 %v46, %v1933
    %v1935 = vand.u32 %v1934, 4294901760
    %1936 = vmatpush1.msra.mxu0 %v1935
    %1937 = vmatprep.subr.mxu0 0.0
    %v1938 = vand.u32 %v47, 4294901760
    %v1939 = vsub.f32 %v47, %v1938
    %v1940 = vand.u32 %v1939, 4294901760
    %1941 = vmatpush1.msra.mxu0 %v1940
    %1942 = vmatprep.subr.mxu0 0.0
    %1943 = vmatpush1.msra.mxu0 0.0
    %1944 = vmatprep.subr.mxu0 0.0
    %1945 = vmatpush1.msra.mxu0 0.0
    %1946 = vmatprep.subr.mxu0 0.0
    %1947 = vmatpush1.msra.mxu0 0.0
    %1948 = vmatprep.subr.mxu0 0.0
    %1949 = vmatpush1.msra.mxu0 0.0
    %1950 = vmatprep.subr.mxu0 0.0
    %1951 = vmatpush1.msra.mxu0 0.0
    %1952 = vmatprep.subr.mxu0 0.0
    %1953 = vmatpush1.msra.mxu0 0.0
    %1954 = vmatprep.subr.mxu0 0.0
    %1955 = vmatpush1.msra.mxu0 0.0
    %1956 = vmatprep.subr.mxu0 0.0
    %1957 = vmatpush1.msra.mxu0 0.0
    %1958 = vmatprep.subr.mxu0 0.0
    %1959 = vmatpush1.msra.mxu0 0.0
    %1960 = vmatprep.subr.mxu0 0.0
    %1961 = vmatpush1.msra.mxu0 0.0
    %1962 = vmatprep.subr.mxu0 0.0
    %1963 = vmatpush1.msra.mxu0 0.0
    %1964 = vmatprep.subr.mxu0 0.0
    %1965 = vmatpush1.msra.mxu0 0.0
    %1966 = vmatprep.subr.mxu0 0.0
    %1967 = vmatpush1.msra.mxu0 0.0
    %1968 = vmatprep.subr.mxu0 0.0
    %1969 = vmatpush1.msra.mxu0 0.0
    %1970 = vmatprep.subr.mxu0 0.0
    %1971 = vmatpush1.msra.mxu0 0.0
    %1972 = vmatprep.subr.mxu0 0.0
    %1973 = vmatpush1.msra.mxu0 0.0
    %1974 = vmatprep.subr.mxu0 0.0
    %1975 = vmatpush1.msra.mxu0 0.0
    %1976 = vmatprep.subr.mxu0 0.0
    %1977 = vmatpush1.msra.mxu0 0.0
    %1978 = vmatprep.subr.mxu0 0.0
    %1979 = vmatpush1.msra.mxu0 0.0
    %1980 = vmatprep.subr.mxu0 0.0
    %1981 = vmatpush1.msra.mxu0 0.0
    %1982 = vmatprep.subr.mxu0 0.0
    %1983 = vmatpush1.msra.mxu0 0.0
    %1984 = vmatprep.subr.mxu0 0.0
    %1985 = vmatpush1.msra.mxu0 0.0
    %1986 = vmatprep.subr.mxu0 0.0
    %1987 = vmatpush1.msra.mxu0 0.0
    %1988 = vmatprep.subr.mxu0 0.0
    %1989 = vmatpush1.msra.mxu0 0.0
    %1990 = vmatprep.subr.mxu0 0.0
    %1991 = vmatpush1.msra.mxu0 0.0
    %1992 = vmatprep.subr.mxu0 0.0
    %1993 = vmatpush1.msra.mxu0 0.0
    %1994 = vmatprep.subr.mxu0 0.0
    %1995 = vmatpush1.msra.mxu0 0.0
    %1996 = vmatprep.subr.mxu0 0.0
    %1997 = vmatpush1.msra.mxu0 0.0
    %1998 = vmatprep.mubr.f32.mxu0 0.0
    %v1999 = vand.u32 %v1593, 4294901760
    %2000 = vmatmul.mubr.f32.gmra.mrb[0].mxu0 %v1999
    %v2001 = vpop.f32.mrb[0].mxu0
    %v2002 = vadd.f32 %v1919, %v2001
    %v2003 = vpop.f32.mrb[0].mxu0
    %2004 = vdwg.mxu0
    %2005 = vmatprep.subr.mxu0 0.0
    %v2006 = vand.u32 %v44, 4294901760
    %2007 = vmatpush1.msra.mxu0 %v2006
    %2008 = vmatprep.subr.mxu0 0.0
    %v2009 = vand.u32 %v45, 4294901760
    %2010 = vmatpush1.msra.mxu0 %v2009
    %2011 = vmatprep.subr.mxu0 0.0
    %v2012 = vand.u32 %v46, 4294901760
    %2013 = vmatpush1.msra.mxu0 %v2012
    %2014 = vmatprep.subr.mxu0 0.0
    %v2015 = vand.u32 %v47, 4294901760
    %2016 = vmatpush1.msra.mxu0 %v2015
    %2017 = vmatprep.subr.mxu0 0.0
    %2018 = vmatpush1.msra.mxu0 0.0
    %2019 = vmatprep.subr.mxu0 0.0
    %2020 = vmatpush1.msra.mxu0 0.0
    %2021 = vmatprep.subr.mxu0 0.0
    %2022 = vmatpush1.msra.mxu0 0.0
    %2023 = vmatprep.subr.mxu0 0.0
    %2024 = vmatpush1.msra.mxu0 0.0
    %2025 = vmatprep.subr.mxu0 0.0
    %2026 = vmatpush1.msra.mxu0 0.0
    %2027 = vmatprep.subr.mxu0 0.0
    %2028 = vmatpush1.msra.mxu0 0.0
    %2029 = vmatprep.subr.mxu0 0.0
    %2030 = vmatpush1.msra.mxu0 0.0
    %2031 = vmatprep.subr.mxu0 0.0
    %2032 = vmatpush1.msra.mxu0 0.0
    %2033 = vmatprep.subr.mxu0 0.0
    %2034 = vmatpush1.msra.mxu0 0.0
    %2035 = vmatprep.subr.mxu0 0.0
    %2036 = vmatpush1.msra.mxu0 0.0
    %2037 = vmatprep.subr.mxu0 0.0
    %2038 = vmatpush1.msra.mxu0 0.0
    %2039 = vmatprep.subr.mxu0 0.0
    %2040 = vmatpush1.msra.mxu0 0.0
    %2041 = vmatprep.subr.mxu0 0.0
    %2042 = vmatpush1.msra.mxu0 0.0
    %2043 = vmatprep.subr.mxu0 0.0
    %2044 = vmatpush1.msra.mxu0 0.0
    %2045 = vmatprep.subr.mxu0 0.0
    %2046 = vmatpush1.msra.mxu0 0.0
    %2047 = vmatprep.subr.mxu0 0.0
    %2048 = vmatpush1.msra.mxu0 0.0
    %2049 = vmatprep.subr.mxu0 0.0
    %2050 = vmatpush1.msra.mxu0 0.0
    %2051 = vmatprep.subr.mxu0 0.0
    %2052 = vmatpush1.msra.mxu0 0.0
    %2053 = vmatprep.subr.mxu0 0.0
    %2054 = vmatpush1.msra.mxu0 0.0
    %2055 = vmatprep.subr.mxu0 0.0
    %2056 = vmatpush1.msra.mxu0 0.0
    %2057 = vmatprep.subr.mxu0 0.0
    %2058 = vmatpush1.msra.mxu0 0.0
    %2059 = vmatprep.subr.mxu0 0.0
    %2060 = vmatpush1.msra.mxu0 0.0
    %2061 = vmatprep.subr.mxu0 0.0
    %2062 = vmatpush1.msra.mxu0 0.0
    %2063 = vmatprep.subr.mxu0 0.0
    %2064 = vmatpush1.msra.mxu0 0.0
    %2065 = vmatprep.subr.mxu0 0.0
    %2066 = vmatpush1.msra.mxu0 0.0
    %2067 = vmatprep.subr.mxu0 0.0
    %2068 = vmatpush1.msra.mxu0 0.0
    %2069 = vmatprep.subr.mxu0 0.0
    %2070 = vmatpush1.msra.mxu0 0.0
    %2071 = vmatprep.subr.mxu0 0.0
    %2072 = vmatpush1.msra.mxu0 0.0
    %2073 = vmatprep.mubr.f32.mxu0 0.0
    %v2074 = vand.u32 %v1593, 4294901760
    %2075 = vmatmul.mubr.f32.gmra.mrb[0].mxu0 %v2074
    %v2076 = vpop.f32.mrb[0].mxu0
    %v2077 = vadd.f32 %v2002, %v2076
    %v2078 = vpop.f32.mrb[0].mxu0
    %2079 = vdwg.mxu0
    %v2080 = vtanh.pop %v2077
    %v2081 = vmul.f32 %v2080, %v554
    %v2082 = vsel %vm557, %v2081, 0.0
    %2083 = vadd.xlane.f32.xlu0 %v2082
    %v2084 = vpop.xlane.xlu0 %2083
    %vm2085 = vcmp.eq.s32.totalorder %v51, 3
    %v2086 = vsel %vm2085, 1, 0
    %vm2087 = vcmp.eq.s32.totalorder %v2086, 1
    %v2088 = vsel %vm2087, %v2084, 0.0
    %v2089 = vadd.f32 %v1580, %v2088
    %v2090 = vld [vmem:[#allocation2 + $0x1] sm:$0x1]
    %v2091 = vunpack.c.l.bf16 %v2090
    %v2093 = vsel %vm60, %v2091, 0
    %2095 = vmatprep.subr.mxu0 0.0
    %v2096 = vand.u32 %v44, 4294901760
    %2097 = vmatpush1.msra.mxu0 %v2096
    %2098 = vmatprep.subr.mxu0 0.0
    %v2099 = vand.u32 %v45, 4294901760
    %2100 = vmatpush1.msra.mxu0 %v2099
    %2101 = vmatprep.subr.mxu0 0.0
    %v2102 = vand.u32 %v46, 4294901760
    %2103 = vmatpush1.msra.mxu0 %v2102
    %2104 = vmatprep.subr.mxu0 0.0
    %v2105 = vand.u32 %v47, 4294901760
    %2106 = vmatpush1.msra.mxu0 %v2105
    %2107 = vmatprep.subr.mxu0 0.0
    %2108 = vmatpush1.msra.mxu0 0.0
    %2109 = vmatprep.subr.mxu0 0.0
    %2110 = vmatpush1.msra.mxu0 0.0
    %2111 = vmatprep.subr.mxu0 0.0
    %2112 = vmatpush1.msra.mxu0 0.0
    %2113 = vmatprep.subr.mxu0 0.0
    %2114 = vmatpush1.msra.mxu0 0.0
    %2115 = vmatprep.subr.mxu0 0.0
    %2116 = vmatpush1.msra.mxu0 0.0
    %2117 = vmatprep.subr.mxu0 0.0
    %2118 = vmatpush1.msra.mxu0 0.0
    %2119 = vmatprep.subr.mxu0 0.0
    %2120 = vmatpush1.msra.mxu0 0.0
    %2121 = vmatprep.subr.mxu0 0.0
    %2122 = vmatpush1.msra.mxu0 0.0
    %2123 = vmatprep.subr.mxu0 0.0
    %2124 = vmatpush1.msra.mxu0 0.0
    %2125 = vmatprep.subr.mxu0 0.0
    %2126 = vmatpush1.msra.mxu0 0.0
    %2127 = vmatprep.subr.mxu0 0.0
    %2128 = vmatpush1.msra.mxu0 0.0
    %2129 = vmatprep.subr.mxu0 0.0
    %2130 = vmatpush1.msra.mxu0 0.0
    %2131 = vmatprep.subr.mxu0 0.0
    %2132 = vmatpush1.msra.mxu0 0.0
    %2133 = vmatprep.subr.mxu0 0.0
    %2134 = vmatpush1.msra.mxu0 0.0
    %2135 = vmatprep.subr.mxu0 0.0
    %2136 = vmatpush1.msra.mxu0 0.0
    %2137 = vmatprep.subr.mxu0 0.0
    %2138 = vmatpush1.msra.mxu0 0.0
    %2139 = vmatprep.subr.mxu0 0.0
    %2140 = vmatpush1.msra.mxu0 0.0
    %2141 = vmatprep.subr.mxu0 0.0
    %2142 = vmatpush1.msra.mxu0 0.0
    %2143 = vmatprep.subr.mxu0 0.0
    %2144 = vmatpush1.msra.mxu0 0.0
    %2145 = vmatprep.subr.mxu0 0.0
    %2146 = vmatpush1.msra.mxu0 0.0
    %2147 = vmatprep.subr.mxu0 0.0
    %2148 = vmatpush1.msra.mxu0 0.0
    %2149 = vmatprep.subr.mxu0 0.0
    %2150 = vmatpush1.msra.mxu0 0.0
    %2151 = vmatprep.subr.mxu0 0.0
    %2152 = vmatpush1.msra.mxu0 0.0
    %2153 = vmatprep.subr.mxu0 0.0
    %2154 = vmatpush1.msra.mxu0 0.0
    %2155 = vmatprep.subr.mxu0 0.0
    %2156 = vmatpush1.msra.mxu0 0.0
    %2157 = vmatprep.subr.mxu0 0.0
    %2158 = vmatpush1.msra.mxu0 0.0
    %2159 = vmatprep.subr.mxu0 0.0
    %2160 = vmatpush1.msra.mxu0 0.0
    %2161 = vmatprep.subr.mxu0 0.0
    %2162 = vmatpush1.msra.mxu0 0.0
    %2163 = vmatprep.mubr.f32.mxu0 0.0
    %v2164 = vand.u32 %v2093, 4294901760
    %v2165 = vsub.f32 %v2093, %v2164
    %v2166 = vand.u32 %v2165, 4294901760
    %v2167 = vsub.f32 %v2165, %v2166
    %v2168 = vand.u32 %v2167, 4294901760
    %2169 = vmatmul.mubr.f32.gmra.mrb[0].mxu0 %v2168
    %v2170 = vpop.f32.mrb[0].mxu0
    %v2171 = vadd.f32 %v58, %v2170
    %v2172 = vpop.f32.mrb[0].mxu0
    %2173 = vdwg.mxu0
    %2174 = vmatprep.subr.mxu0 0.0
    %v2175 = vand.u32 %v44, 4294901760
    %v2176 = vsub.f32 %v44, %v2175
    %v2177 = vand.u32 %v2176, 4294901760
    %v2178 = vsub.f32 %v2176, %v2177
    %v2179 = vand.u32 %v2178, 4294901760
    %2180 = vmatpush1.msra.mxu0 %v2179
    %2181 = vmatprep.subr.mxu0 0.0
    %v2182 = vand.u32 %v45, 4294901760
    %v2183 = vsub.f32 %v45, %v2182
    %v2184 = vand.u32 %v2183, 4294901760
    %v2185 = vsub.f32 %v2183, %v2184
    %v2186 = vand.u32 %v2185, 4294901760
    %2187 = vmatpush1.msra.mxu0 %v2186
    %2188 = vmatprep.subr.mxu0 0.0
    %v2189 = vand.u32 %v46, 4294901760
    %v2190 = vsub.f32 %v46, %v2189
    %v2191 = vand.u32 %v2190, 4294901760
    %v2192 = vsub.f32 %v2190, %v2191
    %v2193 = vand.u32 %v2192, 4294901760
    %2194 = vmatpush1.msra.mxu0 %v2193
    %2195 = vmatprep.subr.mxu0 0.0
    %v2196 = vand.u32 %v47, 4294901760
    %v2197 = vsub.f32 %v47, %v2196
    %v2198 = vand.u32 %v2197, 4294901760
    %v2199 = vsub.f32 %v2197, %v2198
    %v2200 = vand.u32 %v2199, 4294901760
    %2201 = vmatpush1.msra.mxu0 %v2200
    %2202 = vmatprep.subr.mxu0 0.0
    %2203 = vmatpush1.msra.mxu0 0.0
    %2204 = vmatprep.subr.mxu0 0.0
    %2205 = vmatpush1.msra.mxu0 0.0
    %2206 = vmatprep.subr.mxu0 0.0
    %2207 = vmatpush1.msra.mxu0 0.0
    %2208 = vmatprep.subr.mxu0 0.0
    %2209 = vmatpush1.msra.mxu0 0.0
    %2210 = vmatprep.subr.mxu0 0.0
    %2211 = vmatpush1.msra.mxu0 0.0
    %2212 = vmatprep.subr.mxu0 0.0
    %2213 = vmatpush1.msra.mxu0 0.0
    %2214 = vmatprep.subr.mxu0 0.0
    %2215 = vmatpush1.msra.mxu0 0.0
    %2216 = vmatprep.subr.mxu0 0.0
    %2217 = vmatpush1.msra.mxu0 0.0
    %2218 = vmatprep.subr.mxu0 0.0
    %2219 = vmatpush1.msra.mxu0 0.0
    %2220 = vmatprep.subr.mxu0 0.0
    %2221 = vmatpush1.msra.mxu0 0.0
    %2222 = vmatprep.subr.mxu0 0.0
    %2223 = vmatpush1.msra.mxu0 0.0
    %2224 = vmatprep.subr.mxu0 0.0
    %2225 = vmatpush1.msra.mxu0 0.0
    %2226 = vmatprep.subr.mxu0 0.0
    %2227 = vmatpush1.msra.mxu0 0.0
    %2228 = vmatprep.subr.mxu0 0.0
    %2229 = vmatpush1.msra.mxu0 0.0
    %2230 = vmatprep.subr.mxu0 0.0
    %2231 = vmatpush1.msra.mxu0 0.0
    %2232 = vmatprep.subr.mxu0 0.0
    %2233 = vmatpush1.msra.mxu0 0.0
    %2234 = vmatprep.subr.mxu0 0.0
    %2235 = vmatpush1.msra.mxu0 0.0
    %2236 = vmatprep.subr.mxu0 0.0
    %2237 = vmatpush1.msra.mxu0 0.0
    %2238 = vmatprep.subr.mxu0 0.0
    %2239 = vmatpush1.msra.mxu0 0.0
    %2240 = vmatprep.subr.mxu0 0.0
    %2241 = vmatpush1.msra.mxu0 0.0
    %2242 = vmatprep.subr.mxu0 0.0
    %2243 = vmatpush1.msra.mxu0 0.0
    %2244 = vmatprep.subr.mxu0 0.0
    %2245 = vmatpush1.msra.mxu0 0.0
    %2246 = vmatprep.subr.mxu0 0.0
    %2247 = vmatpush1.msra.mxu0 0.0
    %2248 = vmatprep.subr.mxu0 0.0
    %2249 = vmatpush1.msra.mxu0 0.0
    %2250 = vmatprep.subr.mxu0 0.0
    %2251 = vmatpush1.msra.mxu0 0.0
    %2252 = vmatprep.subr.mxu0 0.0
    %2253 = vmatpush1.msra.mxu0 0.0
    %2254 = vmatprep.subr.mxu0 0.0
    %2255 = vmatpush1.msra.mxu0 0.0
    %2256 = vmatprep.subr.mxu0 0.0
    %2257 = vmatpush1.msra.mxu0 0.0
    %2258 = vmatprep.mubr.f32.mxu0 0.0
    %v2259 = vand.u32 %v2093, 4294901760
    %2260 = vmatmul.mubr.f32.gmra.mrb[0].mxu0 %v2259
    %v2261 = vpop.f32.mrb[0].mxu0
    %v2262 = vadd.f32 %v2171, %v2261
    %v2263 = vpop.f32.mrb[0].mxu0
    %2264 = vdwg.mxu0
    %2265 = vmatprep.subr.mxu0 0.0
    %v2266 = vand.u32 %v44, 4294901760
    %v2267 = vsub.f32 %v44, %v2266
    %2268 = vmatpush1.msra.mxu0 %v2267
    %2269 = vmatprep.subr.mxu0 0.0
    %v2270 = vand.u32 %v45, 4294901760
    %v2271 = vsub.f32 %v45, %v2270
    %2272 = vmatpush1.msra.mxu0 %v2271
    %2273 = vmatprep.subr.mxu0 0.0
    %v2274 = vand.u32 %v46, 4294901760
    %v2275 = vsub.f32 %v46, %v2274
    %2276 = vmatpush1.msra.mxu0 %v2275
    %2277 = vmatprep.subr.mxu0 0.0
    %v2278 = vand.u32 %v47, 4294901760
    %v2279 = vsub.f32 %v47, %v2278
    %2280 = vmatpush1.msra.mxu0 %v2279
    %2281 = vmatprep.subr.mxu0 0.0
    %2282 = vmatpush1.msra.mxu0 0.0
    %2283 = vmatprep.subr.mxu0 0.0
    %2284 = vmatpush1.msra.mxu0 0.0
    %2285 = vmatprep.subr.mxu0 0.0
    %2286 = vmatpush1.msra.mxu0 0.0
    %2287 = vmatprep.subr.mxu0 0.0
    %2288 = vmatpush1.msra.mxu0 0.0
    %2289 = vmatprep.subr.mxu0 0.0
    %2290 = vmatpush1.msra.mxu0 0.0
    %2291 = vmatprep.subr.mxu0 0.0
    %2292 = vmatpush1.msra.mxu0 0.0
    %2293 = vmatprep.subr.mxu0 0.0
    %2294 = vmatpush1.msra.mxu0 0.0
    %2295 = vmatprep.subr.mxu0 0.0
    %2296 = vmatpush1.msra.mxu0 0.0
    %2297 = vmatprep.subr.mxu0 0.0
    %2298 = vmatpush1.msra.mxu0 0.0
    %2299 = vmatprep.subr.mxu0 0.0
    %2300 = vmatpush1.msra.mxu0 0.0
    %2301 = vmatprep.subr.mxu0 0.0
    %2302 = vmatpush1.msra.mxu0 0.0
    %2303 = vmatprep.subr.mxu0 0.0
    %2304 = vmatpush1.msra.mxu0 0.0
    %2305 = vmatprep.subr.mxu0 0.0
    %2306 = vmatpush1.msra.mxu0 0.0
    %2307 = vmatprep.subr.mxu0 0.0
    %2308 = vmatpush1.msra.mxu0 0.0
    %2309 = vmatprep.subr.mxu0 0.0
    %2310 = vmatpush1.msra.mxu0 0.0
    %2311 = vmatprep.subr.mxu0 0.0
    %2312 = vmatpush1.msra.mxu0 0.0
    %2313 = vmatprep.subr.mxu0 0.0
    %2314 = vmatpush1.msra.mxu0 0.0
    %2315 = vmatprep.subr.mxu0 0.0
    %2316 = vmatpush1.msra.mxu0 0.0
    %2317 = vmatprep.subr.mxu0 0.0
    %2318 = vmatpush1.msra.mxu0 0.0
    %2319 = vmatprep.subr.mxu0 0.0
    %2320 = vmatpush1.msra.mxu0 0.0
    %2321 = vmatprep.subr.mxu0 0.0
    %2322 = vmatpush1.msra.mxu0 0.0
    %2323 = vmatprep.subr.mxu0 0.0
    %2324 = vmatpush1.msra.mxu0 0.0
    %2325 = vmatprep.subr.mxu0 0.0
    %2326 = vmatpush1.msra.mxu0 0.0
    %2327 = vmatprep.subr.mxu0 0.0
    %2328 = vmatpush1.msra.mxu0 0.0
    %2329 = vmatprep.subr.mxu0 0.0
    %2330 = vmatpush1.msra.mxu0 0.0
    %2331 = vmatprep.subr.mxu0 0.0
    %2332 = vmatpush1.msra.mxu0 0.0
    %2333 = vmatprep.subr.mxu0 0.0
    %2334 = vmatpush1.msra.mxu0 0.0
    %2335 = vmatprep.subr.mxu0 0.0
    %2336 = vmatpush1.msra.mxu0 0.0
    %2337 = vmatprep.mubr.f32.mxu0 0.0
    %v2338 = vand.u32 %v2093, 4294901760
    %v2339 = vsub.f32 %v2093, %v2338
    %2340 = vmatmul.mubr.f32.gmra.mrb[0].mxu0 %v2339
    %v2341 = vpop.f32.mrb[0].mxu0
    %v2342 = vadd.f32 %v2262, %v2341
    %v2343 = vpop.f32.mrb[0].mxu0
    %2344 = vdwg.mxu0
    %2345 = vmatprep.subr.mxu0 0.0
    %v2346 = vand.u32 %v44, 4294901760
    %2347 = vmatpush1.msra.mxu0 %v2346
    %2348 = vmatprep.subr.mxu0 0.0
    %v2349 = vand.u32 %v45, 4294901760
    %2350 = vmatpush1.msra.mxu0 %v2349
    %2351 = vmatprep.subr.mxu0 0.0
    %v2352 = vand.u32 %v46, 4294901760
    %2353 = vmatpush1.msra.mxu0 %v2352
    %2354 = vmatprep.subr.mxu0 0.0
    %v2355 = vand.u32 %v47, 4294901760
    %2356 = vmatpush1.msra.mxu0 %v2355
    %2357 = vmatprep.subr.mxu0 0.0
    %2358 = vmatpush1.msra.mxu0 0.0
    %2359 = vmatprep.subr.mxu0 0.0
    %2360 = vmatpush1.msra.mxu0 0.0
    %2361 = vmatprep.subr.mxu0 0.0
    %2362 = vmatpush1.msra.mxu0 0.0
    %2363 = vmatprep.subr.mxu0 0.0
    %2364 = vmatpush1.msra.mxu0 0.0
    %2365 = vmatprep.subr.mxu0 0.0
    %2366 = vmatpush1.msra.mxu0 0.0
    %2367 = vmatprep.subr.mxu0 0.0
    %2368 = vmatpush1.msra.mxu0 0.0
    %2369 = vmatprep.subr.mxu0 0.0
    %2370 = vmatpush1.msra.mxu0 0.0
    %2371 = vmatprep.subr.mxu0 0.0
    %2372 = vmatpush1.msra.mxu0 0.0
    %2373 = vmatprep.subr.mxu0 0.0
    %2374 = vmatpush1.msra.mxu0 0.0
    %2375 = vmatprep.subr.mxu0 0.0
    %2376 = vmatpush1.msra.mxu0 0.0
    %2377 = vmatprep.subr.mxu0 0.0
    %2378 = vmatpush1.msra.mxu0 0.0
    %2379 = vmatprep.subr.mxu0 0.0
    %2380 = vmatpush1.msra.mxu0 0.0
    %2381 = vmatprep.subr.mxu0 0.0
    %2382 = vmatpush1.msra.mxu0 0.0
    %2383 = vmatprep.subr.mxu0 0.0
    %2384 = vmatpush1.msra.mxu0 0.0
    %2385 = vmatprep.subr.mxu0 0.0
    %2386 = vmatpush1.msra.mxu0 0.0
    %2387 = vmatprep.subr.mxu0 0.0
    %2388 = vmatpush1.msra.mxu0 0.0
    %2389 = vmatprep.subr.mxu0 0.0
    %2390 = vmatpush1.msra.mxu0 0.0
    %2391 = vmatprep.subr.mxu0 0.0
    %2392 = vmatpush1.msra.mxu0 0.0
    %2393 = vmatprep.subr.mxu0 0.0
    %2394 = vmatpush1.msra.mxu0 0.0
    %2395 = vmatprep.subr.mxu0 0.0
    %2396 = vmatpush1.msra.mxu0 0.0
    %2397 = vmatprep.subr.mxu0 0.0
    %2398 = vmatpush1.msra.mxu0 0.0
    %2399 = vmatprep.subr.mxu0 0.0
    %2400 = vmatpush1.msra.mxu0 0.0
    %2401 = vmatprep.subr.mxu0 0.0
    %2402 = vmatpush1.msra.mxu0 0.0
    %2403 = vmatprep.subr.mxu0 0.0
    %2404 = vmatpush1.msra.mxu0 0.0
    %2405 = vmatprep.subr.mxu0 0.0
    %2406 = vmatpush1.msra.mxu0 0.0
    %2407 = vmatprep.subr.mxu0 0.0
    %2408 = vmatpush1.msra.mxu0 0.0
    %2409 = vmatprep.subr.mxu0 0.0
    %2410 = vmatpush1.msra.mxu0 0.0
    %2411 = vmatprep.subr.mxu0 0.0
    %2412 = vmatpush1.msra.mxu0 0.0
    %2413 = vmatprep.mubr.f32.mxu0 0.0
    %v2414 = vand.u32 %v2093, 4294901760
    %v2415 = vsub.f32 %v2093, %v2414
    %v2416 = vand.u32 %v2415, 4294901760
    %2417 = vmatmul.mubr.f32.gmra.mrb[0].mxu0 %v2416
    %v2418 = vpop.f32.mrb[0].mxu0
    %v2419 = vadd.f32 %v2342, %v2418
    %v2420 = vpop.f32.mrb[0].mxu0
    %2421 = vdwg.mxu0
    %2422 = vmatprep.subr.mxu0 0.0
    %v2423 = vand.u32 %v44, 4294901760
    %v2424 = vsub.f32 %v44, %v2423
    %v2425 = vand.u32 %v2424, 4294901760
    %2426 = vmatpush1.msra.mxu0 %v2425
    %2427 = vmatprep.subr.mxu0 0.0
    %v2428 = vand.u32 %v45, 4294901760
    %v2429 = vsub.f32 %v45, %v2428
    %v2430 = vand.u32 %v2429, 4294901760
    %2431 = vmatpush1.msra.mxu0 %v2430
    %2432 = vmatprep.subr.mxu0 0.0
    %v2433 = vand.u32 %v46, 4294901760
    %v2434 = vsub.f32 %v46, %v2433
    %v2435 = vand.u32 %v2434, 4294901760
    %2436 = vmatpush1.msra.mxu0 %v2435
    %2437 = vmatprep.subr.mxu0 0.0
    %v2438 = vand.u32 %v47, 4294901760
    %v2439 = vsub.f32 %v47, %v2438
    %v2440 = vand.u32 %v2439, 4294901760
    %2441 = vmatpush1.msra.mxu0 %v2440
    %2442 = vmatprep.subr.mxu0 0.0
    %2443 = vmatpush1.msra.mxu0 0.0
    %2444 = vmatprep.subr.mxu0 0.0
    %2445 = vmatpush1.msra.mxu0 0.0
    %2446 = vmatprep.subr.mxu0 0.0
    %2447 = vmatpush1.msra.mxu0 0.0
    %2448 = vmatprep.subr.mxu0 0.0
    %2449 = vmatpush1.msra.mxu0 0.0
    %2450 = vmatprep.subr.mxu0 0.0
    %2451 = vmatpush1.msra.mxu0 0.0
    %2452 = vmatprep.subr.mxu0 0.0
    %2453 = vmatpush1.msra.mxu0 0.0
    %2454 = vmatprep.subr.mxu0 0.0
    %2455 = vmatpush1.msra.mxu0 0.0
    %2456 = vmatprep.subr.mxu0 0.0
    %2457 = vmatpush1.msra.mxu0 0.0
    %2458 = vmatprep.subr.mxu0 0.0
    %2459 = vmatpush1.msra.mxu0 0.0
    %2460 = vmatprep.subr.mxu0 0.0
    %2461 = vmatpush1.msra.mxu0 0.0
    %2462 = vmatprep.subr.mxu0 0.0
    %2463 = vmatpush1.msra.mxu0 0.0
    %2464 = vmatprep.subr.mxu0 0.0
    %2465 = vmatpush1.msra.mxu0 0.0
    %2466 = vmatprep.subr.mxu0 0.0
    %2467 = vmatpush1.msra.mxu0 0.0
    %2468 = vmatprep.subr.mxu0 0.0
    %2469 = vmatpush1.msra.mxu0 0.0
    %2470 = vmatprep.subr.mxu0 0.0
    %2471 = vmatpush1.msra.mxu0 0.0
    %2472 = vmatprep.subr.mxu0 0.0
    %2473 = vmatpush1.msra.mxu0 0.0
    %2474 = vmatprep.subr.mxu0 0.0
    %2475 = vmatpush1.msra.mxu0 0.0
    %2476 = vmatprep.subr.mxu0 0.0
    %2477 = vmatpush1.msra.mxu0 0.0
    %2478 = vmatprep.subr.mxu0 0.0
    %2479 = vmatpush1.msra.mxu0 0.0
    %2480 = vmatprep.subr.mxu0 0.0
    %2481 = vmatpush1.msra.mxu0 0.0
    %2482 = vmatprep.subr.mxu0 0.0
    %2483 = vmatpush1.msra.mxu0 0.0
    %2484 = vmatprep.subr.mxu0 0.0
    %2485 = vmatpush1.msra.mxu0 0.0
    %2486 = vmatprep.subr.mxu0 0.0
    %2487 = vmatpush1.msra.mxu0 0.0
    %2488 = vmatprep.subr.mxu0 0.0
    %2489 = vmatpush1.msra.mxu0 0.0
    %2490 = vmatprep.subr.mxu0 0.0
    %2491 = vmatpush1.msra.mxu0 0.0
    %2492 = vmatprep.subr.mxu0 0.0
    %2493 = vmatpush1.msra.mxu0 0.0
    %2494 = vmatprep.subr.mxu0 0.0
    %2495 = vmatpush1.msra.mxu0 0.0
    %2496 = vmatprep.subr.mxu0 0.0
    %2497 = vmatpush1.msra.mxu0 0.0
    %2498 = vmatprep.mubr.f32.mxu0 0.0
    %v2499 = vand.u32 %v2093, 4294901760
    %2500 = vmatmul.mubr.f32.gmra.mrb[0].mxu0 %v2499
    %v2501 = vpop.f32.mrb[0].mxu0
    %v2502 = vadd.f32 %v2419, %v2501
    %v2503 = vpop.f32.mrb[0].mxu0
    %2504 = vdwg.mxu0
    %2505 = vmatprep.subr.mxu0 0.0
    %v2506 = vand.u32 %v44, 4294901760
    %2507 = vmatpush1.msra.mxu0 %v2506
    %2508 = vmatprep.subr.mxu0 0.0
    %v2509 = vand.u32 %v45, 4294901760
    %2510 = vmatpush1.msra.mxu0 %v2509
    %2511 = vmatprep.subr.mxu0 0.0
    %v2512 = vand.u32 %v46, 4294901760
    %2513 = vmatpush1.msra.mxu0 %v2512
    %2514 = vmatprep.subr.mxu0 0.0
    %v2515 = vand.u32 %v47, 4294901760
    %2516 = vmatpush1.msra.mxu0 %v2515
    %2517 = vmatprep.subr.mxu0 0.0
    %2518 = vmatpush1.msra.mxu0 0.0
    %2519 = vmatprep.subr.mxu0 0.0
    %2520 = vmatpush1.msra.mxu0 0.0
    %2521 = vmatprep.subr.mxu0 0.0
    %2522 = vmatpush1.msra.mxu0 0.0
    %2523 = vmatprep.subr.mxu0 0.0
    %2524 = vmatpush1.msra.mxu0 0.0
    %2525 = vmatprep.subr.mxu0 0.0
    %2526 = vmatpush1.msra.mxu0 0.0
    %2527 = vmatprep.subr.mxu0 0.0
    %2528 = vmatpush1.msra.mxu0 0.0
    %2529 = vmatprep.subr.mxu0 0.0
    %2530 = vmatpush1.msra.mxu0 0.0
    %2531 = vmatprep.subr.mxu0 0.0
    %2532 = vmatpush1.msra.mxu0 0.0
    %2533 = vmatprep.subr.mxu0 0.0
    %2534 = vmatpush1.msra.mxu0 0.0
    %2535 = vmatprep.subr.mxu0 0.0
    %2536 = vmatpush1.msra.mxu0 0.0
    %2537 = vmatprep.subr.mxu0 0.0
    %2538 = vmatpush1.msra.mxu0 0.0
    %2539 = vmatprep.subr.mxu0 0.0
    %2540 = vmatpush1.msra.mxu0 0.0
    %2541 = vmatprep.subr.mxu0 0.0
    %2542 = vmatpush1.msra.mxu0 0.0
    %2543 = vmatprep.subr.mxu0 0.0
    %2544 = vmatpush1.msra.mxu0 0.0
    %2545 = vmatprep.subr.mxu0 0.0
    %2546 = vmatpush1.msra.mxu0 0.0
    %2547 = vmatprep.subr.mxu0 0.0
    %2548 = vmatpush1.msra.mxu0 0.0
    %2549 = vmatprep.subr.mxu0 0.0
    %2550 = vmatpush1.msra.mxu0 0.0
    %2551 = vmatprep.subr.mxu0 0.0
    %2552 = vmatpush1.msra.mxu0 0.0
    %2553 = vmatprep.subr.mxu0 0.0
    %2554 = vmatpush1.msra.mxu0 0.0
    %2555 = vmatprep.subr.mxu0 0.0
    %2556 = vmatpush1.msra.mxu0 0.0
    %2557 = vmatprep.subr.mxu0 0.0
    %2558 = vmatpush1.msra.mxu0 0.0
    %2559 = vmatprep.subr.mxu0 0.0
    %2560 = vmatpush1.msra.mxu0 0.0
    %2561 = vmatprep.subr.mxu0 0.0
    %2562 = vmatpush1.msra.mxu0 0.0
    %2563 = vmatprep.subr.mxu0 0.0
    %2564 = vmatpush1.msra.mxu0 0.0
    %2565 = vmatprep.subr.mxu0 0.0
    %2566 = vmatpush1.msra.mxu0 0.0
    %2567 = vmatprep.subr.mxu0 0.0
    %2568 = vmatpush1.msra.mxu0 0.0
    %2569 = vmatprep.subr.mxu0 0.0
    %2570 = vmatpush1.msra.mxu0 0.0
    %2571 = vmatprep.subr.mxu0 0.0
    %2572 = vmatpush1.msra.mxu0 0.0
    %2573 = vmatprep.mubr.f32.mxu0 0.0
    %v2574 = vand.u32 %v2093, 4294901760
    %2575 = vmatmul.mubr.f32.gmra.mrb[0].mxu0 %v2574
    %v2576 = vpop.f32.mrb[0].mxu0
    %v2577 = vadd.f32 %v2502, %v2576
    %v2578 = vpop.f32.mrb[0].mxu0
    %2579 = vdwg.mxu0
    %v2580 = vtanh.pop %v2577
    %v2581 = vmul.f32 %v2580, %v554
    %v2582 = vsel %vm557, %v2581, 0.0
    %2583 = vadd.xlane.f32.xlu0 %v2582
    %v2584 = vpop.xlane.xlu0 %2583
    %vm2585 = vcmp.eq.s32.totalorder %v51, 4
    %v2586 = vsel %vm2585, 1, 0
    %vm2587 = vcmp.eq.s32.totalorder %v2586, 1
    %v2588 = vsel %vm2587, %v2584, 0.0
    %v2589 = vadd.f32 %v2089, %v2588
    %v2591 = vunpack.c.l.s4 1983009808
    %v2592 = vunpack.c.0.s8 %v2591
    %v2593 = vlaneseq
    %v2594 = vshrl.u32 %v2593, 7
    %v2595 = vsub.s32 %v2592, %v2594
    %v2596 = vrot.slane %v2091, %v2595
    %2597 = vrot.lane.b32.xlu0 %v2596, 96
    %v2598 = vpop.permute.xlu0 %2597
    %v2599 = vsel %vm60, %v2598, 0
    %2601 = vmatprep.subr.mxu0 0.0
    %v2602 = vand.u32 %v44, 4294901760
    %2603 = vmatpush1.msra.mxu0 %v2602
    %2604 = vmatprep.subr.mxu0 0.0
    %v2605 = vand.u32 %v45, 4294901760
    %2606 = vmatpush1.msra.mxu0 %v2605
    %2607 = vmatprep.subr.mxu0 0.0
    %v2608 = vand.u32 %v46, 4294901760
    %2609 = vmatpush1.msra.mxu0 %v2608
    %2610 = vmatprep.subr.mxu0 0.0
    %v2611 = vand.u32 %v47, 4294901760
    %2612 = vmatpush1.msra.mxu0 %v2611
    %2613 = vmatprep.subr.mxu0 0.0
    %2614 = vmatpush1.msra.mxu0 0.0
    %2615 = vmatprep.subr.mxu0 0.0
    %2616 = vmatpush1.msra.mxu0 0.0
    %2617 = vmatprep.subr.mxu0 0.0
    %2618 = vmatpush1.msra.mxu0 0.0
    %2619 = vmatprep.subr.mxu0 0.0
    %2620 = vmatpush1.msra.mxu0 0.0
    %2621 = vmatprep.subr.mxu0 0.0
    %2622 = vmatpush1.msra.mxu0 0.0
    %2623 = vmatprep.subr.mxu0 0.0
    %2624 = vmatpush1.msra.mxu0 0.0
    %2625 = vmatprep.subr.mxu0 0.0
    %2626 = vmatpush1.msra.mxu0 0.0
    %2627 = vmatprep.subr.mxu0 0.0
    %2628 = vmatpush1.msra.mxu0 0.0
    %2629 = vmatprep.subr.mxu0 0.0
    %2630 = vmatpush1.msra.mxu0 0.0
    %2631 = vmatprep.subr.mxu0 0.0
    %2632 = vmatpush1.msra.mxu0 0.0
    %2633 = vmatprep.subr.mxu0 0.0
    %2634 = vmatpush1.msra.mxu0 0.0
    %2635 = vmatprep.subr.mxu0 0.0
    %2636 = vmatpush1.msra.mxu0 0.0
    %2637 = vmatprep.subr.mxu0 0.0
    %2638 = vmatpush1.msra.mxu0 0.0
    %2639 = vmatprep.subr.mxu0 0.0
    %2640 = vmatpush1.msra.mxu0 0.0
    %2641 = vmatprep.subr.mxu0 0.0
    %2642 = vmatpush1.msra.mxu0 0.0
    %2643 = vmatprep.subr.mxu0 0.0
    %2644 = vmatpush1.msra.mxu0 0.0
    %2645 = vmatprep.subr.mxu0 0.0
    %2646 = vmatpush1.msra.mxu0 0.0
    %2647 = vmatprep.subr.mxu0 0.0
    %2648 = vmatpush1.msra.mxu0 0.0
    %2649 = vmatprep.subr.mxu0 0.0
    %2650 = vmatpush1.msra.mxu0 0.0
    %2651 = vmatprep.subr.mxu0 0.0
    %2652 = vmatpush1.msra.mxu0 0.0
    %2653 = vmatprep.subr.mxu0 0.0
    %2654 = vmatpush1.msra.mxu0 0.0
    %2655 = vmatprep.subr.mxu0 0.0
    %2656 = vmatpush1.msra.mxu0 0.0
    %2657 = vmatprep.subr.mxu0 0.0
    %2658 = vmatpush1.msra.mxu0 0.0
    %2659 = vmatprep.subr.mxu0 0.0
    %2660 = vmatpush1.msra.mxu0 0.0
    %2661 = vmatprep.subr.mxu0 0.0
    %2662 = vmatpush1.msra.mxu0 0.0
    %2663 = vmatprep.subr.mxu0 0.0
    %2664 = vmatpush1.msra.mxu0 0.0
    %2665 = vmatprep.subr.mxu0 0.0
    %2666 = vmatpush1.msra.mxu0 0.0
    %2667 = vmatprep.subr.mxu0 0.0
    %2668 = vmatpush1.msra.mxu0 0.0
    %2669 = vmatprep.mubr.f32.mxu0 0.0
    %v2670 = vand.u32 %v2599, 4294901760
    %v2671 = vsub.f32 %v2599, %v2670
    %v2672 = vand.u32 %v2671, 4294901760
    %v2673 = vsub.f32 %v2671, %v2672
    %v2674 = vand.u32 %v2673, 4294901760
    %2675 = vmatmul.mubr.f32.gmra.mrb[0].mxu0 %v2674
    %v2676 = vpop.f32.mrb[0].mxu0
    %v2677 = vadd.f32 %v58, %v2676
    %v2678 = vpop.f32.mrb[0].mxu0
    %2679 = vdwg.mxu0
    %2680 = vmatprep.subr.mxu0 0.0
    %v2681 = vand.u32 %v44, 4294901760
    %v2682 = vsub.f32 %v44, %v2681
    %v2683 = vand.u32 %v2682, 4294901760
    %v2684 = vsub.f32 %v2682, %v2683
    %v2685 = vand.u32 %v2684, 4294901760
    %2686 = vmatpush1.msra.mxu0 %v2685
    %2687 = vmatprep.subr.mxu0 0.0
    %v2688 = vand.u32 %v45, 4294901760
    %v2689 = vsub.f32 %v45, %v2688
    %v2690 = vand.u32 %v2689, 4294901760
    %v2691 = vsub.f32 %v2689, %v2690
    %v2692 = vand.u32 %v2691, 4294901760
    %2693 = vmatpush1.msra.mxu0 %v2692
    %2694 = vmatprep.subr.mxu0 0.0
    %v2695 = vand.u32 %v46, 4294901760
    %v2696 = vsub.f32 %v46, %v2695
    %v2697 = vand.u32 %v2696, 4294901760
    %v2698 = vsub.f32 %v2696, %v2697
    %v2699 = vand.u32 %v2698, 4294901760
    %2700 = vmatpush1.msra.mxu0 %v2699
    %2701 = vmatprep.subr.mxu0 0.0
    %v2702 = vand.u32 %v47, 4294901760
    %v2703 = vsub.f32 %v47, %v2702
    %v2704 = vand.u32 %v2703, 4294901760
    %v2705 = vsub.f32 %v2703, %v2704
    %v2706 = vand.u32 %v2705, 4294901760
    %2707 = vmatpush1.msra.mxu0 %v2706
    %2708 = vmatprep.subr.mxu0 0.0
    %2709 = vmatpush1.msra.mxu0 0.0
    %2710 = vmatprep.subr.mxu0 0.0
    %2711 = vmatpush1.msra.mxu0 0.0
    %2712 = vmatprep.subr.mxu0 0.0
    %2713 = vmatpush1.msra.mxu0 0.0
    %2714 = vmatprep.subr.mxu0 0.0
    %2715 = vmatpush1.msra.mxu0 0.0
    %2716 = vmatprep.subr.mxu0 0.0
    %2717 = vmatpush1.msra.mxu0 0.0
    %2718 = vmatprep.subr.mxu0 0.0
    %2719 = vmatpush1.msra.mxu0 0.0
    %2720 = vmatprep.subr.mxu0 0.0
    %2721 = vmatpush1.msra.mxu0 0.0
    %2722 = vmatprep.subr.mxu0 0.0
    %2723 = vmatpush1.msra.mxu0 0.0
    %2724 = vmatprep.subr.mxu0 0.0
    %2725 = vmatpush1.msra.mxu0 0.0
    %2726 = vmatprep.subr.mxu0 0.0
    %2727 = vmatpush1.msra.mxu0 0.0
    %2728 = vmatprep.subr.mxu0 0.0
    %2729 = vmatpush1.msra.mxu0 0.0
    %2730 = vmatprep.subr.mxu0 0.0
    %2731 = vmatpush1.msra.mxu0 0.0
    %2732 = vmatprep.subr.mxu0 0.0
    %2733 = vmatpush1.msra.mxu0 0.0
    %2734 = vmatprep.subr.mxu0 0.0
    %2735 = vmatpush1.msra.mxu0 0.0
    %2736 = vmatprep.subr.mxu0 0.0
    %2737 = vmatpush1.msra.mxu0 0.0
    %2738 = vmatprep.subr.mxu0 0.0
    %2739 = vmatpush1.msra.mxu0 0.0
    %2740 = vmatprep.subr.mxu0 0.0
    %2741 = vmatpush1.msra.mxu0 0.0
    %2742 = vmatprep.subr.mxu0 0.0
    %2743 = vmatpush1.msra.mxu0 0.0
    %2744 = vmatprep.subr.mxu0 0.0
    %2745 = vmatpush1.msra.mxu0 0.0
    %2746 = vmatprep.subr.mxu0 0.0
    %2747 = vmatpush1.msra.mxu0 0.0
    %2748 = vmatprep.subr.mxu0 0.0
    %2749 = vmatpush1.msra.mxu0 0.0
    %2750 = vmatprep.subr.mxu0 0.0
    %2751 = vmatpush1.msra.mxu0 0.0
    %2752 = vmatprep.subr.mxu0 0.0
    %2753 = vmatpush1.msra.mxu0 0.0
    %2754 = vmatprep.subr.mxu0 0.0
    %2755 = vmatpush1.msra.mxu0 0.0
    %2756 = vmatprep.subr.mxu0 0.0
    %2757 = vmatpush1.msra.mxu0 0.0
    %2758 = vmatprep.subr.mxu0 0.0
    %2759 = vmatpush1.msra.mxu0 0.0
    %2760 = vmatprep.subr.mxu0 0.0
    %2761 = vmatpush1.msra.mxu0 0.0
    %2762 = vmatprep.subr.mxu0 0.0
    %2763 = vmatpush1.msra.mxu0 0.0
    %2764 = vmatprep.mubr.f32.mxu0 0.0
    %v2765 = vand.u32 %v2599, 4294901760
    %2766 = vmatmul.mubr.f32.gmra.mrb[0].mxu0 %v2765
    %v2767 = vpop.f32.mrb[0].mxu0
    %v2768 = vadd.f32 %v2677, %v2767
    %v2769 = vpop.f32.mrb[0].mxu0
    %2770 = vdwg.mxu0
    %2771 = vmatprep.subr.mxu0 0.0
    %v2772 = vand.u32 %v44, 4294901760
    %v2773 = vsub.f32 %v44, %v2772
    %2774 = vmatpush1.msra.mxu0 %v2773
    %2775 = vmatprep.subr.mxu0 0.0
    %v2776 = vand.u32 %v45, 4294901760
    %v2777 = vsub.f32 %v45, %v2776
    %2778 = vmatpush1.msra.mxu0 %v2777
    %2779 = vmatprep.subr.mxu0 0.0
    %v2780 = vand.u32 %v46, 4294901760
    %v2781 = vsub.f32 %v46, %v2780
    %2782 = vmatpush1.msra.mxu0 %v2781
    %2783 = vmatprep.subr.mxu0 0.0
    %v2784 = vand.u32 %v47, 4294901760
    %v2785 = vsub.f32 %v47, %v2784
    %2786 = vmatpush1.msra.mxu0 %v2785
    %2787 = vmatprep.subr.mxu0 0.0
    %2788 = vmatpush1.msra.mxu0 0.0
    %2789 = vmatprep.subr.mxu0 0.0
    %2790 = vmatpush1.msra.mxu0 0.0
    %2791 = vmatprep.subr.mxu0 0.0
    %2792 = vmatpush1.msra.mxu0 0.0
    %2793 = vmatprep.subr.mxu0 0.0
    %2794 = vmatpush1.msra.mxu0 0.0
    %2795 = vmatprep.subr.mxu0 0.0
    %2796 = vmatpush1.msra.mxu0 0.0
    %2797 = vmatprep.subr.mxu0 0.0
    %2798 = vmatpush1.msra.mxu0 0.0
    %2799 = vmatprep.subr.mxu0 0.0
    %2800 = vmatpush1.msra.mxu0 0.0
    %2801 = vmatprep.subr.mxu0 0.0
    %2802 = vmatpush1.msra.mxu0 0.0
    %2803 = vmatprep.subr.mxu0 0.0
    %2804 = vmatpush1.msra.mxu0 0.0
    %2805 = vmatprep.subr.mxu0 0.0
    %2806 = vmatpush1.msra.mxu0 0.0
    %2807 = vmatprep.subr.mxu0 0.0
    %2808 = vmatpush1.msra.mxu0 0.0
    %2809 = vmatprep.subr.mxu0 0.0
    %2810 = vmatpush1.msra.mxu0 0.0
    %2811 = vmatprep.subr.mxu0 0.0
    %2812 = vmatpush1.msra.mxu0 0.0
    %2813 = vmatprep.subr.mxu0 0.0
    %2814 = vmatpush1.msra.mxu0 0.0
    %2815 = vmatprep.subr.mxu0 0.0
    %2816 = vmatpush1.msra.mxu0 0.0
    %2817 = vmatprep.subr.mxu0 0.0
    %2818 = vmatpush1.msra.mxu0 0.0
    %2819 = vmatprep.subr.mxu0 0.0
    %2820 = vmatpush1.msra.mxu0 0.0
    %2821 = vmatprep.subr.mxu0 0.0
    %2822 = vmatpush1.msra.mxu0 0.0
    %2823 = vmatprep.subr.mxu0 0.0
    %2824 = vmatpush1.msra.mxu0 0.0
    %2825 = vmatprep.subr.mxu0 0.0
    %2826 = vmatpush1.msra.mxu0 0.0
    %2827 = vmatprep.subr.mxu0 0.0
    %2828 = vmatpush1.msra.mxu0 0.0
    %2829 = vmatprep.subr.mxu0 0.0
    %2830 = vmatpush1.msra.mxu0 0.0
    %2831 = vmatprep.subr.mxu0 0.0
    %2832 = vmatpush1.msra.mxu0 0.0
    %2833 = vmatprep.subr.mxu0 0.0
    %2834 = vmatpush1.msra.mxu0 0.0
    %2835 = vmatprep.subr.mxu0 0.0
    %2836 = vmatpush1.msra.mxu0 0.0
    %2837 = vmatprep.subr.mxu0 0.0
    %2838 = vmatpush1.msra.mxu0 0.0
    %2839 = vmatprep.subr.mxu0 0.0
    %2840 = vmatpush1.msra.mxu0 0.0
    %2841 = vmatprep.subr.mxu0 0.0
    %2842 = vmatpush1.msra.mxu0 0.0
    %2843 = vmatprep.mubr.f32.mxu0 0.0
    %v2844 = vand.u32 %v2599, 4294901760
    %v2845 = vsub.f32 %v2599, %v2844
    %2846 = vmatmul.mubr.f32.gmra.mrb[0].mxu0 %v2845
    %v2847 = vpop.f32.mrb[0].mxu0
    %v2848 = vadd.f32 %v2768, %v2847
    %v2849 = vpop.f32.mrb[0].mxu0
    %2850 = vdwg.mxu0
    %2851 = vmatprep.subr.mxu0 0.0
    %v2852 = vand.u32 %v44, 4294901760
    %2853 = vmatpush1.msra.mxu0 %v2852
    %2854 = vmatprep.subr.mxu0 0.0
    %v2855 = vand.u32 %v45, 4294901760
    %2856 = vmatpush1.msra.mxu0 %v2855
    %2857 = vmatprep.subr.mxu0 0.0
    %v2858 = vand.u32 %v46, 4294901760
    %2859 = vmatpush1.msra.mxu0 %v2858
    %2860 = vmatprep.subr.mxu0 0.0
    %v2861 = vand.u32 %v47, 4294901760
    %2862 = vmatpush1.msra.mxu0 %v2861
    %2863 = vmatprep.subr.mxu0 0.0
    %2864 = vmatpush1.msra.mxu0 0.0
    %2865 = vmatprep.subr.mxu0 0.0
    %2866 = vmatpush1.msra.mxu0 0.0
    %2867 = vmatprep.subr.mxu0 0.0
    %2868 = vmatpush1.msra.mxu0 0.0
    %2869 = vmatprep.subr.mxu0 0.0
    %2870 = vmatpush1.msra.mxu0 0.0
    %2871 = vmatprep.subr.mxu0 0.0
    %2872 = vmatpush1.msra.mxu0 0.0
    %2873 = vmatprep.subr.mxu0 0.0
    %2874 = vmatpush1.msra.mxu0 0.0
    %2875 = vmatprep.subr.mxu0 0.0
    %2876 = vmatpush1.msra.mxu0 0.0
    %2877 = vmatprep.subr.mxu0 0.0
    %2878 = vmatpush1.msra.mxu0 0.0
    %2879 = vmatprep.subr.mxu0 0.0
    %2880 = vmatpush1.msra.mxu0 0.0
    %2881 = vmatprep.subr.mxu0 0.0
    %2882 = vmatpush1.msra.mxu0 0.0
    %2883 = vmatprep.subr.mxu0 0.0
    %2884 = vmatpush1.msra.mxu0 0.0
    %2885 = vmatprep.subr.mxu0 0.0
    %2886 = vmatpush1.msra.mxu0 0.0
    %2887 = vmatprep.subr.mxu0 0.0
    %2888 = vmatpush1.msra.mxu0 0.0
    %2889 = vmatprep.subr.mxu0 0.0
    %2890 = vmatpush1.msra.mxu0 0.0
    %2891 = vmatprep.subr.mxu0 0.0
    %2892 = vmatpush1.msra.mxu0 0.0
    %2893 = vmatprep.subr.mxu0 0.0
    %2894 = vmatpush1.msra.mxu0 0.0
    %2895 = vmatprep.subr.mxu0 0.0
    %2896 = vmatpush1.msra.mxu0 0.0
    %2897 = vmatprep.subr.mxu0 0.0
    %2898 = vmatpush1.msra.mxu0 0.0
    %2899 = vmatprep.subr.mxu0 0.0
    %2900 = vmatpush1.msra.mxu0 0.0
    %2901 = vmatprep.subr.mxu0 0.0
    %2902 = vmatpush1.msra.mxu0 0.0
    %2903 = vmatprep.subr.mxu0 0.0
    %2904 = vmatpush1.msra.mxu0 0.0
    %2905 = vmatprep.subr.mxu0 0.0
    %2906 = vmatpush1.msra.mxu0 0.0
    %2907 = vmatprep.subr.mxu0 0.0
    %2908 = vmatpush1.msra.mxu0 0.0
    %2909 = vmatprep.subr.mxu0 0.0
    %2910 = vmatpush1.msra.mxu0 0.0
    %2911 = vmatprep.subr.mxu0 0.0
    %2912 = vmatpush1.msra.mxu0 0.0
    %2913 = vmatprep.subr.mxu0 0.0
    %2914 = vmatpush1.msra.mxu0 0.0
    %2915 = vmatprep.subr.mxu0 0.0
    %2916 = vmatpush1.msra.mxu0 0.0
    %2917 = vmatprep.subr.mxu0 0.0
    %2918 = vmatpush1.msra.mxu0 0.0
    %2919 = vmatprep.mubr.f32.mxu0 0.0
    %v2920 = vand.u32 %v2599, 4294901760
    %v2921 = vsub.f32 %v2599, %v2920
    %v2922 = vand.u32 %v2921, 4294901760
    %2923 = vmatmul.mubr.f32.gmra.mrb[0].mxu0 %v2922
    %v2924 = vpop.f32.mrb[0].mxu0
    %v2925 = vadd.f32 %v2848, %v2924
    %v2926 = vpop.f32.mrb[0].mxu0
    %2927 = vdwg.mxu0
    %2928 = vmatprep.subr.mxu0 0.0
    %v2929 = vand.u32 %v44, 4294901760
    %v2930 = vsub.f32 %v44, %v2929
    %v2931 = vand.u32 %v2930, 4294901760
    %2932 = vmatpush1.msra.mxu0 %v2931
    %2933 = vmatprep.subr.mxu0 0.0
    %v2934 = vand.u32 %v45, 4294901760
    %v2935 = vsub.f32 %v45, %v2934
    %v2936 = vand.u32 %v2935, 4294901760
    %2937 = vmatpush1.msra.mxu0 %v2936
    %2938 = vmatprep.subr.mxu0 0.0
    %v2939 = vand.u32 %v46, 4294901760
    %v2940 = vsub.f32 %v46, %v2939
    %v2941 = vand.u32 %v2940, 4294901760
    %2942 = vmatpush1.msra.mxu0 %v2941
    %2943 = vmatprep.subr.mxu0 0.0
    %v2944 = vand.u32 %v47, 4294901760
    %v2945 = vsub.f32 %v47, %v2944
    %v2946 = vand.u32 %v2945, 4294901760
    %2947 = vmatpush1.msra.mxu0 %v2946
    %2948 = vmatprep.subr.mxu0 0.0
    %2949 = vmatpush1.msra.mxu0 0.0
    %2950 = vmatprep.subr.mxu0 0.0
    %2951 = vmatpush1.msra.mxu0 0.0
    %2952 = vmatprep.subr.mxu0 0.0
    %2953 = vmatpush1.msra.mxu0 0.0
    %2954 = vmatprep.subr.mxu0 0.0
    %2955 = vmatpush1.msra.mxu0 0.0
    %2956 = vmatprep.subr.mxu0 0.0
    %2957 = vmatpush1.msra.mxu0 0.0
    %2958 = vmatprep.subr.mxu0 0.0
    %2959 = vmatpush1.msra.mxu0 0.0
    %2960 = vmatprep.subr.mxu0 0.0
    %2961 = vmatpush1.msra.mxu0 0.0
    %2962 = vmatprep.subr.mxu0 0.0
    %2963 = vmatpush1.msra.mxu0 0.0
    %2964 = vmatprep.subr.mxu0 0.0
    %2965 = vmatpush1.msra.mxu0 0.0
    %2966 = vmatprep.subr.mxu0 0.0
    %2967 = vmatpush1.msra.mxu0 0.0
    %2968 = vmatprep.subr.mxu0 0.0
    %2969 = vmatpush1.msra.mxu0 0.0
    %2970 = vmatprep.subr.mxu0 0.0
    %2971 = vmatpush1.msra.mxu0 0.0
    %2972 = vmatprep.subr.mxu0 0.0
    %2973 = vmatpush1.msra.mxu0 0.0
    %2974 = vmatprep.subr.mxu0 0.0
    %2975 = vmatpush1.msra.mxu0 0.0
    %2976 = vmatprep.subr.mxu0 0.0
    %2977 = vmatpush1.msra.mxu0 0.0
    %2978 = vmatprep.subr.mxu0 0.0
    %2979 = vmatpush1.msra.mxu0 0.0
    %2980 = vmatprep.subr.mxu0 0.0
    %2981 = vmatpush1.msra.mxu0 0.0
    %2982 = vmatprep.subr.mxu0 0.0
    %2983 = vmatpush1.msra.mxu0 0.0
    %2984 = vmatprep.subr.mxu0 0.0
    %2985 = vmatpush1.msra.mxu0 0.0
    %2986 = vmatprep.subr.mxu0 0.0
    %2987 = vmatpush1.msra.mxu0 0.0
    %2988 = vmatprep.subr.mxu0 0.0
    %2989 = vmatpush1.msra.mxu0 0.0
    %2990 = vmatprep.subr.mxu0 0.0
    %2991 = vmatpush1.msra.mxu0 0.0
    %2992 = vmatprep.subr.mxu0 0.0
    %2993 = vmatpush1.msra.mxu0 0.0
    %2994 = vmatprep.subr.mxu0 0.0
    %2995 = vmatpush1.msra.mxu0 0.0
    %2996 = vmatprep.subr.mxu0 0.0
    %2997 = vmatpush1.msra.mxu0 0.0
    %2998 = vmatprep.subr.mxu0 0.0
    %2999 = vmatpush1.msra.mxu0 0.0
    %3000 = vmatprep.subr.mxu0 0.0
    %3001 = vmatpush1.msra.mxu0 0.0
    %3002 = vmatprep.subr.mxu0 0.0
    %3003 = vmatpush1.msra.mxu0 0.0
    %3004 = vmatprep.mubr.f32.mxu0 0.0
    %v3005 = vand.u32 %v2599, 4294901760
    %3006 = vmatmul.mubr.f32.gmra.mrb[0].mxu0 %v3005
    %v3007 = vpop.f32.mrb[0].mxu0
    %v3008 = vadd.f32 %v2925, %v3007
    %v3009 = vpop.f32.mrb[0].mxu0
    %3010 = vdwg.mxu0
    %3011 = vmatprep.subr.mxu0 0.0
    %v3012 = vand.u32 %v44, 4294901760
    %3013 = vmatpush1.msra.mxu0 %v3012
    %3014 = vmatprep.subr.mxu0 0.0
    %v3015 = vand.u32 %v45, 4294901760
    %3016 = vmatpush1.msra.mxu0 %v3015
    %3017 = vmatprep.subr.mxu0 0.0
    %v3018 = vand.u32 %v46, 4294901760
    %3019 = vmatpush1.msra.mxu0 %v3018
    %3020 = vmatprep.subr.mxu0 0.0
    %v3021 = vand.u32 %v47, 4294901760
    %3022 = vmatpush1.msra.mxu0 %v3021
    %3023 = vmatprep.subr.mxu0 0.0
    %3024 = vmatpush1.msra.mxu0 0.0
    %3025 = vmatprep.subr.mxu0 0.0
    %3026 = vmatpush1.msra.mxu0 0.0
    %3027 = vmatprep.subr.mxu0 0.0
    %3028 = vmatpush1.msra.mxu0 0.0
    %3029 = vmatprep.subr.mxu0 0.0
    %3030 = vmatpush1.msra.mxu0 0.0
    %3031 = vmatprep.subr.mxu0 0.0
    %3032 = vmatpush1.msra.mxu0 0.0
    %3033 = vmatprep.subr.mxu0 0.0
    %3034 = vmatpush1.msra.mxu0 0.0
    %3035 = vmatprep.subr.mxu0 0.0
    %3036 = vmatpush1.msra.mxu0 0.0
    %3037 = vmatprep.subr.mxu0 0.0
    %3038 = vmatpush1.msra.mxu0 0.0
    %3039 = vmatprep.subr.mxu0 0.0
    %3040 = vmatpush1.msra.mxu0 0.0
    %3041 = vmatprep.subr.mxu0 0.0
    %3042 = vmatpush1.msra.mxu0 0.0
    %3043 = vmatprep.subr.mxu0 0.0
    %3044 = vmatpush1.msra.mxu0 0.0
    %3045 = vmatprep.subr.mxu0 0.0
    %3046 = vmatpush1.msra.mxu0 0.0
    %3047 = vmatprep.subr.mxu0 0.0
    %3048 = vmatpush1.msra.mxu0 0.0
    %3049 = vmatprep.subr.mxu0 0.0
    %3050 = vmatpush1.msra.mxu0 0.0
    %3051 = vmatprep.subr.mxu0 0.0
    %3052 = vmatpush1.msra.mxu0 0.0
    %3053 = vmatprep.subr.mxu0 0.0
    %3054 = vmatpush1.msra.mxu0 0.0
    %3055 = vmatprep.subr.mxu0 0.0
    %3056 = vmatpush1.msra.mxu0 0.0
    %3057 = vmatprep.subr.mxu0 0.0
    %3058 = vmatpush1.msra.mxu0 0.0
    %3059 = vmatprep.subr.mxu0 0.0
    %3060 = vmatpush1.msra.mxu0 0.0
    %3061 = vmatprep.subr.mxu0 0.0
    %3062 = vmatpush1.msra.mxu0 0.0
    %3063 = vmatprep.subr.mxu0 0.0
    %3064 = vmatpush1.msra.mxu0 0.0
    %3065 = vmatprep.subr.mxu0 0.0
    %3066 = vmatpush1.msra.mxu0 0.0
    %3067 = vmatprep.subr.mxu0 0.0
    %3068 = vmatpush1.msra.mxu0 0.0
    %3069 = vmatprep.subr.mxu0 0.0
    %3070 = vmatpush1.msra.mxu0 0.0
    %3071 = vmatprep.subr.mxu0 0.0
    %3072 = vmatpush1.msra.mxu0 0.0
    %3073 = vmatprep.subr.mxu0 0.0
    %3074 = vmatpush1.msra.mxu0 0.0
    %3075 = vmatprep.subr.mxu0 0.0
    %3076 = vmatpush1.msra.mxu0 0.0
    %3077 = vmatprep.subr.mxu0 0.0
    %3078 = vmatpush1.msra.mxu0 0.0
    %3079 = vmatprep.mubr.f32.mxu0 0.0
    %v3080 = vand.u32 %v2599, 4294901760
    %3081 = vmatmul.mubr.f32.gmra.mrb[0].mxu0 %v3080
    %v3082 = vpop.f32.mrb[0].mxu0
    %v3083 = vadd.f32 %v3008, %v3082
    %v3084 = vpop.f32.mrb[0].mxu0
    %3085 = vdwg.mxu0
    %v3086 = vtanh.pop %v3083
    %v3087 = vmul.f32 %v3086, %v554
    %v3088 = vsel %vm557, %v3087, 0.0
    %3089 = vadd.xlane.f32.xlu0 %v3088
    %v3090 = vpop.xlane.xlu0 %3089
    %vm3091 = vcmp.eq.s32.totalorder %v51, 5
    %v3092 = vsel %vm3091, 1, 0
    %vm3093 = vcmp.eq.s32.totalorder %v3092, 1
    %v3094 = vsel %vm3093, %v3090, 0.0
    %v3095 = vadd.f32 %v2589, %v3094
    %v3096 = vld [vmem:[#allocation2 + $0x1] sm:$0x1]
    %v3097 = vunpack.c.l.bf16 %v3096
    %v3100 = vunpack.c.l.s4 1983009808
    %v3101 = vunpack.c.0.s8 %v3100
    %v3102 = vlaneseq
    %v3103 = vshrl.u32 %v3102, 7
    %v3104 = vsub.s32 %v3101, %v3103
    %v3105 = vrot.slane %v3097, %v3104
    %3106 = vrot.lane.b32.xlu0 %v3105, 64
    %v3107 = vpop.permute.xlu0 %3106
    %v3108 = vsel %vm60, %v3107, 0
    %3110 = vmatprep.subr.mxu0 0.0
    %v3111 = vand.u32 %v44, 4294901760
    %3112 = vmatpush1.msra.mxu0 %v3111
    %3113 = vmatprep.subr.mxu0 0.0
    %v3114 = vand.u32 %v45, 4294901760
    %3115 = vmatpush1.msra.mxu0 %v3114
    %3116 = vmatprep.subr.mxu0 0.0
    %v3117 = vand.u32 %v46, 4294901760
    %3118 = vmatpush1.msra.mxu0 %v3117
    %3119 = vmatprep.subr.mxu0 0.0
    %v3120 = vand.u32 %v47, 4294901760
    %3121 = vmatpush1.msra.mxu0 %v3120
    %3122 = vmatprep.subr.mxu0 0.0
    %3123 = vmatpush1.msra.mxu0 0.0
    %3124 = vmatprep.subr.mxu0 0.0
    %3125 = vmatpush1.msra.mxu0 0.0
    %3126 = vmatprep.subr.mxu0 0.0
    %3127 = vmatpush1.msra.mxu0 0.0
    %3128 = vmatprep.subr.mxu0 0.0
    %3129 = vmatpush1.msra.mxu0 0.0
    %3130 = vmatprep.subr.mxu0 0.0
    %3131 = vmatpush1.msra.mxu0 0.0
    %3132 = vmatprep.subr.mxu0 0.0
    %3133 = vmatpush1.msra.mxu0 0.0
    %3134 = vmatprep.subr.mxu0 0.0
    %3135 = vmatpush1.msra.mxu0 0.0
    %3136 = vmatprep.subr.mxu0 0.0
    %3137 = vmatpush1.msra.mxu0 0.0
    %3138 = vmatprep.subr.mxu0 0.0
    %3139 = vmatpush1.msra.mxu0 0.0
    %3140 = vmatprep.subr.mxu0 0.0
    %3141 = vmatpush1.msra.mxu0 0.0
    %3142 = vmatprep.subr.mxu0 0.0
    %3143 = vmatpush1.msra.mxu0 0.0
    %3144 = vmatprep.subr.mxu0 0.0
    %3145 = vmatpush1.msra.mxu0 0.0
    %3146 = vmatprep.subr.mxu0 0.0
    %3147 = vmatpush1.msra.mxu0 0.0
    %3148 = vmatprep.subr.mxu0 0.0
    %3149 = vmatpush1.msra.mxu0 0.0
    %3150 = vmatprep.subr.mxu0 0.0
    %3151 = vmatpush1.msra.mxu0 0.0
    %3152 = vmatprep.subr.mxu0 0.0
    %3153 = vmatpush1.msra.mxu0 0.0
    %3154 = vmatprep.subr.mxu0 0.0
    %3155 = vmatpush1.msra.mxu0 0.0
    %3156 = vmatprep.subr.mxu0 0.0
    %3157 = vmatpush1.msra.mxu0 0.0
    %3158 = vmatprep.subr.mxu0 0.0
    %3159 = vmatpush1.msra.mxu0 0.0
    %3160 = vmatprep.subr.mxu0 0.0
    %3161 = vmatpush1.msra.mxu0 0.0
    %3162 = vmatprep.subr.mxu0 0.0
    %3163 = vmatpush1.msra.mxu0 0.0
    %3164 = vmatprep.subr.mxu0 0.0
    %3165 = vmatpush1.msra.mxu0 0.0
    %3166 = vmatprep.subr.mxu0 0.0
    %3167 = vmatpush1.msra.mxu0 0.0
    %3168 = vmatprep.subr.mxu0 0.0
    %3169 = vmatpush1.msra.mxu0 0.0
    %3170 = vmatprep.subr.mxu0 0.0
    %3171 = vmatpush1.msra.mxu0 0.0
    %3172 = vmatprep.subr.mxu0 0.0
    %3173 = vmatpush1.msra.mxu0 0.0
    %3174 = vmatprep.subr.mxu0 0.0
    %3175 = vmatpush1.msra.mxu0 0.0
    %3176 = vmatprep.subr.mxu0 0.0
    %3177 = vmatpush1.msra.mxu0 0.0
    %3178 = vmatprep.mubr.f32.mxu0 0.0
    %v3179 = vand.u32 %v3108, 4294901760
    %v3180 = vsub.f32 %v3108, %v3179
    %v3181 = vand.u32 %v3180, 4294901760
    %v3182 = vsub.f32 %v3180, %v3181
    %v3183 = vand.u32 %v3182, 4294901760
    %3184 = vmatmul.mubr.f32.gmra.mrb[0].mxu0 %v3183
    %v3185 = vpop.f32.mrb[0].mxu0
    %v3186 = vadd.f32 %v58, %v3185
    %v3187 = vpop.f32.mrb[0].mxu0
    %3188 = vdwg.mxu0
    %3189 = vmatprep.subr.mxu0 0.0
    %v3190 = vand.u32 %v44, 4294901760
    %v3191 = vsub.f32 %v44, %v3190
    %v3192 = vand.u32 %v3191, 4294901760
    %v3193 = vsub.f32 %v3191, %v3192
    %v3194 = vand.u32 %v3193, 4294901760
    %3195 = vmatpush1.msra.mxu0 %v3194
    %3196 = vmatprep.subr.mxu0 0.0
    %v3197 = vand.u32 %v45, 4294901760
    %v3198 = vsub.f32 %v45, %v3197
    %v3199 = vand.u32 %v3198, 4294901760
    %v3200 = vsub.f32 %v3198, %v3199
    %v3201 = vand.u32 %v3200, 4294901760
    %3202 = vmatpush1.msra.mxu0 %v3201
    %3203 = vmatprep.subr.mxu0 0.0
    %v3204 = vand.u32 %v46, 4294901760
    %v3205 = vsub.f32 %v46, %v3204
    %v3206 = vand.u32 %v3205, 4294901760
    %v3207 = vsub.f32 %v3205, %v3206
    %v3208 = vand.u32 %v3207, 4294901760
    %3209 = vmatpush1.msra.mxu0 %v3208
    %3210 = vmatprep.subr.mxu0 0.0
    %v3211 = vand.u32 %v47, 4294901760
    %v3212 = vsub.f32 %v47, %v3211
    %v3213 = vand.u32 %v3212, 4294901760
    %v3214 = vsub.f32 %v3212, %v3213
    %v3215 = vand.u32 %v3214, 4294901760
    %3216 = vmatpush1.msra.mxu0 %v3215
    %3217 = vmatprep.subr.mxu0 0.0
    %3218 = vmatpush1.msra.mxu0 0.0
    %3219 = vmatprep.subr.mxu0 0.0
    %3220 = vmatpush1.msra.mxu0 0.0
    %3221 = vmatprep.subr.mxu0 0.0
    %3222 = vmatpush1.msra.mxu0 0.0
    %3223 = vmatprep.subr.mxu0 0.0
    %3224 = vmatpush1.msra.mxu0 0.0
    %3225 = vmatprep.subr.mxu0 0.0
    %3226 = vmatpush1.msra.mxu0 0.0
    %3227 = vmatprep.subr.mxu0 0.0
    %3228 = vmatpush1.msra.mxu0 0.0
    %3229 = vmatprep.subr.mxu0 0.0
    %3230 = vmatpush1.msra.mxu0 0.0
    %3231 = vmatprep.subr.mxu0 0.0
    %3232 = vmatpush1.msra.mxu0 0.0
    %3233 = vmatprep.subr.mxu0 0.0
    %3234 = vmatpush1.msra.mxu0 0.0
    %3235 = vmatprep.subr.mxu0 0.0
    %3236 = vmatpush1.msra.mxu0 0.0
    %3237 = vmatprep.subr.mxu0 0.0
    %3238 = vmatpush1.msra.mxu0 0.0
    %3239 = vmatprep.subr.mxu0 0.0
    %3240 = vmatpush1.msra.mxu0 0.0
    %3241 = vmatprep.subr.mxu0 0.0
    %3242 = vmatpush1.msra.mxu0 0.0
    %3243 = vmatprep.subr.mxu0 0.0
    %3244 = vmatpush1.msra.mxu0 0.0
    %3245 = vmatprep.subr.mxu0 0.0
    %3246 = vmatpush1.msra.mxu0 0.0
    %3247 = vmatprep.subr.mxu0 0.0
    %3248 = vmatpush1.msra.mxu0 0.0
    %3249 = vmatprep.subr.mxu0 0.0
    %3250 = vmatpush1.msra.mxu0 0.0
    %3251 = vmatprep.subr.mxu0 0.0
    %3252 = vmatpush1.msra.mxu0 0.0
    %3253 = vmatprep.subr.mxu0 0.0
    %3254 = vmatpush1.msra.mxu0 0.0
    %3255 = vmatprep.subr.mxu0 0.0
    %3256 = vmatpush1.msra.mxu0 0.0
    %3257 = vmatprep.subr.mxu0 0.0
    %3258 = vmatpush1.msra.mxu0 0.0
    %3259 = vmatprep.subr.mxu0 0.0
    %3260 = vmatpush1.msra.mxu0 0.0
    %3261 = vmatprep.subr.mxu0 0.0
    %3262 = vmatpush1.msra.mxu0 0.0
    %3263 = vmatprep.subr.mxu0 0.0
    %3264 = vmatpush1.msra.mxu0 0.0
    %3265 = vmatprep.subr.mxu0 0.0
    %3266 = vmatpush1.msra.mxu0 0.0
    %3267 = vmatprep.subr.mxu0 0.0
    %3268 = vmatpush1.msra.mxu0 0.0
    %3269 = vmatprep.subr.mxu0 0.0
    %3270 = vmatpush1.msra.mxu0 0.0
    %3271 = vmatprep.subr.mxu0 0.0
    %3272 = vmatpush1.msra.mxu0 0.0
    %3273 = vmatprep.mubr.f32.mxu0 0.0
    %v3274 = vand.u32 %v3108, 4294901760
    %3275 = vmatmul.mubr.f32.gmra.mrb[0].mxu0 %v3274
    %v3276 = vpop.f32.mrb[0].mxu0
    %v3277 = vadd.f32 %v3186, %v3276
    %v3278 = vpop.f32.mrb[0].mxu0
    %3279 = vdwg.mxu0
    %3280 = vmatprep.subr.mxu0 0.0
    %v3281 = vand.u32 %v44, 4294901760
    %v3282 = vsub.f32 %v44, %v3281
    %3283 = vmatpush1.msra.mxu0 %v3282
    %3284 = vmatprep.subr.mxu0 0.0
    %v3285 = vand.u32 %v45, 4294901760
    %v3286 = vsub.f32 %v45, %v3285
    %3287 = vmatpush1.msra.mxu0 %v3286
    %3288 = vmatprep.subr.mxu0 0.0
    %v3289 = vand.u32 %v46, 4294901760
    %v3290 = vsub.f32 %v46, %v3289
    %3291 = vmatpush1.msra.mxu0 %v3290
    %3292 = vmatprep.subr.mxu0 0.0
    %v3293 = vand.u32 %v47, 4294901760
    %v3294 = vsub.f32 %v47, %v3293
    %3295 = vmatpush1.msra.mxu0 %v3294
    %3296 = vmatprep.subr.mxu0 0.0
    %3297 = vmatpush1.msra.mxu0 0.0
    %3298 = vmatprep.subr.mxu0 0.0
    %3299 = vmatpush1.msra.mxu0 0.0
    %3300 = vmatprep.subr.mxu0 0.0
    %3301 = vmatpush1.msra.mxu0 0.0
    %3302 = vmatprep.subr.mxu0 0.0
    %3303 = vmatpush1.msra.mxu0 0.0
    %3304 = vmatprep.subr.mxu0 0.0
    %3305 = vmatpush1.msra.mxu0 0.0
    %3306 = vmatprep.subr.mxu0 0.0
    %3307 = vmatpush1.msra.mxu0 0.0
    %3308 = vmatprep.subr.mxu0 0.0
    %3309 = vmatpush1.msra.mxu0 0.0
    %3310 = vmatprep.subr.mxu0 0.0
    %3311 = vmatpush1.msra.mxu0 0.0
    %3312 = vmatprep.subr.mxu0 0.0
    %3313 = vmatpush1.msra.mxu0 0.0
    %3314 = vmatprep.subr.mxu0 0.0
    %3315 = vmatpush1.msra.mxu0 0.0
    %3316 = vmatprep.subr.mxu0 0.0
    %3317 = vmatpush1.msra.mxu0 0.0
    %3318 = vmatprep.subr.mxu0 0.0
    %3319 = vmatpush1.msra.mxu0 0.0
    %3320 = vmatprep.subr.mxu0 0.0
    %3321 = vmatpush1.msra.mxu0 0.0
    %3322 = vmatprep.subr.mxu0 0.0
    %3323 = vmatpush1.msra.mxu0 0.0
    %3324 = vmatprep.subr.mxu0 0.0
    %3325 = vmatpush1.msra.mxu0 0.0
    %3326 = vmatprep.subr.mxu0 0.0
    %3327 = vmatpush1.msra.mxu0 0.0
    %3328 = vmatprep.subr.mxu0 0.0
    %3329 = vmatpush1.msra.mxu0 0.0
    %3330 = vmatprep.subr.mxu0 0.0
    %3331 = vmatpush1.msra.mxu0 0.0
    %3332 = vmatprep.subr.mxu0 0.0
    %3333 = vmatpush1.msra.mxu0 0.0
    %3334 = vmatprep.subr.mxu0 0.0
    %3335 = vmatpush1.msra.mxu0 0.0
    %3336 = vmatprep.subr.mxu0 0.0
    %3337 = vmatpush1.msra.mxu0 0.0
    %3338 = vmatprep.subr.mxu0 0.0
    %3339 = vmatpush1.msra.mxu0 0.0
    %3340 = vmatprep.subr.mxu0 0.0
    %3341 = vmatpush1.msra.mxu0 0.0
    %3342 = vmatprep.subr.mxu0 0.0
    %3343 = vmatpush1.msra.mxu0 0.0
    %3344 = vmatprep.subr.mxu0 0.0
    %3345 = vmatpush1.msra.mxu0 0.0
    %3346 = vmatprep.subr.mxu0 0.0
    %3347 = vmatpush1.msra.mxu0 0.0
    %3348 = vmatprep.subr.mxu0 0.0
    %3349 = vmatpush1.msra.mxu0 0.0
    %3350 = vmatprep.subr.mxu0 0.0
    %3351 = vmatpush1.msra.mxu0 0.0
    %3352 = vmatprep.mubr.f32.mxu0 0.0
    %v3353 = vand.u32 %v3108, 4294901760
    %v3354 = vsub.f32 %v3108, %v3353
    %3355 = vmatmul.mubr.f32.gmra.mrb[0].mxu0 %v3354
    %v3356 = vpop.f32.mrb[0].mxu0
    %v3357 = vadd.f32 %v3277, %v3356
    %v3358 = vpop.f32.mrb[0].mxu0
    %3359 = vdwg.mxu0
    %3360 = vmatprep.subr.mxu0 0.0
    %v3361 = vand.u32 %v44, 4294901760
    %3362 = vmatpush1.msra.mxu0 %v3361
    %3363 = vmatprep.subr.mxu0 0.0
    %v3364 = vand.u32 %v45, 4294901760
    %3365 = vmatpush1.msra.mxu0 %v3364
    %3366 = vmatprep.subr.mxu0 0.0
    %v3367 = vand.u32 %v46, 4294901760
    %3368 = vmatpush1.msra.mxu0 %v3367
    %3369 = vmatprep.subr.mxu0 0.0
    %v3370 = vand.u32 %v47, 4294901760
    %3371 = vmatpush1.msra.mxu0 %v3370
    %3372 = vmatprep.subr.mxu0 0.0
    %3373 = vmatpush1.msra.mxu0 0.0
    %3374 = vmatprep.subr.mxu0 0.0
    %3375 = vmatpush1.msra.mxu0 0.0
    %3376 = vmatprep.subr.mxu0 0.0
    %3377 = vmatpush1.msra.mxu0 0.0
    %3378 = vmatprep.subr.mxu0 0.0
    %3379 = vmatpush1.msra.mxu0 0.0
    %3380 = vmatprep.subr.mxu0 0.0
    %3381 = vmatpush1.msra.mxu0 0.0
    %3382 = vmatprep.subr.mxu0 0.0
    %3383 = vmatpush1.msra.mxu0 0.0
    %3384 = vmatprep.subr.mxu0 0.0
    %3385 = vmatpush1.msra.mxu0 0.0
    %3386 = vmatprep.subr.mxu0 0.0
    %3387 = vmatpush1.msra.mxu0 0.0
    %3388 = vmatprep.subr.mxu0 0.0
    %3389 = vmatpush1.msra.mxu0 0.0
    %3390 = vmatprep.subr.mxu0 0.0
    %3391 = vmatpush1.msra.mxu0 0.0
    %3392 = vmatprep.subr.mxu0 0.0
    %3393 = vmatpush1.msra.mxu0 0.0
    %3394 = vmatprep.subr.mxu0 0.0
    %3395 = vmatpush1.msra.mxu0 0.0
    %3396 = vmatprep.subr.mxu0 0.0
    %3397 = vmatpush1.msra.mxu0 0.0
    %3398 = vmatprep.subr.mxu0 0.0
    %3399 = vmatpush1.msra.mxu0 0.0
    %3400 = vmatprep.subr.mxu0 0.0
    %3401 = vmatpush1.msra.mxu0 0.0
    %3402 = vmatprep.subr.mxu0 0.0
    %3403 = vmatpush1.msra.mxu0 0.0
    %3404 = vmatprep.subr.mxu0 0.0
    %3405 = vmatpush1.msra.mxu0 0.0
    %3406 = vmatprep.subr.mxu0 0.0
    %3407 = vmatpush1.msra.mxu0 0.0
    %3408 = vmatprep.subr.mxu0 0.0
    %3409 = vmatpush1.msra.mxu0 0.0
    %3410 = vmatprep.subr.mxu0 0.0
    %3411 = vmatpush1.msra.mxu0 0.0
    %3412 = vmatprep.subr.mxu0 0.0
    %3413 = vmatpush1.msra.mxu0 0.0
    %3414 = vmatprep.subr.mxu0 0.0
    %3415 = vmatpush1.msra.mxu0 0.0
    %3416 = vmatprep.subr.mxu0 0.0
    %3417 = vmatpush1.msra.mxu0 0.0
    %3418 = vmatprep.subr.mxu0 0.0
    %3419 = vmatpush1.msra.mxu0 0.0
    %3420 = vmatprep.subr.mxu0 0.0
    %3421 = vmatpush1.msra.mxu0 0.0
    %3422 = vmatprep.subr.mxu0 0.0
    %3423 = vmatpush1.msra.mxu0 0.0
    %3424 = vmatprep.subr.mxu0 0.0
    %3425 = vmatpush1.msra.mxu0 0.0
    %3426 = vmatprep.subr.mxu0 0.0
    %3427 = vmatpush1.msra.mxu0 0.0
    %3428 = vmatprep.mubr.f32.mxu0 0.0
    %v3429 = vand.u32 %v3108, 4294901760
    %v3430 = vsub.f32 %v3108, %v3429
    %v3431 = vand.u32 %v3430, 4294901760
    %3432 = vmatmul.mubr.f32.gmra.mrb[0].mxu0 %v3431
    %v3433 = vpop.f32.mrb[0].mxu0
    %v3434 = vadd.f32 %v3357, %v3433
    %v3435 = vpop.f32.mrb[0].mxu0
    %3436 = vdwg.mxu0
    %3437 = vmatprep.subr.mxu0 0.0
    %v3438 = vand.u32 %v44, 4294901760
    %v3439 = vsub.f32 %v44, %v3438
    %v3440 = vand.u32 %v3439, 4294901760
    %3441 = vmatpush1.msra.mxu0 %v3440
    %3442 = vmatprep.subr.mxu0 0.0
    %v3443 = vand.u32 %v45, 4294901760
    %v3444 = vsub.f32 %v45, %v3443
    %v3445 = vand.u32 %v3444, 4294901760
    %3446 = vmatpush1.msra.mxu0 %v3445
    %3447 = vmatprep.subr.mxu0 0.0
    %v3448 = vand.u32 %v46, 4294901760
    %v3449 = vsub.f32 %v46, %v3448
    %v3450 = vand.u32 %v3449, 4294901760
    %3451 = vmatpush1.msra.mxu0 %v3450
    %3452 = vmatprep.subr.mxu0 0.0
    %v3453 = vand.u32 %v47, 4294901760
    %v3454 = vsub.f32 %v47, %v3453
    %v3455 = vand.u32 %v3454, 4294901760
    %3456 = vmatpush1.msra.mxu0 %v3455
    %3457 = vmatprep.subr.mxu0 0.0
    %3458 = vmatpush1.msra.mxu0 0.0
    %3459 = vmatprep.subr.mxu0 0.0
    %3460 = vmatpush1.msra.mxu0 0.0
    %3461 = vmatprep.subr.mxu0 0.0
    %3462 = vmatpush1.msra.mxu0 0.0
    %3463 = vmatprep.subr.mxu0 0.0
    %3464 = vmatpush1.msra.mxu0 0.0
    %3465 = vmatprep.subr.mxu0 0.0
    %3466 = vmatpush1.msra.mxu0 0.0
    %3467 = vmatprep.subr.mxu0 0.0
    %3468 = vmatpush1.msra.mxu0 0.0
    %3469 = vmatprep.subr.mxu0 0.0
    %3470 = vmatpush1.msra.mxu0 0.0
    %3471 = vmatprep.subr.mxu0 0.0
    %3472 = vmatpush1.msra.mxu0 0.0
    %3473 = vmatprep.subr.mxu0 0.0
    %3474 = vmatpush1.msra.mxu0 0.0
    %3475 = vmatprep.subr.mxu0 0.0
    %3476 = vmatpush1.msra.mxu0 0.0
    %3477 = vmatprep.subr.mxu0 0.0
    %3478 = vmatpush1.msra.mxu0 0.0
    %3479 = vmatprep.subr.mxu0 0.0
    %3480 = vmatpush1.msra.mxu0 0.0
    %3481 = vmatprep.subr.mxu0 0.0
    %3482 = vmatpush1.msra.mxu0 0.0
    %3483 = vmatprep.subr.mxu0 0.0
    %3484 = vmatpush1.msra.mxu0 0.0
    %3485 = vmatprep.subr.mxu0 0.0
    %3486 = vmatpush1.msra.mxu0 0.0
    %3487 = vmatprep.subr.mxu0 0.0
    %3488 = vmatpush1.msra.mxu0 0.0
    %3489 = vmatprep.subr.mxu0 0.0
    %3490 = vmatpush1.msra.mxu0 0.0
    %3491 = vmatprep.subr.mxu0 0.0
    %3492 = vmatpush1.msra.mxu0 0.0
    %3493 = vmatprep.subr.mxu0 0.0
    %3494 = vmatpush1.msra.mxu0 0.0
    %3495 = vmatprep.subr.mxu0 0.0
    %3496 = vmatpush1.msra.mxu0 0.0
    %3497 = vmatprep.subr.mxu0 0.0
    %3498 = vmatpush1.msra.mxu0 0.0
    %3499 = vmatprep.subr.mxu0 0.0
    %3500 = vmatpush1.msra.mxu0 0.0
    %3501 = vmatprep.subr.mxu0 0.0
    %3502 = vmatpush1.msra.mxu0 0.0
    %3503 = vmatprep.subr.mxu0 0.0
    %3504 = vmatpush1.msra.mxu0 0.0
    %3505 = vmatprep.subr.mxu0 0.0
    %3506 = vmatpush1.msra.mxu0 0.0
    %3507 = vmatprep.subr.mxu0 0.0
    %3508 = vmatpush1.msra.mxu0 0.0
    %3509 = vmatprep.subr.mxu0 0.0
    %3510 = vmatpush1.msra.mxu0 0.0
    %3511 = vmatprep.subr.mxu0 0.0
    %3512 = vmatpush1.msra.mxu0 0.0
    %3513 = vmatprep.mubr.f32.mxu0 0.0
    %v3514 = vand.u32 %v3108, 4294901760
    %3515 = vmatmul.mubr.f32.gmra.mrb[0].mxu0 %v3514
    %v3516 = vpop.f32.mrb[0].mxu0
    %v3517 = vadd.f32 %v3434, %v3516
    %v3518 = vpop.f32.mrb[0].mxu0
    %3519 = vdwg.mxu0
    %3520 = vmatprep.subr.mxu0 0.0
    %v3521 = vand.u32 %v44, 4294901760
    %3522 = vmatpush1.msra.mxu0 %v3521
    %3523 = vmatprep.subr.mxu0 0.0
    %v3524 = vand.u32 %v45, 4294901760
    %3525 = vmatpush1.msra.mxu0 %v3524
    %3526 = vmatprep.subr.mxu0 0.0
    %v3527 = vand.u32 %v46, 4294901760
    %3528 = vmatpush1.msra.mxu0 %v3527
    %3529 = vmatprep.subr.mxu0 0.0
    %v3530 = vand.u32 %v47, 4294901760
    %3531 = vmatpush1.msra.mxu0 %v3530
    %3532 = vmatprep.subr.mxu0 0.0
    %3533 = vmatpush1.msra.mxu0 0.0
    %3534 = vmatprep.subr.mxu0 0.0
    %3535 = vmatpush1.msra.mxu0 0.0
    %3536 = vmatprep.subr.mxu0 0.0
    %3537 = vmatpush1.msra.mxu0 0.0
    %3538 = vmatprep.subr.mxu0 0.0
    %3539 = vmatpush1.msra.mxu0 0.0
    %3540 = vmatprep.subr.mxu0 0.0
    %3541 = vmatpush1.msra.mxu0 0.0
    %3542 = vmatprep.subr.mxu0 0.0
    %3543 = vmatpush1.msra.mxu0 0.0
    %3544 = vmatprep.subr.mxu0 0.0
    %3545 = vmatpush1.msra.mxu0 0.0
    %3546 = vmatprep.subr.mxu0 0.0
    %3547 = vmatpush1.msra.mxu0 0.0
    %3548 = vmatprep.subr.mxu0 0.0
    %3549 = vmatpush1.msra.mxu0 0.0
    %3550 = vmatprep.subr.mxu0 0.0
    %3551 = vmatpush1.msra.mxu0 0.0
    %3552 = vmatprep.subr.mxu0 0.0
    %3553 = vmatpush1.msra.mxu0 0.0
    %3554 = vmatprep.subr.mxu0 0.0
    %3555 = vmatpush1.msra.mxu0 0.0
    %3556 = vmatprep.subr.mxu0 0.0
    %3557 = vmatpush1.msra.mxu0 0.0
    %3558 = vmatprep.subr.mxu0 0.0
    %3559 = vmatpush1.msra.mxu0 0.0
    %3560 = vmatprep.subr.mxu0 0.0
    %3561 = vmatpush1.msra.mxu0 0.0
    %3562 = vmatprep.subr.mxu0 0.0
    %3563 = vmatpush1.msra.mxu0 0.0
    %3564 = vmatprep.subr.mxu0 0.0
    %3565 = vmatpush1.msra.mxu0 0.0
    %3566 = vmatprep.subr.mxu0 0.0
    %3567 = vmatpush1.msra.mxu0 0.0
    %3568 = vmatprep.subr.mxu0 0.0
    %3569 = vmatpush1.msra.mxu0 0.0
    %3570 = vmatprep.subr.mxu0 0.0
    %3571 = vmatpush1.msra.mxu0 0.0
    %3572 = vmatprep.subr.mxu0 0.0
    %3573 = vmatpush1.msra.mxu0 0.0
    %3574 = vmatprep.subr.mxu0 0.0
    %3575 = vmatpush1.msra.mxu0 0.0
    %3576 = vmatprep.subr.mxu0 0.0
    %3577 = vmatpush1.msra.mxu0 0.0
    %3578 = vmatprep.subr.mxu0 0.0
    %3579 = vmatpush1.msra.mxu0 0.0
    %3580 = vmatprep.subr.mxu0 0.0
    %3581 = vmatpush1.msra.mxu0 0.0
    %3582 = vmatprep.subr.mxu0 0.0
    %3583 = vmatpush1.msra.mxu0 0.0
    %3584 = vmatprep.subr.mxu0 0.0
    %3585 = vmatpush1.msra.mxu0 0.0
    %3586 = vmatprep.subr.mxu0 0.0
    %3587 = vmatpush1.msra.mxu0 0.0
    %3588 = vmatprep.mubr.f32.mxu0 0.0
    %v3589 = vand.u32 %v3108, 4294901760
    %3590 = vmatmul.mubr.f32.gmra.mrb[0].mxu0 %v3589
    %v3591 = vpop.f32.mrb[0].mxu0
    %v3592 = vadd.f32 %v3517, %v3591
    %v3593 = vpop.f32.mrb[0].mxu0
    %3594 = vdwg.mxu0
    %v3595 = vtanh.pop %v3592
    %v3596 = vmul.f32 %v3595, %v554
    %v3597 = vsel %vm557, %v3596, 0.0
    %3598 = vadd.xlane.f32.xlu0 %v3597
    %v3599 = vpop.xlane.xlu0 %3598
    %vm3600 = vcmp.eq.s32.totalorder %v51, 6
    %v3601 = vsel %vm3600, 1, 0
    %vm3602 = vcmp.eq.s32.totalorder %v3601, 1
    %v3603 = vsel %vm3602, %v3599, 0.0
    %v3604 = vadd.f32 %v3095, %v3603
    %v3605 = vld [vmem:[#allocation2 + $0x1] sm:$0x1]
    %v3606 = vunpack.c.l.bf16 %v3605
    %v3609 = vunpack.c.l.s4 1983009808
    %v3610 = vunpack.c.0.s8 %v3609
    %v3611 = vlaneseq
    %v3612 = vshrl.u32 %v3611, 7
    %v3613 = vsub.s32 %v3610, %v3612
    %v3614 = vrot.slane %v3606, %v3613
    %3615 = vrot.lane.b32.xlu0 %v3614, 32
    %v3616 = vpop.permute.xlu0 %3615
    %v3617 = vsel %vm60, %v3616, 0
    %3619 = vmatprep.subr.mxu0 0.0
    %v3620 = vand.u32 %v44, 4294901760
    %3621 = vmatpush1.msra.mxu0 %v3620
    %3622 = vmatprep.subr.mxu0 0.0
    %v3623 = vand.u32 %v45, 4294901760
    %3624 = vmatpush1.msra.mxu0 %v3623
    %3625 = vmatprep.subr.mxu0 0.0
    %v3626 = vand.u32 %v46, 4294901760
    %3627 = vmatpush1.msra.mxu0 %v3626
    %3628 = vmatprep.subr.mxu0 0.0
    %v3629 = vand.u32 %v47, 4294901760
    %3630 = vmatpush1.msra.mxu0 %v3629
    %3631 = vmatprep.subr.mxu0 0.0
    %3632 = vmatpush1.msra.mxu0 0.0
    %3633 = vmatprep.subr.mxu0 0.0
    %3634 = vmatpush1.msra.mxu0 0.0
    %3635 = vmatprep.subr.mxu0 0.0
    %3636 = vmatpush1.msra.mxu0 0.0
    %3637 = vmatprep.subr.mxu0 0.0
    %3638 = vmatpush1.msra.mxu0 0.0
    %3639 = vmatprep.subr.mxu0 0.0
    %3640 = vmatpush1.msra.mxu0 0.0
    %3641 = vmatprep.subr.mxu0 0.0
    %3642 = vmatpush1.msra.mxu0 0.0
    %3643 = vmatprep.subr.mxu0 0.0
    %3644 = vmatpush1.msra.mxu0 0.0
    %3645 = vmatprep.subr.mxu0 0.0
    %3646 = vmatpush1.msra.mxu0 0.0
    %3647 = vmatprep.subr.mxu0 0.0
    %3648 = vmatpush1.msra.mxu0 0.0
    %3649 = vmatprep.subr.mxu0 0.0
    %3650 = vmatpush1.msra.mxu0 0.0
    %3651 = vmatprep.subr.mxu0 0.0
    %3652 = vmatpush1.msra.mxu0 0.0
    %3653 = vmatprep.subr.mxu0 0.0
    %3654 = vmatpush1.msra.mxu0 0.0
    %3655 = vmatprep.subr.mxu0 0.0
    %3656 = vmatpush1.msra.mxu0 0.0
    %3657 = vmatprep.subr.mxu0 0.0
    %3658 = vmatpush1.msra.mxu0 0.0
    %3659 = vmatprep.subr.mxu0 0.0
    %3660 = vmatpush1.msra.mxu0 0.0
    %3661 = vmatprep.subr.mxu0 0.0
    %3662 = vmatpush1.msra.mxu0 0.0
    %3663 = vmatprep.subr.mxu0 0.0
    %3664 = vmatpush1.msra.mxu0 0.0
    %3665 = vmatprep.subr.mxu0 0.0
    %3666 = vmatpush1.msra.mxu0 0.0
    %3667 = vmatprep.subr.mxu0 0.0
    %3668 = vmatpush1.msra.mxu0 0.0
    %3669 = vmatprep.subr.mxu0 0.0
    %3670 = vmatpush1.msra.mxu0 0.0
    %3671 = vmatprep.subr.mxu0 0.0
    %3672 = vmatpush1.msra.mxu0 0.0
    %3673 = vmatprep.subr.mxu0 0.0
    %3674 = vmatpush1.msra.mxu0 0.0
    %3675 = vmatprep.subr.mxu0 0.0
    %3676 = vmatpush1.msra.mxu0 0.0
    %3677 = vmatprep.subr.mxu0 0.0
    %3678 = vmatpush1.msra.mxu0 0.0
    %3679 = vmatprep.subr.mxu0 0.0
    %3680 = vmatpush1.msra.mxu0 0.0
    %3681 = vmatprep.subr.mxu0 0.0
    %3682 = vmatpush1.msra.mxu0 0.0
    %3683 = vmatprep.subr.mxu0 0.0
    %3684 = vmatpush1.msra.mxu0 0.0
    %3685 = vmatprep.subr.mxu0 0.0
    %3686 = vmatpush1.msra.mxu0 0.0
    %3687 = vmatprep.mubr.f32.mxu0 0.0
    %v3688 = vand.u32 %v3617, 4294901760
    %v3689 = vsub.f32 %v3617, %v3688
    %v3690 = vand.u32 %v3689, 4294901760
    %v3691 = vsub.f32 %v3689, %v3690
    %v3692 = vand.u32 %v3691, 4294901760
    %3693 = vmatmul.mubr.f32.gmra.mrb[0].mxu0 %v3692
    %v3694 = vpop.f32.mrb[0].mxu0
    %v3695 = vadd.f32 %v58, %v3694
    %v3696 = vpop.f32.mrb[0].mxu0
    %3697 = vdwg.mxu0
    %3698 = vmatprep.subr.mxu0 0.0
    %v3699 = vand.u32 %v44, 4294901760
    %v3700 = vsub.f32 %v44, %v3699
    %v3701 = vand.u32 %v3700, 4294901760
    %v3702 = vsub.f32 %v3700, %v3701
    %v3703 = vand.u32 %v3702, 4294901760
    %3704 = vmatpush1.msra.mxu0 %v3703
    %3705 = vmatprep.subr.mxu0 0.0
    %v3706 = vand.u32 %v45, 4294901760
    %v3707 = vsub.f32 %v45, %v3706
    %v3708 = vand.u32 %v3707, 4294901760
    %v3709 = vsub.f32 %v3707, %v3708
    %v3710 = vand.u32 %v3709, 4294901760
    %3711 = vmatpush1.msra.mxu0 %v3710
    %3712 = vmatprep.subr.mxu0 0.0
    %v3713 = vand.u32 %v46, 4294901760
    %v3714 = vsub.f32 %v46, %v3713
    %v3715 = vand.u32 %v3714, 4294901760
    %v3716 = vsub.f32 %v3714, %v3715
    %v3717 = vand.u32 %v3716, 4294901760
    %3718 = vmatpush1.msra.mxu0 %v3717
    %3719 = vmatprep.subr.mxu0 0.0
    %v3720 = vand.u32 %v47, 4294901760
    %v3721 = vsub.f32 %v47, %v3720
    %v3722 = vand.u32 %v3721, 4294901760
    %v3723 = vsub.f32 %v3721, %v3722
    %v3724 = vand.u32 %v3723, 4294901760
    %3725 = vmatpush1.msra.mxu0 %v3724
    %3726 = vmatprep.subr.mxu0 0.0
    %3727 = vmatpush1.msra.mxu0 0.0
    %3728 = vmatprep.subr.mxu0 0.0
    %3729 = vmatpush1.msra.mxu0 0.0
    %3730 = vmatprep.subr.mxu0 0.0
    %3731 = vmatpush1.msra.mxu0 0.0
    %3732 = vmatprep.subr.mxu0 0.0
    %3733 = vmatpush1.msra.mxu0 0.0
    %3734 = vmatprep.subr.mxu0 0.0
    %3735 = vmatpush1.msra.mxu0 0.0
    %3736 = vmatprep.subr.mxu0 0.0
    %3737 = vmatpush1.msra.mxu0 0.0
    %3738 = vmatprep.subr.mxu0 0.0
    %3739 = vmatpush1.msra.mxu0 0.0
    %3740 = vmatprep.subr.mxu0 0.0
    %3741 = vmatpush1.msra.mxu0 0.0
    %3742 = vmatprep.subr.mxu0 0.0
    %3743 = vmatpush1.msra.mxu0 0.0
    %3744 = vmatprep.subr.mxu0 0.0
    %3745 = vmatpush1.msra.mxu0 0.0
    %3746 = vmatprep.subr.mxu0 0.0
    %3747 = vmatpush1.msra.mxu0 0.0
    %3748 = vmatprep.subr.mxu0 0.0
    %3749 = vmatpush1.msra.mxu0 0.0
    %3750 = vmatprep.subr.mxu0 0.0
    %3751 = vmatpush1.msra.mxu0 0.0
    %3752 = vmatprep.subr.mxu0 0.0
    %3753 = vmatpush1.msra.mxu0 0.0
    %3754 = vmatprep.subr.mxu0 0.0
    %3755 = vmatpush1.msra.mxu0 0.0
    %3756 = vmatprep.subr.mxu0 0.0
    %3757 = vmatpush1.msra.mxu0 0.0
    %3758 = vmatprep.subr.mxu0 0.0
    %3759 = vmatpush1.msra.mxu0 0.0
    %3760 = vmatprep.subr.mxu0 0.0
    %3761 = vmatpush1.msra.mxu0 0.0
    %3762 = vmatprep.subr.mxu0 0.0
    %3763 = vmatpush1.msra.mxu0 0.0
    %3764 = vmatprep.subr.mxu0 0.0
    %3765 = vmatpush1.msra.mxu0 0.0
    %3766 = vmatprep.subr.mxu0 0.0
    %3767 = vmatpush1.msra.mxu0 0.0
    %3768 = vmatprep.subr.mxu0 0.0
    %3769 = vmatpush1.msra.mxu0 0.0
    %3770 = vmatprep.subr.mxu0 0.0
    %3771 = vmatpush1.msra.mxu0 0.0
    %3772 = vmatprep.subr.mxu0 0.0
    %3773 = vmatpush1.msra.mxu0 0.0
    %3774 = vmatprep.subr.mxu0 0.0
    %3775 = vmatpush1.msra.mxu0 0.0
    %3776 = vmatprep.subr.mxu0 0.0
    %3777 = vmatpush1.msra.mxu0 0.0
    %3778 = vmatprep.subr.mxu0 0.0
    %3779 = vmatpush1.msra.mxu0 0.0
    %3780 = vmatprep.subr.mxu0 0.0
    %3781 = vmatpush1.msra.mxu0 0.0
    %3782 = vmatprep.mubr.f32.mxu0 0.0
    %v3783 = vand.u32 %v3617, 4294901760
    %3784 = vmatmul.mubr.f32.gmra.mrb[0].mxu0 %v3783
    %v3785 = vpop.f32.mrb[0].mxu0
    %v3786 = vadd.f32 %v3695, %v3785
    %v3787 = vpop.f32.mrb[0].mxu0
    %3788 = vdwg.mxu0
    %3789 = vmatprep.subr.mxu0 0.0
    %v3790 = vand.u32 %v44, 4294901760
    %v3791 = vsub.f32 %v44, %v3790
    %3792 = vmatpush1.msra.mxu0 %v3791
    %3793 = vmatprep.subr.mxu0 0.0
    %v3794 = vand.u32 %v45, 4294901760
    %v3795 = vsub.f32 %v45, %v3794
    %3796 = vmatpush1.msra.mxu0 %v3795
    %3797 = vmatprep.subr.mxu0 0.0
    %v3798 = vand.u32 %v46, 4294901760
    %v3799 = vsub.f32 %v46, %v3798
    %3800 = vmatpush1.msra.mxu0 %v3799
    %3801 = vmatprep.subr.mxu0 0.0
    %v3802 = vand.u32 %v47, 4294901760
    %v3803 = vsub.f32 %v47, %v3802
    %3804 = vmatpush1.msra.mxu0 %v3803
    %3805 = vmatprep.subr.mxu0 0.0
    %3806 = vmatpush1.msra.mxu0 0.0
    %3807 = vmatprep.subr.mxu0 0.0
    %3808 = vmatpush1.msra.mxu0 0.0
    %3809 = vmatprep.subr.mxu0 0.0
    %3810 = vmatpush1.msra.mxu0 0.0
    %3811 = vmatprep.subr.mxu0 0.0
    %3812 = vmatpush1.msra.mxu0 0.0
    %3813 = vmatprep.subr.mxu0 0.0
    %3814 = vmatpush1.msra.mxu0 0.0
    %3815 = vmatprep.subr.mxu0 0.0
    %3816 = vmatpush1.msra.mxu0 0.0
    %3817 = vmatprep.subr.mxu0 0.0
    %3818 = vmatpush1.msra.mxu0 0.0
    %3819 = vmatprep.subr.mxu0 0.0
    %3820 = vmatpush1.msra.mxu0 0.0
    %3821 = vmatprep.subr.mxu0 0.0
    %3822 = vmatpush1.msra.mxu0 0.0
    %3823 = vmatprep.subr.mxu0 0.0
    %3824 = vmatpush1.msra.mxu0 0.0
    %3825 = vmatprep.subr.mxu0 0.0
    %3826 = vmatpush1.msra.mxu0 0.0
    %3827 = vmatprep.subr.mxu0 0.0
    %3828 = vmatpush1.msra.mxu0 0.0
    %3829 = vmatprep.subr.mxu0 0.0
    %3830 = vmatpush1.msra.mxu0 0.0
    %3831 = vmatprep.subr.mxu0 0.0
    %3832 = vmatpush1.msra.mxu0 0.0
    %3833 = vmatprep.subr.mxu0 0.0
    %3834 = vmatpush1.msra.mxu0 0.0
    %3835 = vmatprep.subr.mxu0 0.0
    %3836 = vmatpush1.msra.mxu0 0.0
    %3837 = vmatprep.subr.mxu0 0.0
    %3838 = vmatpush1.msra.mxu0 0.0
    %3839 = vmatprep.subr.mxu0 0.0
    %3840 = vmatpush1.msra.mxu0 0.0
    %3841 = vmatprep.subr.mxu0 0.0
    %3842 = vmatpush1.msra.mxu0 0.0
    %3843 = vmatprep.subr.mxu0 0.0
    %3844 = vmatpush1.msra.mxu0 0.0
    %3845 = vmatprep.subr.mxu0 0.0
    %3846 = vmatpush1.msra.mxu0 0.0
    %3847 = vmatprep.subr.mxu0 0.0
    %3848 = vmatpush1.msra.mxu0 0.0
    %3849 = vmatprep.subr.mxu0 0.0
    %3850 = vmatpush1.msra.mxu0 0.0
    %3851 = vmatprep.subr.mxu0 0.0
    %3852 = vmatpush1.msra.mxu0 0.0
    %3853 = vmatprep.subr.mxu0 0.0
    %3854 = vmatpush1.msra.mxu0 0.0
    %3855 = vmatprep.subr.mxu0 0.0
    %3856 = vmatpush1.msra.mxu0 0.0
    %3857 = vmatprep.subr.mxu0 0.0
    %3858 = vmatpush1.msra.mxu0 0.0
    %3859 = vmatprep.subr.mxu0 0.0
    %3860 = vmatpush1.msra.mxu0 0.0
    %3861 = vmatprep.mubr.f32.mxu0 0.0
    %v3862 = vand.u32 %v3617, 4294901760
    %v3863 = vsub.f32 %v3617, %v3862
    %3864 = vmatmul.mubr.f32.gmra.mrb[0].mxu0 %v3863
    %v3865 = vpop.f32.mrb[0].mxu0
    %v3866 = vadd.f32 %v3786, %v3865
    %v3867 = vpop.f32.mrb[0].mxu0
    %3868 = vdwg.mxu0
    %3869 = vmatprep.subr.mxu0 0.0
    %v3870 = vand.u32 %v44, 4294901760
    %3871 = vmatpush1.msra.mxu0 %v3870
    %3872 = vmatprep.subr.mxu0 0.0
    %v3873 = vand.u32 %v45, 4294901760
    %3874 = vmatpush1.msra.mxu0 %v3873
    %3875 = vmatprep.subr.mxu0 0.0
    %v3876 = vand.u32 %v46, 4294901760
    %3877 = vmatpush1.msra.mxu0 %v3876
    %3878 = vmatprep.subr.mxu0 0.0
    %v3879 = vand.u32 %v47, 4294901760
    %3880 = vmatpush1.msra.mxu0 %v3879
    %3881 = vmatprep.subr.mxu0 0.0
    %3882 = vmatpush1.msra.mxu0 0.0
    %3883 = vmatprep.subr.mxu0 0.0
    %3884 = vmatpush1.msra.mxu0 0.0
    %3885 = vmatprep.subr.mxu0 0.0
    %3886 = vmatpush1.msra.mxu0 0.0
    %3887 = vmatprep.subr.mxu0 0.0
    %3888 = vmatpush1.msra.mxu0 0.0
    %3889 = vmatprep.subr.mxu0 0.0
    %3890 = vmatpush1.msra.mxu0 0.0
    %3891 = vmatprep.subr.mxu0 0.0
    %3892 = vmatpush1.msra.mxu0 0.0
    %3893 = vmatprep.subr.mxu0 0.0
    %3894 = vmatpush1.msra.mxu0 0.0
    %3895 = vmatprep.subr.mxu0 0.0
    %3896 = vmatpush1.msra.mxu0 0.0
    %3897 = vmatprep.subr.mxu0 0.0
    %3898 = vmatpush1.msra.mxu0 0.0
    %3899 = vmatprep.subr.mxu0 0.0
    %3900 = vmatpush1.msra.mxu0 0.0
    %3901 = vmatprep.subr.mxu0 0.0
    %3902 = vmatpush1.msra.mxu0 0.0
    %3903 = vmatprep.subr.mxu0 0.0
    %3904 = vmatpush1.msra.mxu0 0.0
    %3905 = vmatprep.subr.mxu0 0.0
    %3906 = vmatpush1.msra.mxu0 0.0
    %3907 = vmatprep.subr.mxu0 0.0
    %3908 = vmatpush1.msra.mxu0 0.0
    %3909 = vmatprep.subr.mxu0 0.0
    %3910 = vmatpush1.msra.mxu0 0.0
    %3911 = vmatprep.subr.mxu0 0.0
    %3912 = vmatpush1.msra.mxu0 0.0
    %3913 = vmatprep.subr.mxu0 0.0
    %3914 = vmatpush1.msra.mxu0 0.0
    %3915 = vmatprep.subr.mxu0 0.0
    %3916 = vmatpush1.msra.mxu0 0.0
    %3917 = vmatprep.subr.mxu0 0.0
    %3918 = vmatpush1.msra.mxu0 0.0
    %3919 = vmatprep.subr.mxu0 0.0
    %3920 = vmatpush1.msra.mxu0 0.0
    %3921 = vmatprep.subr.mxu0 0.0
    %3922 = vmatpush1.msra.mxu0 0.0
    %3923 = vmatprep.subr.mxu0 0.0
    %3924 = vmatpush1.msra.mxu0 0.0
    %3925 = vmatprep.subr.mxu0 0.0
    %3926 = vmatpush1.msra.mxu0 0.0
    %3927 = vmatprep.subr.mxu0 0.0
    %3928 = vmatpush1.msra.mxu0 0.0
    %3929 = vmatprep.subr.mxu0 0.0
    %3930 = vmatpush1.msra.mxu0 0.0
    %3931 = vmatprep.subr.mxu0 0.0
    %3932 = vmatpush1.msra.mxu0 0.0
    %3933 = vmatprep.subr.mxu0 0.0
    %3934 = vmatpush1.msra.mxu0 0.0
    %3935 = vmatprep.subr.mxu0 0.0
    %3936 = vmatpush1.msra.mxu0 0.0
    %3937 = vmatprep.mubr.f32.mxu0 0.0
    %v3938 = vand.u32 %v3617, 4294901760
    %v3939 = vsub.f32 %v3617, %v3938
    %v3940 = vand.u32 %v3939, 4294901760
    %3941 = vmatmul.mubr.f32.gmra.mrb[0].mxu0 %v3940
    %v3942 = vpop.f32.mrb[0].mxu0
    %v3943 = vadd.f32 %v3866, %v3942
    %v3944 = vpop.f32.mrb[0].mxu0
    %3945 = vdwg.mxu0
    %3946 = vmatprep.subr.mxu0 0.0
    %v3947 = vand.u32 %v44, 4294901760
    %v3948 = vsub.f32 %v44, %v3947
    %v3949 = vand.u32 %v3948, 4294901760
    %3950 = vmatpush1.msra.mxu0 %v3949
    %3951 = vmatprep.subr.mxu0 0.0
    %v3952 = vand.u32 %v45, 4294901760
    %v3953 = vsub.f32 %v45, %v3952
    %v3954 = vand.u32 %v3953, 4294901760
    %3955 = vmatpush1.msra.mxu0 %v3954
    %3956 = vmatprep.subr.mxu0 0.0
    %v3957 = vand.u32 %v46, 4294901760
    %v3958 = vsub.f32 %v46, %v3957
    %v3959 = vand.u32 %v3958, 4294901760
    %3960 = vmatpush1.msra.mxu0 %v3959
    %3961 = vmatprep.subr.mxu0 0.0
    %v3962 = vand.u32 %v47, 4294901760
    %v3963 = vsub.f32 %v47, %v3962
    %v3964 = vand.u32 %v3963, 4294901760
    %3965 = vmatpush1.msra.mxu0 %v3964
    %3966 = vmatprep.subr.mxu0 0.0
    %3967 = vmatpush1.msra.mxu0 0.0
    %3968 = vmatprep.subr.mxu0 0.0
    %3969 = vmatpush1.msra.mxu0 0.0
    %3970 = vmatprep.subr.mxu0 0.0
    %3971 = vmatpush1.msra.mxu0 0.0
    %3972 = vmatprep.subr.mxu0 0.0
    %3973 = vmatpush1.msra.mxu0 0.0
    %3974 = vmatprep.subr.mxu0 0.0
    %3975 = vmatpush1.msra.mxu0 0.0
    %3976 = vmatprep.subr.mxu0 0.0
    %3977 = vmatpush1.msra.mxu0 0.0
    %3978 = vmatprep.subr.mxu0 0.0
    %3979 = vmatpush1.msra.mxu0 0.0
    %3980 = vmatprep.subr.mxu0 0.0
    %3981 = vmatpush1.msra.mxu0 0.0
    %3982 = vmatprep.subr.mxu0 0.0
    %3983 = vmatpush1.msra.mxu0 0.0
    %3984 = vmatprep.subr.mxu0 0.0
    %3985 = vmatpush1.msra.mxu0 0.0
    %3986 = vmatprep.subr.mxu0 0.0
    %3987 = vmatpush1.msra.mxu0 0.0
    %3988 = vmatprep.subr.mxu0 0.0
    %3989 = vmatpush1.msra.mxu0 0.0
    %3990 = vmatprep.subr.mxu0 0.0
    %3991 = vmatpush1.msra.mxu0 0.0
    %3992 = vmatprep.subr.mxu0 0.0
    %3993 = vmatpush1.msra.mxu0 0.0
    %3994 = vmatprep.subr.mxu0 0.0
    %3995 = vmatpush1.msra.mxu0 0.0
    %3996 = vmatprep.subr.mxu0 0.0
    %3997 = vmatpush1.msra.mxu0 0.0
    %3998 = vmatprep.subr.mxu0 0.0
    %3999 = vmatpush1.msra.mxu0 0.0
    %4000 = vmatprep.subr.mxu0 0.0
    %4001 = vmatpush1.msra.mxu0 0.0
    %4002 = vmatprep.subr.mxu0 0.0
    %4003 = vmatpush1.msra.mxu0 0.0
    %4004 = vmatprep.subr.mxu0 0.0
    %4005 = vmatpush1.msra.mxu0 0.0
    %4006 = vmatprep.subr.mxu0 0.0
    %4007 = vmatpush1.msra.mxu0 0.0
    %4008 = vmatprep.subr.mxu0 0.0
    %4009 = vmatpush1.msra.mxu0 0.0
    %4010 = vmatprep.subr.mxu0 0.0
    %4011 = vmatpush1.msra.mxu0 0.0
    %4012 = vmatprep.subr.mxu0 0.0
    %4013 = vmatpush1.msra.mxu0 0.0
    %4014 = vmatprep.subr.mxu0 0.0
    %4015 = vmatpush1.msra.mxu0 0.0
    %4016 = vmatprep.subr.mxu0 0.0
    %4017 = vmatpush1.msra.mxu0 0.0
    %4018 = vmatprep.subr.mxu0 0.0
    %4019 = vmatpush1.msra.mxu0 0.0
    %4020 = vmatprep.subr.mxu0 0.0
    %4021 = vmatpush1.msra.mxu0 0.0
    %4022 = vmatprep.mubr.f32.mxu0 0.0
    %v4023 = vand.u32 %v3617, 4294901760
    %4024 = vmatmul.mubr.f32.gmra.mrb[0].mxu0 %v4023
    %v4025 = vpop.f32.mrb[0].mxu0
    %v4026 = vadd.f32 %v3943, %v4025
    %v4027 = vpop.f32.mrb[0].mxu0
    %4028 = vdwg.mxu0
    %4029 = vmatprep.subr.mxu0 0.0
    %v4030 = vand.u32 %v44, 4294901760
    %4031 = vmatpush1.msra.mxu0 %v4030
    %4032 = vmatprep.subr.mxu0 0.0
    %v4033 = vand.u32 %v45, 4294901760
    %4034 = vmatpush1.msra.mxu0 %v4033
    %4035 = vmatprep.subr.mxu0 0.0
    %v4036 = vand.u32 %v46, 4294901760
    %4037 = vmatpush1.msra.mxu0 %v4036
    %4038 = vmatprep.subr.mxu0 0.0
    %v4039 = vand.u32 %v47, 4294901760
    %4040 = vmatpush1.msra.mxu0 %v4039
    %4041 = vmatprep.subr.mxu0 0.0
    %4042 = vmatpush1.msra.mxu0 0.0
    %4043 = vmatprep.subr.mxu0 0.0
    %4044 = vmatpush1.msra.mxu0 0.0
    %4045 = vmatprep.subr.mxu0 0.0
    %4046 = vmatpush1.msra.mxu0 0.0
    %4047 = vmatprep.subr.mxu0 0.0
    %4048 = vmatpush1.msra.mxu0 0.0
    %4049 = vmatprep.subr.mxu0 0.0
    %4050 = vmatpush1.msra.mxu0 0.0
    %4051 = vmatprep.subr.mxu0 0.0
    %4052 = vmatpush1.msra.mxu0 0.0
    %4053 = vmatprep.subr.mxu0 0.0
    %4054 = vmatpush1.msra.mxu0 0.0
    %4055 = vmatprep.subr.mxu0 0.0
    %4056 = vmatpush1.msra.mxu0 0.0
    %4057 = vmatprep.subr.mxu0 0.0
    %4058 = vmatpush1.msra.mxu0 0.0
    %4059 = vmatprep.subr.mxu0 0.0
    %4060 = vmatpush1.msra.mxu0 0.0
    %4061 = vmatprep.subr.mxu0 0.0
    %4062 = vmatpush1.msra.mxu0 0.0
    %4063 = vmatprep.subr.mxu0 0.0
    %4064 = vmatpush1.msra.mxu0 0.0
    %4065 = vmatprep.subr.mxu0 0.0
    %4066 = vmatpush1.msra.mxu0 0.0
    %4067 = vmatprep.subr.mxu0 0.0
    %4068 = vmatpush1.msra.mxu0 0.0
    %4069 = vmatprep.subr.mxu0 0.0
    %4070 = vmatpush1.msra.mxu0 0.0
    %4071 = vmatprep.subr.mxu0 0.0
    %4072 = vmatpush1.msra.mxu0 0.0
    %4073 = vmatprep.subr.mxu0 0.0
    %4074 = vmatpush1.msra.mxu0 0.0
    %4075 = vmatprep.subr.mxu0 0.0
    %4076 = vmatpush1.msra.mxu0 0.0
    %4077 = vmatprep.subr.mxu0 0.0
    %4078 = vmatpush1.msra.mxu0 0.0
    %4079 = vmatprep.subr.mxu0 0.0
    %4080 = vmatpush1.msra.mxu0 0.0
    %4081 = vmatprep.subr.mxu0 0.0
    %4082 = vmatpush1.msra.mxu0 0.0
    %4083 = vmatprep.subr.mxu0 0.0
    %4084 = vmatpush1.msra.mxu0 0.0
    %4085 = vmatprep.subr.mxu0 0.0
    %4086 = vmatpush1.msra.mxu0 0.0
    %4087 = vmatprep.subr.mxu0 0.0
    %4088 = vmatpush1.msra.mxu0 0.0
    %4089 = vmatprep.subr.mxu0 0.0
    %4090 = vmatpush1.msra.mxu0 0.0
    %4091 = vmatprep.subr.mxu0 0.0
    %4092 = vmatpush1.msra.mxu0 0.0
    %4093 = vmatprep.subr.mxu0 0.0
    %4094 = vmatpush1.msra.mxu0 0.0
    %4095 = vmatprep.subr.mxu0 0.0
    %4096 = vmatpush1.msra.mxu0 0.0
    %4097 = vmatprep.mubr.f32.mxu0 0.0
    %v4098 = vand.u32 %v3617, 4294901760
    %4099 = vmatmul.mubr.f32.gmra.mrb[0].mxu0 %v4098
    %v4100 = vpop.f32.mrb[0].mxu0
    %v4101 = vadd.f32 %v4026, %v4100
    %v4102 = vpop.f32.mrb[0].mxu0
    %4103 = vdwg.mxu0
    %v4104 = vtanh.pop %v4101
    %v4105 = vmul.f32 %v4104, %v554
    %v4106 = vsel %vm557, %v4105, 0.0
    %4107 = vadd.xlane.f32.xlu0 %v4106
    %v4108 = vpop.xlane.xlu0 %4107
    %vm4109 = vcmp.eq.s32.totalorder %v51, 7
    %v4110 = vsel %vm4109, 1, 0
    %vm4111 = vcmp.eq.s32.totalorder %v4110, 1
    %v4112 = vsel %vm4111, %v4108, 0.0
    %v4113 = vadd.f32 %v3604, %v4112
    %vm4114 = vcmask 58368
    %v4115 = vsel %vm4114, %v4113, -inf
    %4116 = vmax.xlane.f32.xlu0 %v4115
    %v4117 = vpop.xlane.xlu0 %4116
    %v4118 = vsub.f32 %v4113, %v4117
    %v4119 = vmul.f32 %v4118, 1.442695
    %v4120 = vpow.pop %v4119
    %v4121 = vsel %vm4114, %v4120, 0.0
    %4122 = vadd.xlane.f32.xlu0 %v4121
    %v4123 = vpop.xlane.xlu0 %4122
    %v4124 = vrcp.pop %v4123
    %v4125 = vsel %vm563, %v4120, 0.0
    %v4126 = vsel %vm4114, %v4125, 0.0
    %4127 = vadd.xlane.f32.xlu0 %v4126
    %v4128 = vpop.xlane.xlu0 %4127
    %v4129 = vmul.f32 %v53, %v4128
    %v4130 = vadd.f32 %v4129, 0.0
    %v4131 = vsel %vm1069, %v4120, 0.0
    %v4132 = vsel %vm4114, %v4131, 0.0
    %4133 = vadd.xlane.f32.xlu0 %v4132
    %v4134 = vpop.xlane.xlu0 %4133
    %v4135 = vmul.f32 %v53, %v4134
    %4137 = vrot.lane.b32.xlu0 %v4135, 96
    %v4138 = vpop.permute.xlu0 %4137
    %v4140 = vadd.f32 %v4130, %v4138
    %v4141 = vsel %vm1578, %v4120, 0.0
    %v4142 = vsel %vm4114, %v4141, 0.0
    %4143 = vadd.xlane.f32.xlu0 %v4142
    %v4144 = vpop.xlane.xlu0 %4143
    %v4145 = vmul.f32 %v1073, %v4144
    %4147 = vrot.lane.b32.xlu0 %v4145, 64
    %v4148 = vpop.permute.xlu0 %4147
    %v4150 = vadd.f32 %v4140, %v4148
    %v4151 = vsel %vm2087, %v4120, 0.0
    %v4152 = vsel %vm4114, %v4151, 0.0
    %4153 = vadd.xlane.f32.xlu0 %v4152
    %v4154 = vpop.xlane.xlu0 %4153
    %v4155 = vmul.f32 %v1582, %v4154
    %4157 = vrot.lane.b32.xlu0 %v4155, 32
    %v4158 = vpop.permute.xlu0 %4157
    %v4160 = vadd.f32 %v4150, %v4158
    %v4161 = vsel %vm2587, %v4120, 0.0
    %v4162 = vsel %vm4114, %v4161, 0.0
    %4163 = vadd.xlane.f32.xlu0 %v4162
    %v4164 = vpop.xlane.xlu0 %4163
    %v4165 = vmul.f32 %v2091, %v4164
    %v4166 = vadd.f32 %v4160, %v4165
    %v4167 = vsel %vm3093, %v4120, 0.0
    %v4168 = vsel %vm4114, %v4167, 0.0
    %4169 = vadd.xlane.f32.xlu0 %v4168
    %v4170 = vpop.xlane.xlu0 %4169
    %v4171 = vmul.f32 %v2091, %v4170
    %4173 = vrot.lane.b32.xlu0 %v4171, 96
    %v4174 = vpop.permute.xlu0 %4173
    %v4176 = vadd.f32 %v4166, %v4174
    %v4177 = vsel %vm3602, %v4120, 0.0
    %v4178 = vsel %vm4114, %v4177, 0.0
    %4179 = vadd.xlane.f32.xlu0 %v4178
    %v4180 = vpop.xlane.xlu0 %4179
    %v4181 = vmul.f32 %v3097, %v4180
    %4183 = vrot.lane.b32.xlu0 %v4181, 64
    %v4184 = vpop.permute.xlu0 %4183
    %v4186 = vadd.f32 %v4176, %v4184
    %v4187 = vsel %vm4111, %v4120, 0.0
    %v4188 = vsel %vm4114, %v4187, 0.0
    %4189 = vadd.xlane.f32.xlu0 %v4188
    %v4190 = vpop.xlane.xlu0 %4189
    %v4191 = vmul.f32 %v3606, %v4190
    %4193 = vrot.lane.b32.xlu0 %v4191, 32
    %v4194 = vpop.permute.xlu0 %4193
    %v4196 = vadd.f32 %v4186, %v4194
    %v4197 = vmul.f32 %v4196, %v4124
    %vm4198 = vcmask 254976
    %4199 = vst.msk [vmem:[#allocation7] sm:$0x3] %vm4198, %v4197
    // Predicated region
    $region26: #{tpu_custom_call.1} parent=1 // pred_check
      _
    $region27: #{tpu_custom_call.1} parent=1 // pred_check_branch
      %4201 = sbr.rel (0) target = $region29
    $region28: #{tpu_custom_call.1} parent=1 // pred_region
      %s4203 = ssub.s32 32, 32
      %4204 = vsyncadd [#allocation4], %s4203
      %s4206 = sshll.u32 [#allocation7], 4
      %s4207 = int_to_ptr.vmem [resolvable:$true] %s4206
      %4209 = dma.vmem_to_hbm [thread:$0]  %s4207, 32, %s4, [#allocation4]
    $region29: #{tpu_custom_call.1} parent=1 // pred_fallthru
      _
    // Predicated region
    $region30: #{tpu_custom_call.1} parent=1 // pred_check
      _
    $region31: #{tpu_custom_call.1} parent=1 // pred_check_branch
      %4211 = sbr.rel (0) target = $region33
    $region32: #{tpu_custom_call.1} parent=1 // pred_region
      %4212 = dma.done [#allocation4], 32
    $region33: #{tpu_custom_call.1} parent=1 // pred_fallthru
      _
    %4213 = vsyncpa [#allocation3], 1
    %4214 = vsyncpa [#allocation6], 1
    %4215 = vsyncpa [#allocation4], 1

</llo_original>
